<compile_context>
chip_gen: v6e
topology: v6e:2x2x1
jax: 0.10.0
libtpu: 0.0.40
codegen_flags: <defaults>
</compile_context>

<pallas_src>
import functools

import jax
import jax.numpy as jnp
from jax import lax
from jax.experimental import pallas as pl
from jax.experimental.pallas import tpu as pltpu

_VMEM_LIMIT = 64 * 1024 * 1024


# ----------------------------------------------------------------------------
# Kernel 1: fused bidirectional LSTM layer over a full sequence.
#   xg_ref  : (T, B, 8H) precomputed input gates, f32, gate order [i|f|o|g],
#             each gate block = [fwd(t) | bwd(T-1-t)] of width 2H.
#   whh_ref : (2H, 8H) bf16 block-structured recurrent weight so that
#             [h_f | h_b] @ whh hits only the matching direction's columns.
# outputs:
#   y_ref   : (T, B, 2H) bf16, y[t] = [h_f(t) | h_b(t)]  (already in source
#             time order: the backward half is stored at index T-1-t).
#   hN_ref  : (B, 2H) f32  [h_f final | h_b final]  (PyTorch cat order)
#   cN_ref  : (B, 2H) f32
# ----------------------------------------------------------------------------
def bilstm_layer_kernel(xg_ref, whh_ref, y_ref, hN_ref, cN_ref):
    T = xg_ref.shape[0]
    B = hN_ref.shape[0]
    W = hN_ref.shape[-1]            # fused state width = 2 * hidden_dim
    H = W // 2

    whh = whh_ref[...]              # hoisted: read once, stays resident

    def step(t, carry):
        h, c = carry
        gates = xg_ref[t] + jnp.dot(h.astype(whh.dtype), whh,
                                    preferred_element_type=jnp.float32)
        # gate order [i | f | o | g]: sigmoid only on first 3W lanes,
        # tanh only on last W lanes (half the EUP work of full-width both).
        sig = jax.nn.sigmoid(gates[:, :3 * W])
        g = jnp.tanh(gates[:, 3 * W:])
        i = sig[:, 0 * W:1 * W]
        f = sig[:, 1 * W:2 * W]
        o = sig[:, 2 * W:3 * W]
        c = f * c + i * g
        h = o * jnp.tanh(c)
        hb = h.astype(y_ref.dtype)
        y_ref[t, :, 0:H] = hb[:, :H]           # forward dir at source time t
        y_ref[T - 1 - t, :, H:] = hb[:, H:]    # backward dir at time T-1-t
        return h, c

    h0 = jnp.zeros((B, W), jnp.float32)
    c0 = jnp.zeros((B, W), jnp.float32)
    h, c = lax.fori_loop(0, T, step, (h0, c0), unroll=True)
    hN_ref[...] = h
    cN_ref[...] = c


def bilstm_layer(xg, whh_blk, hidden_dim):
    T, B, _ = xg.shape
    H2 = 2 * hidden_dim
    vmem = pl.BlockSpec(memory_space=pltpu.MemorySpace.VMEM)
    return pl.pallas_call(
        bilstm_layer_kernel,
        out_shape=(jax.ShapeDtypeStruct((T, B, H2), jnp.bfloat16),
                   jax.ShapeDtypeStruct((B, H2), jnp.float32),
                   jax.ShapeDtypeStruct((B, H2), jnp.float32)),
        in_specs=[vmem, vmem],
        out_specs=(vmem, vmem, vmem),
        compiler_params=pltpu.CompilerParams(vmem_limit_bytes=_VMEM_LIMIT),
    )(xg, whh_blk)


# ----------------------------------------------------------------------------
# Kernel 2: fused decoder — ALL time steps, 2 LSTM layers; fc head after loop.
#   xg0_ref : (Td, B, 4Hd) precomputed layer-0 input gates (teacher forcing).
#   h_ref/c_ref : (2, B, Hd) initial state from the encoder.
#   whh0 (Hd, 4Hd) bf16 ; w1 (2Hd, 4Hd) bf16 = stacked [wih1; whh1];
#   b1 (1, 4Hd) f32 ; wfc (Hd, Vp) bf16 ; bfc (1, Vp) f32.
# output:
#   logits_ref : (Td*B, Vp) f32, row t*B+b == outputs[b, t+1].
# scratch:
#   h1_scratch : (Td*B, Hd) bf16 per-step layer-1 hidden states.
# ----------------------------------------------------------------------------
def decoder_seq_kernel(xg0_ref, h_ref, c_ref,
                       whh0_ref, w1_ref, b1_ref,
                       wfc_ref, bfc_ref, logits_ref, h1_scratch):
    Td = xg0_ref.shape[0]
    B = xg0_ref.shape[1]
    Hd = h_ref.shape[-1]            # decoder hidden = 2 * hidden_dim

    # hoist all weights / biases (and their broadcasts) out of the loop
    whh0 = whh0_ref[...]
    w1 = w1_ref[...]
    b1 = jnp.broadcast_to(b1_ref[...], (B, b1_ref.shape[-1]))

    def lstm_elem(gates, c):
        # gate order [i | f | o | g]
        sig = jax.nn.sigmoid(gates[:, :3 * Hd])
        g = jnp.tanh(gates[:, 3 * Hd:])
        i = sig[:, 0 * Hd:1 * Hd]
        f = sig[:, 1 * Hd:2 * Hd]
        o = sig[:, 2 * Hd:3 * Hd]
        c_new = f * c + i * g
        h_new = o * jnp.tanh(c_new)
        return h_new, c_new

    def step(t, carry):
        h0, c0, h1, c1 = carry
        # layer 0 (input gates precomputed outside the recurrence)
        g0 = xg0_ref[t] + jnp.dot(h0.astype(whh0.dtype), whh0,
                                  preferred_element_type=jnp.float32)
        h0, c0 = lstm_elem(g0, c0)
        # inter-layer dropout: identity in eval mode
        # layer 1: single fused K = 2*Hd = 128 matmul over [h0 | h1]
        h01 = jnp.concatenate([h0, h1], axis=-1)
        g1 = jnp.dot(h01.astype(w1.dtype), w1,
                     preferred_element_type=jnp.float32) + b1
        h1, c1 = lstm_elem(g1, c1)
        # stash layer-1 hidden; fc head runs once after the loop
        row0 = pl.multiple_of(t * B, 8)
        h1_scratch[pl.ds(row0, B), :] = h1.astype(h1_scratch.dtype)
        return h0, c0, h1, c1

    carry0 = (h_ref[0], c_ref[0], h_ref[1], c_ref[1])
    lax.fori_loop(0, Td, step, carry0, unroll=True)

    # fc head hoisted out of the recurrence: one (Td*B, Hd) @ (Hd, Vp) matmul
    wfc = wfc_ref[...]
    logits_ref[...] = (jnp.dot(h1_scratch[...], wfc,
                               preferred_element_type=jnp.float32)
                       + bfc_ref[...])


def decoder_seq(xg0, h_dec, c_dec, whh0, w1, b1, wfc, bfc):
    Td, B, _ = xg0.shape
    Hd = h_dec.shape[-1]
    Vp = wfc.shape[-1]
    vmem = pl.BlockSpec(memory_space=pltpu.MemorySpace.VMEM)
    return pl.pallas_call(
        decoder_seq_kernel,
        out_shape=jax.ShapeDtypeStruct((Td * B, Vp), jnp.float32),
        in_specs=[vmem] * 8,
        out_specs=vmem,
        scratch_shapes=[pltpu.VMEM((Td * B, Hd), jnp.bfloat16)],
        compiler_params=pltpu.CompilerParams(vmem_limit_bytes=_VMEM_LIMIT),
    )(xg0, h_dec, c_dec, whh0, w1, b1, wfc, bfc)


# ----------------------------------------------------------------------------
# Parameter init (weights bf16, biases f32, fused/pre-transposed layouts).
# Gate column order is [i | f | o | g] everywhere (internal layout choice;
# equivalent to a PyTorch LSTM with correspondingly permuted random weights).
# ----------------------------------------------------------------------------
def init_params(key, vocab_size, embedding_dim, hidden_dim, num_layers):
    H, E, V = hidden_dim, embedding_dim, vocab_size
    Hd = 2 * H
    Vp = ((V + 127) // 128) * 128
    keys = iter(jax.random.split(key, 128))
    scale = 0.1

    def w(shape, dtype=jnp.bfloat16):
        return (scale * jax.random.normal(next(keys), shape)).astype(dtype)

    def bias(shape):  # b_ih + b_hh pre-summed, f32
        return ((scale * jax.random.normal(next(keys), shape))
                + (scale * jax.random.normal(next(keys), shape))
                ).astype(jnp.float32)

    params = {"embedding": w((V, E))}

    # encoder: bidirectional, stored (D_in, 4H), gate order [i|f|o|g].
    enc = []
    for layer in range(num_layers):
        d_in = E if layer == 0 else 2 * H
        wih_f = w((d_in, 4 * H))
        wih_b = w((d_in, 4 * H))
        whh_f = w((H, 4 * H), jnp.float32)
        whh_b = w((H, 4 * H), jnp.float32)
        # block-structured recurrent weight for the fused fwd/bwd state:
        # gate-major columns [i_f i_b | f_f f_b | o_f o_b | g_f g_b]
        zero = jnp.zeros((H, 4, H), jnp.float32)
        whh_blk = jnp.concatenate(
            [jnp.concatenate([whh_f.reshape(H, 4, H), zero], axis=-1),
             jnp.concatenate([zero, whh_b.reshape(H, 4, H)], axis=-1)],
            axis=0).reshape(2 * H, 8 * H).astype(jnp.bfloat16)
        enc.append({"wih_f": wih_f, "wih_b": wih_b,
                    "b_f": bias((1, 4 * H)), "b_b": bias((1, 4 * H)),
                    "whh_blk": whh_blk})
    params["encoder"] = enc

    # decoder (2 layers, hidden Hd = 2H), stored transposed (D_in, 4Hd).
    params["dec_wih0"] = w((E, 4 * Hd))
    params["dec_whh0"] = w((Hd, 4 * Hd))
    params["dec_b0"] = bias((1, 4 * Hd))
    # layer 1: input & recurrent weights stacked for one K = 2*Hd matmul.
    wih1 = w((Hd, 4 * Hd), jnp.float32)
    whh1 = w((Hd, 4 * Hd), jnp.float32)
    params["dec_w1"] = jnp.concatenate([wih1, whh1], axis=0).astype(jnp.bfloat16)
    params["dec_b1"] = bias((1, 4 * Hd))

    # fc head: Linear(Hd, V) with the vocab axis zero-padded to 128 lanes.
    fc_w = w((Hd, V), jnp.float32)
    fc_b = (scale * jax.random.normal(next(keys), (1, V))).astype(jnp.float32)
    params["fc_w"] = jnp.pad(fc_w, ((0, 0), (0, Vp - V))).astype(jnp.bfloat16)
    params["fc_b"] = jnp.pad(fc_b, ((0, 0), (0, Vp - V)))
    return params


# ----------------------------------------------------------------------------
# Forward pass glue.
# ----------------------------------------------------------------------------
def _encoder_input_gates(x_tbe, wih_f, b_f, wih_b, b_b, H):
    """Precompute input gates for both directions of one encoder layer.

    Returns (T, B, 8H) f32 with gate-major layout
    [i_f(t) i_b(T-1-t) | f_f f_b | o_f o_b | g_f g_b].
    """
    T, B, E = x_tbe.shape
    x2 = x_tbe.reshape(T * B, E)
    gf = (jnp.dot(x2, wih_f, preferred_element_type=jnp.float32)
          + b_f).reshape(T, B, 4, H)
    gb = (jnp.dot(x2, wih_b, preferred_element_type=jnp.float32)
          + b_b).reshape(T, B, 4, H)
    gb = gb[::-1]  # time-reverse for the backward direction
    return jnp.concatenate([gf, gb], axis=-1).reshape(T, B, 8 * H)


def medical_qa_forward(params, src, trg, *, hidden_dim, num_layers, vocab_size):
    """Teacher-forcing forward pass (teacher_forcing_ratio = 1.0, eval mode)."""
    assert num_layers == 2, "fused decoder kernel is specialized to 2 layers"
    B, _ = src.shape
    T_trg = trg.shape[1]
    H = hidden_dim
    Hd = 2 * H
    V = vocab_size

    # pad the batch to 8 sublanes (per-example math unchanged; sliced off at end)
    Bp = max(8, ((B + 7) // 8) * 8)
    pad = Bp - B
    src_p = jnp.pad(src, ((0, pad), (0, 0)))
    trg_p = jnp.pad(trg, ((0, pad), (0, 0)))

    emb = params["embedding"]

    # --- embedding + (identity) dropout ---
    x = jnp.transpose(jnp.take(emb, src_p, axis=0), (1, 0, 2))  # (T, Bp, E) bf16

    # --- bidirectional multi-layer encoder: one fused kernel per layer ---
    h_layers, c_layers = [], []
    for layer in range(num_layers):
        p = params["encoder"][layer]
        xg = _encoder_input_gates(x, p["wih_f"], p["b_f"],
                                  p["wih_b"], p["b_b"], H)      # (T, Bp, 8H)
        y_all, h_fin, c_fin = bilstm_layer(xg, p["whh_blk"], H)
        h_layers.append(h_fin)   # (Bp, 2H) = [h_fwd_final | h_bwd_final]
        c_layers.append(c_fin)
        x = y_all                # bf16, already in source time order
        # inter-layer dropout: identity in eval mode

    # decoder initial state: (num_layers, Bp, 2H), matching
    # torch.cat((hidden[:,0], hidden[:,1]), dim=2)
    h_dec = jnp.stack(h_layers, axis=0)
    c_dec = jnp.stack(c_layers, axis=0)

    # --- fused decoder (teacher forcing ratio = 1.0 => inputs = trg[:, :-1]) ---
    Td = T_trg - 1
    dec_tokens = trg_p[:, :Td]                                   # (Bp, Td)
    dx = jnp.transpose(jnp.take(emb, dec_tokens, axis=0), (1, 0, 2))  # (Td,Bp,E)
    xg0 = (jnp.dot(dx.reshape(Td * Bp, -1), params["dec_wih0"],
                   preferred_element_type=jnp.float32)
           + params["dec_b0"]).reshape(Td, Bp, 4 * Hd)

    logits_flat = decoder_seq(xg0, h_dec, c_dec,
                              params["dec_whh0"], params["dec_w1"],
                              params["dec_b1"],
                              params["fc_w"], params["fc_b"])    # (Td*Bp, Vp)

    # reference keeps outputs[:, 0] = 0; argmax(prediction) is dead code (TF=1.0)
    logits = logits_flat.reshape(Td, Bp, -1)[:, :B, :V]          # (Td, B, V)
    logits = jnp.transpose(logits, (1, 0, 2))                    # (B, Td, V)
    return jnp.concatenate([jnp.zeros((B, 1, V), jnp.float32), logits], axis=1)


if __name__ == "__main__":
    # Small shapes consistent with the module.
    VOCAB = 64
    EMB = 32
    HID = 32       # hidden_dim; decoder hidden = 2*HID = 64
    LAYERS = 2
    B = 2
    T_SRC = 8
    T_TRG = 8

    key = jax.random.PRNGKey(0)
    k_param, k_src, k_trg = jax.random.split(key, 3)

    params = init_params(k_param, VOCAB, EMB, HID, LAYERS)
    src = jax.random.randint(k_src, (B, T_SRC), 0, VOCAB, dtype=jnp.int32)
    trg = jax.random.randint(k_trg, (B, T_TRG), 0, VOCAB, dtype=jnp.int32)

    fwd = jax.jit(functools.partial(medical_qa_forward, hidden_dim=HID,
                                    num_layers=LAYERS, vocab_size=VOCAB))
    out = jax.block_until_ready(fwd(params, src, trg))

    assert out.shape == (B, T_TRG, VOCAB)
    assert bool(jnp.all(jnp.isfinite(out)))
    print("KERNEL_OK")
</pallas_src>

<mosaic_0001>
module attributes {stable_mosaic.version = 11 : i64} {
  func.func @bilstm_layer_kernel(%arg0: memref<8x8x256xf32, #tpu.memory_space<vmem>>, %arg1: memref<64x256xbf16, #tpu.memory_space<vmem>>, %arg2: memref<8x8x64xbf16, #tpu.memory_space<vmem>>, %arg3: memref<8x64xf32, #tpu.memory_space<vmem>>, %arg4: memref<8x64xf32, #tpu.memory_space<vmem>>) attributes {dimension_semantics = [], scalar_prefetch = 0 : i64, scratch_operands = 0 : i64, tpu.core_type = #tpu.core_type<tc>} {
    %c0 = arith.constant 0 : index
    %c0_0 = arith.constant 0 : index
    %0 = vector.load %arg1[%c0, %c0_0] : memref<64x256xbf16, #tpu.memory_space<vmem>>, vector<64x256xbf16>
    %cst = arith.constant 0.000000e+00 : f32
    %1 = vector.broadcast %cst : f32 to vector<8x64xf32>
    %cst_1 = arith.constant 0.000000e+00 : f32
    %2 = vector.broadcast %cst_1 : f32 to vector<8x64xf32>
    %c0_i32 = arith.constant 0 : i32
    %3 = arith.index_cast %c0_i32 : i32 to index
    %c0_2 = arith.constant 0 : index
    %c0_3 = arith.constant 0 : index
    %4 = vector.load %arg0[%3, %c0_2, %c0_3] : memref<8x8x256xf32, #tpu.memory_space<vmem>>, vector<1x8x256xf32>
    %5 = vector.shape_cast %4 : vector<1x8x256xf32> to vector<8x256xf32>
    %6 = arith.truncf %1 : vector<8x64xf32> to vector<8x64xbf16>
    %cst_4 = arith.constant dense<0.000000e+00> : vector<8x256xf32>
    %7 = tpu.matmul %6, %0, %cst_4 {dimension_numbers = #tpu.dot_dimension_numbers<[1], [0], [0], [1], [0, 0, 1, 1], [], []>} : vector<8x64xbf16>, vector<64x256xbf16>, vector<8x256xf32> -> vector<8x256xf32>
    %8 = arith.addf %5, %7 : vector<8x256xf32>
    %9 = vector.extract_strided_slice %8 {offsets = [0, 0], sizes = [8, 192], strides = [1, 1]} : vector<8x256xf32> to vector<8x192xf32>
    %10 = arith.negf %9 : vector<8x192xf32>
    %11 = math.exp %10 : vector<8x192xf32>
    %cst_5 = arith.constant 1.000000e+00 : f32
    %12 = vector.broadcast %cst_5 : f32 to vector<8x192xf32>
    %13 = arith.addf %12, %11 : vector<8x192xf32>
    %14 = arith.divf %12, %13 : vector<8x192xf32>
    %15 = vector.extract_strided_slice %8 {offsets = [0, 192], sizes = [8, 64], strides = [1, 1]} : vector<8x256xf32> to vector<8x64xf32>
    %16 = math.tanh %15 : vector<8x64xf32>
    %17 = vector.extract_strided_slice %14 {offsets = [0, 0], sizes = [8, 64], strides = [1, 1]} : vector<8x192xf32> to vector<8x64xf32>
    %18 = vector.extract_strided_slice %14 {offsets = [0, 64], sizes = [8, 64], strides = [1, 1]} : vector<8x192xf32> to vector<8x64xf32>
    %19 = vector.extract_strided_slice %14 {offsets = [0, 128], sizes = [8, 64], strides = [1, 1]} : vector<8x192xf32> to vector<8x64xf32>
    %20 = arith.mulf %18, %2 : vector<8x64xf32>
    %21 = arith.mulf %17, %16 : vector<8x64xf32>
    %22 = arith.addf %20, %21 : vector<8x64xf32>
    %23 = math.tanh %22 : vector<8x64xf32>
    %24 = arith.mulf %19, %23 : vector<8x64xf32>
    %25 = arith.truncf %24 : vector<8x64xf32> to vector<8x64xbf16>
    %26 = vector.extract_strided_slice %25 {offsets = [0, 0], sizes = [8, 32], strides = [1, 1]} : vector<8x64xbf16> to vector<8x32xbf16>
    %27 = arith.index_cast %c0_i32 : i32 to index
    %c0_6 = arith.constant 0 : index
    %c0_7 = arith.constant 0 : index
    %28 = vector.load %arg2[%27, %c0_6, %c0_7] : memref<8x8x64xbf16, #tpu.memory_space<vmem>>, vector<1x8x32xbf16>
    %29 = vector.shape_cast %28 : vector<1x8x32xbf16> to vector<8x32xbf16>
    %30 = vector.shape_cast %26 : vector<8x32xbf16> to vector<1x8x32xbf16>
    tpu.vector_store %arg2[%27, %c0_6, %c0_7], %30 {strides = array<i32>} : memref<8x8x64xbf16, #tpu.memory_space<vmem>>, vector<1x8x32xbf16>,
    %31 = vector.extract_strided_slice %25 {offsets = [0, 32], sizes = [8, 32], strides = [1, 1]} : vector<8x64xbf16> to vector<8x32xbf16>
    %c7_i32 = arith.constant 7 : i32
    %32 = arith.subi %c7_i32, %c0_i32 : i32
    %33 = arith.index_cast %32 : i32 to index
    %c0_8 = arith.constant 0 : index
    %c32 = arith.constant 32 : index
    %34 = vector.load %arg2[%33, %c0_8, %c32] : memref<8x8x64xbf16, #tpu.memory_space<vmem>>, vector<1x8x32xbf16>
    %35 = vector.shape_cast %34 : vector<1x8x32xbf16> to vector<8x32xbf16>
    %36 = vector.shape_cast %31 : vector<8x32xbf16> to vector<1x8x32xbf16>
    tpu.vector_store %arg2[%33, %c0_8, %c32], %36 {strides = array<i32>} : memref<8x8x64xbf16, #tpu.memory_space<vmem>>, vector<1x8x32xbf16>,
    %c1_i32 = arith.constant 1 : i32
    %37 = arith.index_cast %c1_i32 : i32 to index
    %c0_9 = arith.constant 0 : index
    %c0_10 = arith.constant 0 : index
    %38 = vector.load %arg0[%37, %c0_9, %c0_10] : memref<8x8x256xf32, #tpu.memory_space<vmem>>, vector<1x8x256xf32>
    %39 = vector.shape_cast %38 : vector<1x8x256xf32> to vector<8x256xf32>
    %40 = arith.truncf %24 : vector<8x64xf32> to vector<8x64xbf16>
    %cst_11 = arith.constant dense<0.000000e+00> : vector<8x256xf32>
    %41 = tpu.matmul %40, %0, %cst_11 {dimension_numbers = #tpu.dot_dimension_numbers<[1], [0], [0], [1], [0, 0, 1, 1], [], []>} : vector<8x64xbf16>, vector<64x256xbf16>, vector<8x256xf32> -> vector<8x256xf32>
    %42 = arith.addf %39, %41 : vector<8x256xf32>
    %43 = vector.extract_strided_slice %42 {offsets = [0, 0], sizes = [8, 192], strides = [1, 1]} : vector<8x256xf32> to vector<8x192xf32>
    %44 = arith.negf %43 : vector<8x192xf32>
    %45 = math.exp %44 : vector<8x192xf32>
    %cst_12 = arith.constant 1.000000e+00 : f32
    %46 = vector.broadcast %cst_12 : f32 to vector<8x192xf32>
    %47 = arith.addf %46, %45 : vector<8x192xf32>
    %48 = arith.divf %46, %47 : vector<8x192xf32>
    %49 = vector.extract_strided_slice %42 {offsets = [0, 192], sizes = [8, 64], strides = [1, 1]} : vector<8x256xf32> to vector<8x64xf32>
    %50 = math.tanh %49 : vector<8x64xf32>
    %51 = vector.extract_strided_slice %48 {offsets = [0, 0], sizes = [8, 64], strides = [1, 1]} : vector<8x192xf32> to vector<8x64xf32>
    %52 = vector.extract_strided_slice %48 {offsets = [0, 64], sizes = [8, 64], strides = [1, 1]} : vector<8x192xf32> to vector<8x64xf32>
    %53 = vector.extract_strided_slice %48 {offsets = [0, 128], sizes = [8, 64], strides = [1, 1]} : vector<8x192xf32> to vector<8x64xf32>
    %54 = arith.mulf %52, %22 : vector<8x64xf32>
    %55 = arith.mulf %51, %50 : vector<8x64xf32>
    %56 = arith.addf %54, %55 : vector<8x64xf32>
    %57 = math.tanh %56 : vector<8x64xf32>
    %58 = arith.mulf %53, %57 : vector<8x64xf32>
    %59 = arith.truncf %58 : vector<8x64xf32> to vector<8x64xbf16>
    %60 = vector.extract_strided_slice %59 {offsets = [0, 0], sizes = [8, 32], strides = [1, 1]} : vector<8x64xbf16> to vector<8x32xbf16>
    %61 = arith.index_cast %c1_i32 : i32 to index
    %c0_13 = arith.constant 0 : index
    %c0_14 = arith.constant 0 : index
    %62 = vector.load %arg2[%61, %c0_13, %c0_14] : memref<8x8x64xbf16, #tpu.memory_space<vmem>>, vector<1x8x32xbf16>
    %63 = vector.shape_cast %62 : vector<1x8x32xbf16> to vector<8x32xbf16>
    %64 = vector.shape_cast %60 : vector<8x32xbf16> to vector<1x8x32xbf16>
    tpu.vector_store %arg2[%61, %c0_13, %c0_14], %64 {strides = array<i32>} : memref<8x8x64xbf16, #tpu.memory_space<vmem>>, vector<1x8x32xbf16>,
    %65 = vector.extract_strided_slice %59 {offsets = [0, 32], sizes = [8, 32], strides = [1, 1]} : vector<8x64xbf16> to vector<8x32xbf16>
    %c7_i32_15 = arith.constant 7 : i32
    %66 = arith.subi %c7_i32_15, %c1_i32 : i32
    %67 = arith.index_cast %66 : i32 to index
    %c0_16 = arith.constant 0 : index
    %c32_17 = arith.constant 32 : index
    %68 = vector.load %arg2[%67, %c0_16, %c32_17] : memref<8x8x64xbf16, #tpu.memory_space<vmem>>, vector<1x8x32xbf16>
    %69 = vector.shape_cast %68 : vector<1x8x32xbf16> to vector<8x32xbf16>
    %70 = vector.shape_cast %65 : vector<8x32xbf16> to vector<1x8x32xbf16>
    tpu.vector_store %arg2[%67, %c0_16, %c32_17], %70 {strides = array<i32>} : memref<8x8x64xbf16, #tpu.memory_space<vmem>>, vector<1x8x32xbf16>,
    %c2_i32 = arith.constant 2 : i32
    %71 = arith.index_cast %c2_i32 : i32 to index
    %c0_18 = arith.constant 0 : index
    %c0_19 = arith.constant 0 : index
    %72 = vector.load %arg0[%71, %c0_18, %c0_19] : memref<8x8x256xf32, #tpu.memory_space<vmem>>, vector<1x8x256xf32>
    %73 = vector.shape_cast %72 : vector<1x8x256xf32> to vector<8x256xf32>
    %74 = arith.truncf %58 : vector<8x64xf32> to vector<8x64xbf16>
    %cst_20 = arith.constant dense<0.000000e+00> : vector<8x256xf32>
    %75 = tpu.matmul %74, %0, %cst_20 {dimension_numbers = #tpu.dot_dimension_numbers<[1], [0], [0], [1], [0, 0, 1, 1], [], []>} : vector<8x64xbf16>, vector<64x256xbf16>, vector<8x256xf32> -> vector<8x256xf32>
    %76 = arith.addf %73, %75 : vector<8x256xf32>
    %77 = vector.extract_strided_slice %76 {offsets = [0, 0], sizes = [8, 192], strides = [1, 1]} : vector<8x256xf32> to vector<8x192xf32>
    %78 = arith.negf %77 : vector<8x192xf32>
    %79 = math.exp %78 : vector<8x192xf32>
    %cst_21 = arith.constant 1.000000e+00 : f32
    %80 = vector.broadcast %cst_21 : f32 to vector<8x192xf32>
    %81 = arith.addf %80, %79 : vector<8x192xf32>
    %82 = arith.divf %80, %81 : vector<8x192xf32>
    %83 = vector.extract_strided_slice %76 {offsets = [0, 192], sizes = [8, 64], strides = [1, 1]} : vector<8x256xf32> to vector<8x64xf32>
    %84 = math.tanh %83 : vector<8x64xf32>
    %85 = vector.extract_strided_slice %82 {offsets = [0, 0], sizes = [8, 64], strides = [1, 1]} : vector<8x192xf32> to vector<8x64xf32>
    %86 = vector.extract_strided_slice %82 {offsets = [0, 64], sizes = [8, 64], strides = [1, 1]} : vector<8x192xf32> to vector<8x64xf32>
    %87 = vector.extract_strided_slice %82 {offsets = [0, 128], sizes = [8, 64], strides = [1, 1]} : vector<8x192xf32> to vector<8x64xf32>
    %88 = arith.mulf %86, %56 : vector<8x64xf32>
    %89 = arith.mulf %85, %84 : vector<8x64xf32>
    %90 = arith.addf %88, %89 : vector<8x64xf32>
    %91 = math.tanh %90 : vector<8x64xf32>
    %92 = arith.mulf %87, %91 : vector<8x64xf32>
    %93 = arith.truncf %92 : vector<8x64xf32> to vector<8x64xbf16>
    %94 = vector.extract_strided_slice %93 {offsets = [0, 0], sizes = [8, 32], strides = [1, 1]} : vector<8x64xbf16> to vector<8x32xbf16>
    %95 = arith.index_cast %c2_i32 : i32 to index
    %c0_22 = arith.constant 0 : index
    %c0_23 = arith.constant 0 : index
    %96 = vector.load %arg2[%95, %c0_22, %c0_23] : memref<8x8x64xbf16, #tpu.memory_space<vmem>>, vector<1x8x32xbf16>
    %97 = vector.shape_cast %96 : vector<1x8x32xbf16> to vector<8x32xbf16>
    %98 = vector.shape_cast %94 : vector<8x32xbf16> to vector<1x8x32xbf16>
    tpu.vector_store %arg2[%95, %c0_22, %c0_23], %98 {strides = array<i32>} : memref<8x8x64xbf16, #tpu.memory_space<vmem>>, vector<1x8x32xbf16>,
    %99 = vector.extract_strided_slice %93 {offsets = [0, 32], sizes = [8, 32], strides = [1, 1]} : vector<8x64xbf16> to vector<8x32xbf16>
    %c7_i32_24 = arith.constant 7 : i32
    %100 = arith.subi %c7_i32_24, %c2_i32 : i32
    %101 = arith.index_cast %100 : i32 to index
    %c0_25 = arith.constant 0 : index
    %c32_26 = arith.constant 32 : index
    %102 = vector.load %arg2[%101, %c0_25, %c32_26] : memref<8x8x64xbf16, #tpu.memory_space<vmem>>, vector<1x8x32xbf16>
    %103 = vector.shape_cast %102 : vector<1x8x32xbf16> to vector<8x32xbf16>
    %104 = vector.shape_cast %99 : vector<8x32xbf16> to vector<1x8x32xbf16>
    tpu.vector_store %arg2[%101, %c0_25, %c32_26], %104 {strides = array<i32>} : memref<8x8x64xbf16, #tpu.memory_space<vmem>>, vector<1x8x32xbf16>,
    %c3_i32 = arith.constant 3 : i32
    %105 = arith.index_cast %c3_i32 : i32 to index
    %c0_27 = arith.constant 0 : index
    %c0_28 = arith.constant 0 : index
    %106 = vector.load %arg0[%105, %c0_27, %c0_28] : memref<8x8x256xf32, #tpu.memory_space<vmem>>, vector<1x8x256xf32>
    %107 = vector.shape_cast %106 : vector<1x8x256xf32> to vector<8x256xf32>
    %108 = arith.truncf %92 : vector<8x64xf32> to vector<8x64xbf16>
    %cst_29 = arith.constant dense<0.000000e+00> : vector<8x256xf32>
    %109 = tpu.matmul %108, %0, %cst_29 {dimension_numbers = #tpu.dot_dimension_numbers<[1], [0], [0], [1], [0, 0, 1, 1], [], []>} : vector<8x64xbf16>, vector<64x256xbf16>, vector<8x256xf32> -> vector<8x256xf32>
    %110 = arith.addf %107, %109 : vector<8x256xf32>
    %111 = vector.extract_strided_slice %110 {offsets = [0, 0], sizes = [8, 192], strides = [1, 1]} : vector<8x256xf32> to vector<8x192xf32>
    %112 = arith.negf %111 : vector<8x192xf32>
    %113 = math.exp %112 : vector<8x192xf32>
    %cst_30 = arith.constant 1.000000e+00 : f32
    %114 = vector.broadcast %cst_30 : f32 to vector<8x192xf32>
    %115 = arith.addf %114, %113 : vector<8x192xf32>
    %116 = arith.divf %114, %115 : vector<8x192xf32>
    %117 = vector.extract_strided_slice %110 {offsets = [0, 192], sizes = [8, 64], strides = [1, 1]} : vector<8x256xf32> to vector<8x64xf32>
    %118 = math.tanh %117 : vector<8x64xf32>
    %119 = vector.extract_strided_slice %116 {offsets = [0, 0], sizes = [8, 64], strides = [1, 1]} : vector<8x192xf32> to vector<8x64xf32>
    %120 = vector.extract_strided_slice %116 {offsets = [0, 64], sizes = [8, 64], strides = [1, 1]} : vector<8x192xf32> to vector<8x64xf32>
    %121 = vector.extract_strided_slice %116 {offsets = [0, 128], sizes = [8, 64], strides = [1, 1]} : vector<8x192xf32> to vector<8x64xf32>
    %122 = arith.mulf %120, %90 : vector<8x64xf32>
    %123 = arith.mulf %119, %118 : vector<8x64xf32>
    %124 = arith.addf %122, %123 : vector<8x64xf32>
    %125 = math.tanh %124 : vector<8x64xf32>
    %126 = arith.mulf %121, %125 : vector<8x64xf32>
    %127 = arith.truncf %126 : vector<8x64xf32> to vector<8x64xbf16>
    %128 = vector.extract_strided_slice %127 {offsets = [0, 0], sizes = [8, 32], strides = [1, 1]} : vector<8x64xbf16> to vector<8x32xbf16>
    %129 = arith.index_cast %c3_i32 : i32 to index
    %c0_31 = arith.constant 0 : index
    %c0_32 = arith.constant 0 : index
    %130 = vector.load %arg2[%129, %c0_31, %c0_32] : memref<8x8x64xbf16, #tpu.memory_space<vmem>>, vector<1x8x32xbf16>
    %131 = vector.shape_cast %130 : vector<1x8x32xbf16> to vector<8x32xbf16>
    %132 = vector.shape_cast %128 : vector<8x32xbf16> to vector<1x8x32xbf16>
    tpu.vector_store %arg2[%129, %c0_31, %c0_32], %132 {strides = array<i32>} : memref<8x8x64xbf16, #tpu.memory_space<vmem>>, vector<1x8x32xbf16>,
    %133 = vector.extract_strided_slice %127 {offsets = [0, 32], sizes = [8, 32], strides = [1, 1]} : vector<8x64xbf16> to vector<8x32xbf16>
    %c7_i32_33 = arith.constant 7 : i32
    %134 = arith.subi %c7_i32_33, %c3_i32 : i32
    %135 = arith.index_cast %134 : i32 to index
    %c0_34 = arith.constant 0 : index
    %c32_35 = arith.constant 32 : index
    %136 = vector.load %arg2[%135, %c0_34, %c32_35] : memref<8x8x64xbf16, #tpu.memory_space<vmem>>, vector<1x8x32xbf16>
    %137 = vector.shape_cast %136 : vector<1x8x32xbf16> to vector<8x32xbf16>
    %138 = vector.shape_cast %133 : vector<8x32xbf16> to vector<1x8x32xbf16>
    tpu.vector_store %arg2[%135, %c0_34, %c32_35], %138 {strides = array<i32>} : memref<8x8x64xbf16, #tpu.memory_space<vmem>>, vector<1x8x32xbf16>,
    %c4_i32 = arith.constant 4 : i32
    %139 = arith.index_cast %c4_i32 : i32 to index
    %c0_36 = arith.constant 0 : index
    %c0_37 = arith.constant 0 : index
    %140 = vector.load %arg0[%139, %c0_36, %c0_37] : memref<8x8x256xf32, #tpu.memory_space<vmem>>, vector<1x8x256xf32>
    %141 = vector.shape_cast %140 : vector<1x8x256xf32> to vector<8x256xf32>
    %142 = arith.truncf %126 : vector<8x64xf32> to vector<8x64xbf16>
    %cst_38 = arith.constant dense<0.000000e+00> : vector<8x256xf32>
    %143 = tpu.matmul %142, %0, %cst_38 {dimension_numbers = #tpu.dot_dimension_numbers<[1], [0], [0], [1], [0, 0, 1, 1], [], []>} : vector<8x64xbf16>, vector<64x256xbf16>, vector<8x256xf32> -> vector<8x256xf32>
    %144 = arith.addf %141, %143 : vector<8x256xf32>
    %145 = vector.extract_strided_slice %144 {offsets = [0, 0], sizes = [8, 192], strides = [1, 1]} : vector<8x256xf32> to vector<8x192xf32>
    %146 = arith.negf %145 : vector<8x192xf32>
    %147 = math.exp %146 : vector<8x192xf32>
    %cst_39 = arith.constant 1.000000e+00 : f32
    %148 = vector.broadcast %cst_39 : f32 to vector<8x192xf32>
    %149 = arith.addf %148, %147 : vector<8x192xf32>
    %150 = arith.divf %148, %149 : vector<8x192xf32>
    %151 = vector.extract_strided_slice %144 {offsets = [0, 192], sizes = [8, 64], strides = [1, 1]} : vector<8x256xf32> to vector<8x64xf32>
    %152 = math.tanh %151 : vector<8x64xf32>
    %153 = vector.extract_strided_slice %150 {offsets = [0, 0], sizes = [8, 64], strides = [1, 1]} : vector<8x192xf32> to vector<8x64xf32>
    %154 = vector.extract_strided_slice %150 {offsets = [0, 64], sizes = [8, 64], strides = [1, 1]} : vector<8x192xf32> to vector<8x64xf32>
    %155 = vector.extract_strided_slice %150 {offsets = [0, 128], sizes = [8, 64], strides = [1, 1]} : vector<8x192xf32> to vector<8x64xf32>
    %156 = arith.mulf %154, %124 : vector<8x64xf32>
    %157 = arith.mulf %153, %152 : vector<8x64xf32>
    %158 = arith.addf %156, %157 : vector<8x64xf32>
    %159 = math.tanh %158 : vector<8x64xf32>
    %160 = arith.mulf %155, %159 : vector<8x64xf32>
    %161 = arith.truncf %160 : vector<8x64xf32> to vector<8x64xbf16>
    %162 = vector.extract_strided_slice %161 {offsets = [0, 0], sizes = [8, 32], strides = [1, 1]} : vector<8x64xbf16> to vector<8x32xbf16>
    %163 = arith.index_cast %c4_i32 : i32 to index
    %c0_40 = arith.constant 0 : index
    %c0_41 = arith.constant 0 : index
    %164 = vector.load %arg2[%163, %c0_40, %c0_41] : memref<8x8x64xbf16, #tpu.memory_space<vmem>>, vector<1x8x32xbf16>
    %165 = vector.shape_cast %164 : vector<1x8x32xbf16> to vector<8x32xbf16>
    %166 = vector.shape_cast %162 : vector<8x32xbf16> to vector<1x8x32xbf16>
    tpu.vector_store %arg2[%163, %c0_40, %c0_41], %166 {strides = array<i32>} : memref<8x8x64xbf16, #tpu.memory_space<vmem>>, vector<1x8x32xbf16>,
    %167 = vector.extract_strided_slice %161 {offsets = [0, 32], sizes = [8, 32], strides = [1, 1]} : vector<8x64xbf16> to vector<8x32xbf16>
    %c7_i32_42 = arith.constant 7 : i32
    %168 = arith.subi %c7_i32_42, %c4_i32 : i32
    %169 = arith.index_cast %168 : i32 to index
    %c0_43 = arith.constant 0 : index
    %c32_44 = arith.constant 32 : index
    %170 = vector.load %arg2[%169, %c0_43, %c32_44] : memref<8x8x64xbf16, #tpu.memory_space<vmem>>, vector<1x8x32xbf16>
    %171 = vector.shape_cast %170 : vector<1x8x32xbf16> to vector<8x32xbf16>
    %172 = vector.shape_cast %167 : vector<8x32xbf16> to vector<1x8x32xbf16>
    tpu.vector_store %arg2[%169, %c0_43, %c32_44], %172 {strides = array<i32>} : memref<8x8x64xbf16, #tpu.memory_space<vmem>>, vector<1x8x32xbf16>,
    %c5_i32 = arith.constant 5 : i32
    %173 = arith.index_cast %c5_i32 : i32 to index
    %c0_45 = arith.constant 0 : index
    %c0_46 = arith.constant 0 : index
    %174 = vector.load %arg0[%173, %c0_45, %c0_46] : memref<8x8x256xf32, #tpu.memory_space<vmem>>, vector<1x8x256xf32>
    %175 = vector.shape_cast %174 : vector<1x8x256xf32> to vector<8x256xf32>
    %176 = arith.truncf %160 : vector<8x64xf32> to vector<8x64xbf16>
    %cst_47 = arith.constant dense<0.000000e+00> : vector<8x256xf32>
    %177 = tpu.matmul %176, %0, %cst_47 {dimension_numbers = #tpu.dot_dimension_numbers<[1], [0], [0], [1], [0, 0, 1, 1], [], []>} : vector<8x64xbf16>, vector<64x256xbf16>, vector<8x256xf32> -> vector<8x256xf32>
    %178 = arith.addf %175, %177 : vector<8x256xf32>
    %179 = vector.extract_strided_slice %178 {offsets = [0, 0], sizes = [8, 192], strides = [1, 1]} : vector<8x256xf32> to vector<8x192xf32>
    %180 = arith.negf %179 : vector<8x192xf32>
    %181 = math.exp %180 : vector<8x192xf32>
    %cst_48 = arith.constant 1.000000e+00 : f32
    %182 = vector.broadcast %cst_48 : f32 to vector<8x192xf32>
    %183 = arith.addf %182, %181 : vector<8x192xf32>
    %184 = arith.divf %182, %183 : vector<8x192xf32>
    %185 = vector.extract_strided_slice %178 {offsets = [0, 192], sizes = [8, 64], strides = [1, 1]} : vector<8x256xf32> to vector<8x64xf32>
    %186 = math.tanh %185 : vector<8x64xf32>
    %187 = vector.extract_strided_slice %184 {offsets = [0, 0], sizes = [8, 64], strides = [1, 1]} : vector<8x192xf32> to vector<8x64xf32>
    %188 = vector.extract_strided_slice %184 {offsets = [0, 64], sizes = [8, 64], strides = [1, 1]} : vector<8x192xf32> to vector<8x64xf32>
    %189 = vector.extract_strided_slice %184 {offsets = [0, 128], sizes = [8, 64], strides = [1, 1]} : vector<8x192xf32> to vector<8x64xf32>
    %190 = arith.mulf %188, %158 : vector<8x64xf32>
    %191 = arith.mulf %187, %186 : vector<8x64xf32>
    %192 = arith.addf %190, %191 : vector<8x64xf32>
    %193 = math.tanh %192 : vector<8x64xf32>
    %194 = arith.mulf %189, %193 : vector<8x64xf32>
    %195 = arith.truncf %194 : vector<8x64xf32> to vector<8x64xbf16>
    %196 = vector.extract_strided_slice %195 {offsets = [0, 0], sizes = [8, 32], strides = [1, 1]} : vector<8x64xbf16> to vector<8x32xbf16>
    %197 = arith.index_cast %c5_i32 : i32 to index
    %c0_49 = arith.constant 0 : index
    %c0_50 = arith.constant 0 : index
    %198 = vector.load %arg2[%197, %c0_49, %c0_50] : memref<8x8x64xbf16, #tpu.memory_space<vmem>>, vector<1x8x32xbf16>
    %199 = vector.shape_cast %198 : vector<1x8x32xbf16> to vector<8x32xbf16>
    %200 = vector.shape_cast %196 : vector<8x32xbf16> to vector<1x8x32xbf16>
    tpu.vector_store %arg2[%197, %c0_49, %c0_50], %200 {strides = array<i32>} : memref<8x8x64xbf16, #tpu.memory_space<vmem>>, vector<1x8x32xbf16>,
    %201 = vector.extract_strided_slice %195 {offsets = [0, 32], sizes = [8, 32], strides = [1, 1]} : vector<8x64xbf16> to vector<8x32xbf16>
    %c7_i32_51 = arith.constant 7 : i32
    %202 = arith.subi %c7_i32_51, %c5_i32 : i32
    %203 = arith.index_cast %202 : i32 to index
    %c0_52 = arith.constant 0 : index
    %c32_53 = arith.constant 32 : index
    %204 = vector.load %arg2[%203, %c0_52, %c32_53] : memref<8x8x64xbf16, #tpu.memory_space<vmem>>, vector<1x8x32xbf16>
    %205 = vector.shape_cast %204 : vector<1x8x32xbf16> to vector<8x32xbf16>
    %206 = vector.shape_cast %201 : vector<8x32xbf16> to vector<1x8x32xbf16>
    tpu.vector_store %arg2[%203, %c0_52, %c32_53], %206 {strides = array<i32>} : memref<8x8x64xbf16, #tpu.memory_space<vmem>>, vector<1x8x32xbf16>,
    %c6_i32 = arith.constant 6 : i32
    %207 = arith.index_cast %c6_i32 : i32 to index
    %c0_54 = arith.constant 0 : index
    %c0_55 = arith.constant 0 : index
    %208 = vector.load %arg0[%207, %c0_54, %c0_55] : memref<8x8x256xf32, #tpu.memory_space<vmem>>, vector<1x8x256xf32>
    %209 = vector.shape_cast %208 : vector<1x8x256xf32> to vector<8x256xf32>
    %210 = arith.truncf %194 : vector<8x64xf32> to vector<8x64xbf16>
    %cst_56 = arith.constant dense<0.000000e+00> : vector<8x256xf32>
    %211 = tpu.matmul %210, %0, %cst_56 {dimension_numbers = #tpu.dot_dimension_numbers<[1], [0], [0], [1], [0, 0, 1, 1], [], []>} : vector<8x64xbf16>, vector<64x256xbf16>, vector<8x256xf32> -> vector<8x256xf32>
    %212 = arith.addf %209, %211 : vector<8x256xf32>
    %213 = vector.extract_strided_slice %212 {offsets = [0, 0], sizes = [8, 192], strides = [1, 1]} : vector<8x256xf32> to vector<8x192xf32>
    %214 = arith.negf %213 : vector<8x192xf32>
    %215 = math.exp %214 : vector<8x192xf32>
    %cst_57 = arith.constant 1.000000e+00 : f32
    %216 = vector.broadcast %cst_57 : f32 to vector<8x192xf32>
    %217 = arith.addf %216, %215 : vector<8x192xf32>
    %218 = arith.divf %216, %217 : vector<8x192xf32>
    %219 = vector.extract_strided_slice %212 {offsets = [0, 192], sizes = [8, 64], strides = [1, 1]} : vector<8x256xf32> to vector<8x64xf32>
    %220 = math.tanh %219 : vector<8x64xf32>
    %221 = vector.extract_strided_slice %218 {offsets = [0, 0], sizes = [8, 64], strides = [1, 1]} : vector<8x192xf32> to vector<8x64xf32>
    %222 = vector.extract_strided_slice %218 {offsets = [0, 64], sizes = [8, 64], strides = [1, 1]} : vector<8x192xf32> to vector<8x64xf32>
    %223 = vector.extract_strided_slice %218 {offsets = [0, 128], sizes = [8, 64], strides = [1, 1]} : vector<8x192xf32> to vector<8x64xf32>
    %224 = arith.mulf %222, %192 : vector<8x64xf32>
    %225 = arith.mulf %221, %220 : vector<8x64xf32>
    %226 = arith.addf %224, %225 : vector<8x64xf32>
    %227 = math.tanh %226 : vector<8x64xf32>
    %228 = arith.mulf %223, %227 : vector<8x64xf32>
    %229 = arith.truncf %228 : vector<8x64xf32> to vector<8x64xbf16>
    %230 = vector.extract_strided_slice %229 {offsets = [0, 0], sizes = [8, 32], strides = [1, 1]} : vector<8x64xbf16> to vector<8x32xbf16>
    %231 = arith.index_cast %c6_i32 : i32 to index
    %c0_58 = arith.constant 0 : index
    %c0_59 = arith.constant 0 : index
    %232 = vector.load %arg2[%231, %c0_58, %c0_59] : memref<8x8x64xbf16, #tpu.memory_space<vmem>>, vector<1x8x32xbf16>
    %233 = vector.shape_cast %232 : vector<1x8x32xbf16> to vector<8x32xbf16>
    %234 = vector.shape_cast %230 : vector<8x32xbf16> to vector<1x8x32xbf16>
    tpu.vector_store %arg2[%231, %c0_58, %c0_59], %234 {strides = array<i32>} : memref<8x8x64xbf16, #tpu.memory_space<vmem>>, vector<1x8x32xbf16>,
    %235 = vector.extract_strided_slice %229 {offsets = [0, 32], sizes = [8, 32], strides = [1, 1]} : vector<8x64xbf16> to vector<8x32xbf16>
    %c7_i32_60 = arith.constant 7 : i32
    %236 = arith.subi %c7_i32_60, %c6_i32 : i32
    %237 = arith.index_cast %236 : i32 to index
    %c0_61 = arith.constant 0 : index
    %c32_62 = arith.constant 32 : index
    %238 = vector.load %arg2[%237, %c0_61, %c32_62] : memref<8x8x64xbf16, #tpu.memory_space<vmem>>, vector<1x8x32xbf16>
    %239 = vector.shape_cast %238 : vector<1x8x32xbf16> to vector<8x32xbf16>
    %240 = vector.shape_cast %235 : vector<8x32xbf16> to vector<1x8x32xbf16>
    tpu.vector_store %arg2[%237, %c0_61, %c32_62], %240 {strides = array<i32>} : memref<8x8x64xbf16, #tpu.memory_space<vmem>>, vector<1x8x32xbf16>,
    %c7_i32_63 = arith.constant 7 : i32
    %241 = arith.index_cast %c7_i32_63 : i32 to index
    %c0_64 = arith.constant 0 : index
    %c0_65 = arith.constant 0 : index
    %242 = vector.load %arg0[%241, %c0_64, %c0_65] : memref<8x8x256xf32, #tpu.memory_space<vmem>>, vector<1x8x256xf32>
    %243 = vector.shape_cast %242 : vector<1x8x256xf32> to vector<8x256xf32>
    %244 = arith.truncf %228 : vector<8x64xf32> to vector<8x64xbf16>
    %cst_66 = arith.constant dense<0.000000e+00> : vector<8x256xf32>
    %245 = tpu.matmul %244, %0, %cst_66 {dimension_numbers = #tpu.dot_dimension_numbers<[1], [0], [0], [1], [0, 0, 1, 1], [], []>} : vector<8x64xbf16>, vector<64x256xbf16>, vector<8x256xf32> -> vector<8x256xf32>
    %246 = arith.addf %243, %245 : vector<8x256xf32>
    %247 = vector.extract_strided_slice %246 {offsets = [0, 0], sizes = [8, 192], strides = [1, 1]} : vector<8x256xf32> to vector<8x192xf32>
    %248 = arith.negf %247 : vector<8x192xf32>
    %249 = math.exp %248 : vector<8x192xf32>
    %cst_67 = arith.constant 1.000000e+00 : f32
    %250 = vector.broadcast %cst_67 : f32 to vector<8x192xf32>
    %251 = arith.addf %250, %249 : vector<8x192xf32>
    %252 = arith.divf %250, %251 : vector<8x192xf32>
    %253 = vector.extract_strided_slice %246 {offsets = [0, 192], sizes = [8, 64], strides = [1, 1]} : vector<8x256xf32> to vector<8x64xf32>
    %254 = math.tanh %253 : vector<8x64xf32>
    %255 = vector.extract_strided_slice %252 {offsets = [0, 0], sizes = [8, 64], strides = [1, 1]} : vector<8x192xf32> to vector<8x64xf32>
    %256 = vector.extract_strided_slice %252 {offsets = [0, 64], sizes = [8, 64], strides = [1, 1]} : vector<8x192xf32> to vector<8x64xf32>
    %257 = vector.extract_strided_slice %252 {offsets = [0, 128], sizes = [8, 64], strides = [1, 1]} : vector<8x192xf32> to vector<8x64xf32>
    %258 = arith.mulf %256, %226 : vector<8x64xf32>
    %259 = arith.mulf %255, %254 : vector<8x64xf32>
    %260 = arith.addf %258, %259 : vector<8x64xf32>
    %261 = math.tanh %260 : vector<8x64xf32>
    %262 = arith.mulf %257, %261 : vector<8x64xf32>
    %263 = arith.truncf %262 : vector<8x64xf32> to vector<8x64xbf16>
    %264 = vector.extract_strided_slice %263 {offsets = [0, 0], sizes = [8, 32], strides = [1, 1]} : vector<8x64xbf16> to vector<8x32xbf16>
    %265 = arith.index_cast %c7_i32_63 : i32 to index
    %c0_68 = arith.constant 0 : index
    %c0_69 = arith.constant 0 : index
    %266 = vector.load %arg2[%265, %c0_68, %c0_69] : memref<8x8x64xbf16, #tpu.memory_space<vmem>>, vector<1x8x32xbf16>
    %267 = vector.shape_cast %266 : vector<1x8x32xbf16> to vector<8x32xbf16>
    %268 = vector.shape_cast %264 : vector<8x32xbf16> to vector<1x8x32xbf16>
    tpu.vector_store %arg2[%265, %c0_68, %c0_69], %268 {strides = array<i32>} : memref<8x8x64xbf16, #tpu.memory_space<vmem>>, vector<1x8x32xbf16>,
    %269 = vector.extract_strided_slice %263 {offsets = [0, 32], sizes = [8, 32], strides = [1, 1]} : vector<8x64xbf16> to vector<8x32xbf16>
    %c7_i32_70 = arith.constant 7 : i32
    %270 = arith.subi %c7_i32_70, %c7_i32_63 : i32
    %271 = arith.index_cast %270 : i32 to index
    %c0_71 = arith.constant 0 : index
    %c32_72 = arith.constant 32 : index
    %272 = vector.load %arg2[%271, %c0_71, %c32_72] : memref<8x8x64xbf16, #tpu.memory_space<vmem>>, vector<1x8x32xbf16>
    %273 = vector.shape_cast %272 : vector<1x8x32xbf16> to vector<8x32xbf16>
    %274 = vector.shape_cast %269 : vector<8x32xbf16> to vector<1x8x32xbf16>
    tpu.vector_store %arg2[%271, %c0_71, %c32_72], %274 {strides = array<i32>} : memref<8x8x64xbf16, #tpu.memory_space<vmem>>, vector<1x8x32xbf16>,
    %c8_i32 = arith.constant 8 : i32
    %c0_73 = arith.constant 0 : index
    %c0_74 = arith.constant 0 : index
    %275 = vector.load %arg3[%c0_73, %c0_74] : memref<8x64xf32, #tpu.memory_space<vmem>>, vector<8x64xf32>
    tpu.vector_store %arg3[%c0_73, %c0_74], %262 {strides = array<i32>} : memref<8x64xf32, #tpu.memory_space<vmem>>, vector<8x64xf32>,
    %c0_75 = arith.constant 0 : index
    %c0_76 = arith.constant 0 : index
    %276 = vector.load %arg4[%c0_75, %c0_76] : memref<8x64xf32, #tpu.memory_space<vmem>>, vector<8x64xf32>
    tpu.vector_store %arg4[%c0_75, %c0_76], %260 {strides = array<i32>} : memref<8x64xf32, #tpu.memory_space<vmem>>, vector<8x64xf32>,
    return
  }
}

module attributes {stable_mosaic.version = 11 : i64} {
  func.func @bilstm_layer_kernel(%arg0: memref<8x8x256xf32, #tpu.memory_space<vmem>>, %arg1: memref<64x256xbf16, #tpu.memory_space<vmem>>, %arg2: memref<8x8x64xbf16, #tpu.memory_space<vmem>>, %arg3: memref<8x64xf32, #tpu.memory_space<vmem>>, %arg4: memref<8x64xf32, #tpu.memory_space<vmem>>) attributes {dimension_semantics = [], scalar_prefetch = 0 : i64, scratch_operands = 0 : i64, tpu.core_type = #tpu.core_type<tc>} {
    %c0 = arith.constant 0 : index
    %c0_0 = arith.constant 0 : index
    %0 = vector.load %arg1[%c0, %c0_0] : memref<64x256xbf16, #tpu.memory_space<vmem>>, vector<64x256xbf16>
    %cst = arith.constant 0.000000e+00 : f32
    %1 = vector.broadcast %cst : f32 to vector<8x64xf32>
    %cst_1 = arith.constant 0.000000e+00 : f32
    %2 = vector.broadcast %cst_1 : f32 to vector<8x64xf32>
    %c0_i32 = arith.constant 0 : i32
    %3 = arith.index_cast %c0_i32 : i32 to index
    %c0_2 = arith.constant 0 : index
    %c0_3 = arith.constant 0 : index
    %4 = vector.load %arg0[%3, %c0_2, %c0_3] : memref<8x8x256xf32, #tpu.memory_space<vmem>>, vector<1x8x256xf32>
    %5 = vector.shape_cast %4 : vector<1x8x256xf32> to vector<8x256xf32>
    %6 = arith.truncf %1 : vector<8x64xf32> to vector<8x64xbf16>
    %cst_4 = arith.constant dense<0.000000e+00> : vector<8x256xf32>
    %7 = tpu.matmul %6, %0, %cst_4 {dimension_numbers = #tpu.dot_dimension_numbers<[1], [0], [0], [1], [0, 0, 1, 1], [], []>} : vector<8x64xbf16>, vector<64x256xbf16>, vector<8x256xf32> -> vector<8x256xf32>
    %8 = arith.addf %5, %7 : vector<8x256xf32>
    %9 = vector.extract_strided_slice %8 {offsets = [0, 0], sizes = [8, 192], strides = [1, 1]} : vector<8x256xf32> to vector<8x192xf32>
    %10 = arith.negf %9 : vector<8x192xf32>
    %11 = math.exp %10 : vector<8x192xf32>
    %cst_5 = arith.constant 1.000000e+00 : f32
    %12 = vector.broadcast %cst_5 : f32 to vector<8x192xf32>
    %13 = arith.addf %12, %11 : vector<8x192xf32>
    %14 = arith.divf %12, %13 : vector<8x192xf32>
    %15 = vector.extract_strided_slice %8 {offsets = [0, 192], sizes = [8, 64], strides = [1, 1]} : vector<8x256xf32> to vector<8x64xf32>
    %16 = math.tanh %15 : vector<8x64xf32>
    %17 = vector.extract_strided_slice %14 {offsets = [0, 0], sizes = [8, 64], strides = [1, 1]} : vector<8x192xf32> to vector<8x64xf32>
    %18 = vector.extract_strided_slice %14 {offsets = [0, 64], sizes = [8, 64], strides = [1, 1]} : vector<8x192xf32> to vector<8x64xf32>
    %19 = vector.extract_strided_slice %14 {offsets = [0, 128], sizes = [8, 64], strides = [1, 1]} : vector<8x192xf32> to vector<8x64xf32>
    %20 = arith.mulf %18, %2 : vector<8x64xf32>
    %21 = arith.mulf %17, %16 : vector<8x64xf32>
    %22 = arith.addf %20, %21 : vector<8x64xf32>
    %23 = math.tanh %22 : vector<8x64xf32>
    %24 = arith.mulf %19, %23 : vector<8x64xf32>
    %25 = arith.truncf %24 : vector<8x64xf32> to vector<8x64xbf16>
    %26 = vector.extract_strided_slice %25 {offsets = [0, 0], sizes = [8, 32], strides = [1, 1]} : vector<8x64xbf16> to vector<8x32xbf16>
    %27 = arith.index_cast %c0_i32 : i32 to index
    %c0_6 = arith.constant 0 : index
    %c0_7 = arith.constant 0 : index
    %28 = vector.load %arg2[%27, %c0_6, %c0_7] : memref<8x8x64xbf16, #tpu.memory_space<vmem>>, vector<1x8x32xbf16>
    %29 = vector.shape_cast %28 : vector<1x8x32xbf16> to vector<8x32xbf16>
    %30 = vector.shape_cast %26 : vector<8x32xbf16> to vector<1x8x32xbf16>
    tpu.vector_store %arg2[%27, %c0_6, %c0_7], %30 {strides = array<i32>} : memref<8x8x64xbf16, #tpu.memory_space<vmem>>, vector<1x8x32xbf16>,
    %31 = vector.extract_strided_slice %25 {offsets = [0, 32], sizes = [8, 32], strides = [1, 1]} : vector<8x64xbf16> to vector<8x32xbf16>
    %c7_i32 = arith.constant 7 : i32
    %32 = arith.subi %c7_i32, %c0_i32 : i32
    %33 = arith.index_cast %32 : i32 to index
    %c0_8 = arith.constant 0 : index
    %c32 = arith.constant 32 : index
    %34 = vector.load %arg2[%33, %c0_8, %c32] : memref<8x8x64xbf16, #tpu.memory_space<vmem>>, vector<1x8x32xbf16>
    %35 = vector.shape_cast %34 : vector<1x8x32xbf16> to vector<8x32xbf16>
    %36 = vector.shape_cast %31 : vector<8x32xbf16> to vector<1x8x32xbf16>
    tpu.vector_store %arg2[%33, %c0_8, %c32], %36 {strides = array<i32>} : memref<8x8x64xbf16, #tpu.memory_space<vmem>>, vector<1x8x32xbf16>,
    %c1_i32 = arith.constant 1 : i32
    %37 = arith.index_cast %c1_i32 : i32 to index
    %c0_9 = arith.constant 0 : index
    %c0_10 = arith.constant 0 : index
    %38 = vector.load %arg0[%37, %c0_9, %c0_10] : memref<8x8x256xf32, #tpu.memory_space<vmem>>, vector<1x8x256xf32>
    %39 = vector.shape_cast %38 : vector<1x8x256xf32> to vector<8x256xf32>
    %40 = arith.truncf %24 : vector<8x64xf32> to vector<8x64xbf16>
    %cst_11 = arith.constant dense<0.000000e+00> : vector<8x256xf32>
    %41 = tpu.matmul %40, %0, %cst_11 {dimension_numbers = #tpu.dot_dimension_numbers<[1], [0], [0], [1], [0, 0, 1, 1], [], []>} : vector<8x64xbf16>, vector<64x256xbf16>, vector<8x256xf32> -> vector<8x256xf32>
    %42 = arith.addf %39, %41 : vector<8x256xf32>
    %43 = vector.extract_strided_slice %42 {offsets = [0, 0], sizes = [8, 192], strides = [1, 1]} : vector<8x256xf32> to vector<8x192xf32>
    %44 = arith.negf %43 : vector<8x192xf32>
    %45 = math.exp %44 : vector<8x192xf32>
    %cst_12 = arith.constant 1.000000e+00 : f32
    %46 = vector.broadcast %cst_12 : f32 to vector<8x192xf32>
    %47 = arith.addf %46, %45 : vector<8x192xf32>
    %48 = arith.divf %46, %47 : vector<8x192xf32>
    %49 = vector.extract_strided_slice %42 {offsets = [0, 192], sizes = [8, 64], strides = [1, 1]} : vector<8x256xf32> to vector<8x64xf32>
    %50 = math.tanh %49 : vector<8x64xf32>
    %51 = vector.extract_strided_slice %48 {offsets = [0, 0], sizes = [8, 64], strides = [1, 1]} : vector<8x192xf32> to vector<8x64xf32>
    %52 = vector.extract_strided_slice %48 {offsets = [0, 64], sizes = [8, 64], strides = [1, 1]} : vector<8x192xf32> to vector<8x64xf32>
    %53 = vector.extract_strided_slice %48 {offsets = [0, 128], sizes = [8, 64], strides = [1, 1]} : vector<8x192xf32> to vector<8x64xf32>
    %54 = arith.mulf %52, %22 : vector<8x64xf32>
    %55 = arith.mulf %51, %50 : vector<8x64xf32>
    %56 = arith.addf %54, %55 : vector<8x64xf32>
    %57 = math.tanh %56 : vector<8x64xf32>
    %58 = arith.mulf %53, %57 : vector<8x64xf32>
    %59 = arith.truncf %58 : vector<8x64xf32> to vector<8x64xbf16>
    %60 = vector.extract_strided_slice %59 {offsets = [0, 0], sizes = [8, 32], strides = [1, 1]} : vector<8x64xbf16> to vector<8x32xbf16>
    %61 = arith.index_cast %c1_i32 : i32 to index
    %c0_13 = arith.constant 0 : index
    %c0_14 = arith.constant 0 : index
    %62 = vector.load %arg2[%61, %c0_13, %c0_14] : memref<8x8x64xbf16, #tpu.memory_space<vmem>>, vector<1x8x32xbf16>
    %63 = vector.shape_cast %62 : vector<1x8x32xbf16> to vector<8x32xbf16>
    %64 = vector.shape_cast %60 : vector<8x32xbf16> to vector<1x8x32xbf16>
    tpu.vector_store %arg2[%61, %c0_13, %c0_14], %64 {strides = array<i32>} : memref<8x8x64xbf16, #tpu.memory_space<vmem>>, vector<1x8x32xbf16>,
    %65 = vector.extract_strided_slice %59 {offsets = [0, 32], sizes = [8, 32], strides = [1, 1]} : vector<8x64xbf16> to vector<8x32xbf16>
    %c7_i32_15 = arith.constant 7 : i32
    %66 = arith.subi %c7_i32_15, %c1_i32 : i32
    %67 = arith.index_cast %66 : i32 to index
    %c0_16 = arith.constant 0 : index
    %c32_17 = arith.constant 32 : index
    %68 = vector.load %arg2[%67, %c0_16, %c32_17] : memref<8x8x64xbf16, #tpu.memory_space<vmem>>, vector<1x8x32xbf16>
    %69 = vector.shape_cast %68 : vector<1x8x32xbf16> to vector<8x32xbf16>
    %70 = vector.shape_cast %65 : vector<8x32xbf16> to vector<1x8x32xbf16>
    tpu.vector_store %arg2[%67, %c0_16, %c32_17], %70 {strides = array<i32>} : memref<8x8x64xbf16, #tpu.memory_space<vmem>>, vector<1x8x32xbf16>,
    %c2_i32 = arith.constant 2 : i32
    %71 = arith.index_cast %c2_i32 : i32 to index
    %c0_18 = arith.constant 0 : index
    %c0_19 = arith.constant 0 : index
    %72 = vector.load %arg0[%71, %c0_18, %c0_19] : memref<8x8x256xf32, #tpu.memory_space<vmem>>, vector<1x8x256xf32>
    %73 = vector.shape_cast %72 : vector<1x8x256xf32> to vector<8x256xf32>
    %74 = arith.truncf %58 : vector<8x64xf32> to vector<8x64xbf16>
    %cst_20 = arith.constant dense<0.000000e+00> : vector<8x256xf32>
    %75 = tpu.matmul %74, %0, %cst_20 {dimension_numbers = #tpu.dot_dimension_numbers<[1], [0], [0], [1], [0, 0, 1, 1], [], []>} : vector<8x64xbf16>, vector<64x256xbf16>, vector<8x256xf32> -> vector<8x256xf32>
    %76 = arith.addf %73, %75 : vector<8x256xf32>
    %77 = vector.extract_strided_slice %76 {offsets = [0, 0], sizes = [8, 192], strides = [1, 1]} : vector<8x256xf32> to vector<8x192xf32>
    %78 = arith.negf %77 : vector<8x192xf32>
    %79 = math.exp %78 : vector<8x192xf32>
    %cst_21 = arith.constant 1.000000e+00 : f32
    %80 = vector.broadcast %cst_21 : f32 to vector<8x192xf32>
    %81 = arith.addf %80, %79 : vector<8x192xf32>
    %82 = arith.divf %80, %81 : vector<8x192xf32>
    %83 = vector.extract_strided_slice %76 {offsets = [0, 192], sizes = [8, 64], strides = [1, 1]} : vector<8x256xf32> to vector<8x64xf32>
    %84 = math.tanh %83 : vector<8x64xf32>
    %85 = vector.extract_strided_slice %82 {offsets = [0, 0], sizes = [8, 64], strides = [1, 1]} : vector<8x192xf32> to vector<8x64xf32>
    %86 = vector.extract_strided_slice %82 {offsets = [0, 64], sizes = [8, 64], strides = [1, 1]} : vector<8x192xf32> to vector<8x64xf32>
    %87 = vector.extract_strided_slice %82 {offsets = [0, 128], sizes = [8, 64], strides = [1, 1]} : vector<8x192xf32> to vector<8x64xf32>
    %88 = arith.mulf %86, %56 : vector<8x64xf32>
    %89 = arith.mulf %85, %84 : vector<8x64xf32>
    %90 = arith.addf %88, %89 : vector<8x64xf32>
    %91 = math.tanh %90 : vector<8x64xf32>
    %92 = arith.mulf %87, %91 : vector<8x64xf32>
    %93 = arith.truncf %92 : vector<8x64xf32> to vector<8x64xbf16>
    %94 = vector.extract_strided_slice %93 {offsets = [0, 0], sizes = [8, 32], strides = [1, 1]} : vector<8x64xbf16> to vector<8x32xbf16>
    %95 = arith.index_cast %c2_i32 : i32 to index
    %c0_22 = arith.constant 0 : index
    %c0_23 = arith.constant 0 : index
    %96 = vector.load %arg2[%95, %c0_22, %c0_23] : memref<8x8x64xbf16, #tpu.memory_space<vmem>>, vector<1x8x32xbf16>
    %97 = vector.shape_cast %96 : vector<1x8x32xbf16> to vector<8x32xbf16>
    %98 = vector.shape_cast %94 : vector<8x32xbf16> to vector<1x8x32xbf16>
    tpu.vector_store %arg2[%95, %c0_22, %c0_23], %98 {strides = array<i32>} : memref<8x8x64xbf16, #tpu.memory_space<vmem>>, vector<1x8x32xbf16>,
    %99 = vector.extract_strided_slice %93 {offsets = [0, 32], sizes = [8, 32], strides = [1, 1]} : vector<8x64xbf16> to vector<8x32xbf16>
    %c7_i32_24 = arith.constant 7 : i32
    %100 = arith.subi %c7_i32_24, %c2_i32 : i32
    %101 = arith.index_cast %100 : i32 to index
    %c0_25 = arith.constant 0 : index
    %c32_26 = arith.constant 32 : index
    %102 = vector.load %arg2[%101, %c0_25, %c32_26] : memref<8x8x64xbf16, #tpu.memory_space<vmem>>, vector<1x8x32xbf16>
    %103 = vector.shape_cast %102 : vector<1x8x32xbf16> to vector<8x32xbf16>
    %104 = vector.shape_cast %99 : vector<8x32xbf16> to vector<1x8x32xbf16>
    tpu.vector_store %arg2[%101, %c0_25, %c32_26], %104 {strides = array<i32>} : memref<8x8x64xbf16, #tpu.memory_space<vmem>>, vector<1x8x32xbf16>,
    %c3_i32 = arith.constant 3 : i32
    %105 = arith.index_cast %c3_i32 : i32 to index
    %c0_27 = arith.constant 0 : index
    %c0_28 = arith.constant 0 : index
    %106 = vector.load %arg0[%105, %c0_27, %c0_28] : memref<8x8x256xf32, #tpu.memory_space<vmem>>, vector<1x8x256xf32>
    %107 = vector.shape_cast %106 : vector<1x8x256xf32> to vector<8x256xf32>
    %108 = arith.truncf %92 : vector<8x64xf32> to vector<8x64xbf16>
    %cst_29 = arith.constant dense<0.000000e+00> : vector<8x256xf32>
    %109 = tpu.matmul %108, %0, %cst_29 {dimension_numbers = #tpu.dot_dimension_numbers<[1], [0], [0], [1], [0, 0, 1, 1], [], []>} : vector<8x64xbf16>, vector<64x256xbf16>, vector<8x256xf32> -> vector<8x256xf32>
    %110 = arith.addf %107, %109 : vector<8x256xf32>
    %111 = vector.extract_strided_slice %110 {offsets = [0, 0], sizes = [8, 192], strides = [1, 1]} : vector<8x256xf32> to vector<8x192xf32>
    %112 = arith.negf %111 : vector<8x192xf32>
    %113 = math.exp %112 : vector<8x192xf32>
    %cst_30 = arith.constant 1.000000e+00 : f32
    %114 = vector.broadcast %cst_30 : f32 to vector<8x192xf32>
    %115 = arith.addf %114, %113 : vector<8x192xf32>
    %116 = arith.divf %114, %115 : vector<8x192xf32>
    %117 = vector.extract_strided_slice %110 {offsets = [0, 192], sizes = [8, 64], strides = [1, 1]} : vector<8x256xf32> to vector<8x64xf32>
    %118 = math.tanh %117 : vector<8x64xf32>
    %119 = vector.extract_strided_slice %116 {offsets = [0, 0], sizes = [8, 64], strides = [1, 1]} : vector<8x192xf32> to vector<8x64xf32>
    %120 = vector.extract_strided_slice %116 {offsets = [0, 64], sizes = [8, 64], strides = [1, 1]} : vector<8x192xf32> to vector<8x64xf32>
    %121 = vector.extract_strided_slice %116 {offsets = [0, 128], sizes = [8, 64], strides = [1, 1]} : vector<8x192xf32> to vector<8x64xf32>
    %122 = arith.mulf %120, %90 : vector<8x64xf32>
    %123 = arith.mulf %119, %118 : vector<8x64xf32>
    %124 = arith.addf %122, %123 : vector<8x64xf32>
    %125 = math.tanh %124 : vector<8x64xf32>
    %126 = arith.mulf %121, %125 : vector<8x64xf32>
    %127 = arith.truncf %126 : vector<8x64xf32> to vector<8x64xbf16>
    %128 = vector.extract_strided_slice %127 {offsets = [0, 0], sizes = [8, 32], strides = [1, 1]} : vector<8x64xbf16> to vector<8x32xbf16>
    %129 = arith.index_cast %c3_i32 : i32 to index
    %c0_31 = arith.constant 0 : index
    %c0_32 = arith.constant 0 : index
    %130 = vector.load %arg2[%129, %c0_31, %c0_32] : memref<8x8x64xbf16, #tpu.memory_space<vmem>>, vector<1x8x32xbf16>
    %131 = vector.shape_cast %130 : vector<1x8x32xbf16> to vector<8x32xbf16>
    %132 = vector.shape_cast %128 : vector<8x32xbf16> to vector<1x8x32xbf16>
    tpu.vector_store %arg2[%129, %c0_31, %c0_32], %132 {strides = array<i32>} : memref<8x8x64xbf16, #tpu.memory_space<vmem>>, vector<1x8x32xbf16>,
    %133 = vector.extract_strided_slice %127 {offsets = [0, 32], sizes = [8, 32], strides = [1, 1]} : vector<8x64xbf16> to vector<8x32xbf16>
    %c7_i32_33 = arith.constant 7 : i32
    %134 = arith.subi %c7_i32_33, %c3_i32 : i32
    %135 = arith.index_cast %134 : i32 to index
    %c0_34 = arith.constant 0 : index
    %c32_35 = arith.constant 32 : index
    %136 = vector.load %arg2[%135, %c0_34, %c32_35] : memref<8x8x64xbf16, #tpu.memory_space<vmem>>, vector<1x8x32xbf16>
    %137 = vector.shape_cast %136 : vector<1x8x32xbf16> to vector<8x32xbf16>
    %138 = vector.shape_cast %133 : vector<8x32xbf16> to vector<1x8x32xbf16>
    tpu.vector_store %arg2[%135, %c0_34, %c32_35], %138 {strides = array<i32>} : memref<8x8x64xbf16, #tpu.memory_space<vmem>>, vector<1x8x32xbf16>,
    %c4_i32 = arith.constant 4 : i32
    %139 = arith.index_cast %c4_i32 : i32 to index
    %c0_36 = arith.constant 0 : index
    %c0_37 = arith.constant 0 : index
    %140 = vector.load %arg0[%139, %c0_36, %c0_37] : memref<8x8x256xf32, #tpu.memory_space<vmem>>, vector<1x8x256xf32>
    %141 = vector.shape_cast %140 : vector<1x8x256xf32> to vector<8x256xf32>
    %142 = arith.truncf %126 : vector<8x64xf32> to vector<8x64xbf16>
    %cst_38 = arith.constant dense<0.000000e+00> : vector<8x256xf32>
    %143 = tpu.matmul %142, %0, %cst_38 {dimension_numbers = #tpu.dot_dimension_numbers<[1], [0], [0], [1], [0, 0, 1, 1], [], []>} : vector<8x64xbf16>, vector<64x256xbf16>, vector<8x256xf32> -> vector<8x256xf32>
    %144 = arith.addf %141, %143 : vector<8x256xf32>
    %145 = vector.extract_strided_slice %144 {offsets = [0, 0], sizes = [8, 192], strides = [1, 1]} : vector<8x256xf32> to vector<8x192xf32>
    %146 = arith.negf %145 : vector<8x192xf32>
    %147 = math.exp %146 : vector<8x192xf32>
    %cst_39 = arith.constant 1.000000e+00 : f32
    %148 = vector.broadcast %cst_39 : f32 to vector<8x192xf32>
    %149 = arith.addf %148, %147 : vector<8x192xf32>
    %150 = arith.divf %148, %149 : vector<8x192xf32>
    %151 = vector.extract_strided_slice %144 {offsets = [0, 192], sizes = [8, 64], strides = [1, 1]} : vector<8x256xf32> to vector<8x64xf32>
    %152 = math.tanh %151 : vector<8x64xf32>
    %153 = vector.extract_strided_slice %150 {offsets = [0, 0], sizes = [8, 64], strides = [1, 1]} : vector<8x192xf32> to vector<8x64xf32>
    %154 = vector.extract_strided_slice %150 {offsets = [0, 64], sizes = [8, 64], strides = [1, 1]} : vector<8x192xf32> to vector<8x64xf32>
    %155 = vector.extract_strided_slice %150 {offsets = [0, 128], sizes = [8, 64], strides = [1, 1]} : vector<8x192xf32> to vector<8x64xf32>
    %156 = arith.mulf %154, %124 : vector<8x64xf32>
    %157 = arith.mulf %153, %152 : vector<8x64xf32>
    %158 = arith.addf %156, %157 : vector<8x64xf32>
    %159 = math.tanh %158 : vector<8x64xf32>
    %160 = arith.mulf %155, %159 : vector<8x64xf32>
    %161 = arith.truncf %160 : vector<8x64xf32> to vector<8x64xbf16>
    %162 = vector.extract_strided_slice %161 {offsets = [0, 0], sizes = [8, 32], strides = [1, 1]} : vector<8x64xbf16> to vector<8x32xbf16>
    %163 = arith.index_cast %c4_i32 : i32 to index
    %c0_40 = arith.constant 0 : index
    %c0_41 = arith.constant 0 : index
    %164 = vector.load %arg2[%163, %c0_40, %c0_41] : memref<8x8x64xbf16, #tpu.memory_space<vmem>>, vector<1x8x32xbf16>
    %165 = vector.shape_cast %164 : vector<1x8x32xbf16> to vector<8x32xbf16>
    %166 = vector.shape_cast %162 : vector<8x32xbf16> to vector<1x8x32xbf16>
    tpu.vector_store %arg2[%163, %c0_40, %c0_41], %166 {strides = array<i32>} : memref<8x8x64xbf16, #tpu.memory_space<vmem>>, vector<1x8x32xbf16>,
    %167 = vector.extract_strided_slice %161 {offsets = [0, 32], sizes = [8, 32], strides = [1, 1]} : vector<8x64xbf16> to vector<8x32xbf16>
    %c7_i32_42 = arith.constant 7 : i32
    %168 = arith.subi %c7_i32_42, %c4_i32 : i32
    %169 = arith.index_cast %168 : i32 to index
    %c0_43 = arith.constant 0 : index
    %c32_44 = arith.constant 32 : index
    %170 = vector.load %arg2[%169, %c0_43, %c32_44] : memref<8x8x64xbf16, #tpu.memory_space<vmem>>, vector<1x8x32xbf16>
    %171 = vector.shape_cast %170 : vector<1x8x32xbf16> to vector<8x32xbf16>
    %172 = vector.shape_cast %167 : vector<8x32xbf16> to vector<1x8x32xbf16>
    tpu.vector_store %arg2[%169, %c0_43, %c32_44], %172 {strides = array<i32>} : memref<8x8x64xbf16, #tpu.memory_space<vmem>>, vector<1x8x32xbf16>,
    %c5_i32 = arith.constant 5 : i32
    %173 = arith.index_cast %c5_i32 : i32 to index
    %c0_45 = arith.constant 0 : index
    %c0_46 = arith.constant 0 : index
    %174 = vector.load %arg0[%173, %c0_45, %c0_46] : memref<8x8x256xf32, #tpu.memory_space<vmem>>, vector<1x8x256xf32>
    %175 = vector.shape_cast %174 : vector<1x8x256xf32> to vector<8x256xf32>
    %176 = arith.truncf %160 : vector<8x64xf32> to vector<8x64xbf16>
    %cst_47 = arith.constant dense<0.000000e+00> : vector<8x256xf32>
    %177 = tpu.matmul %176, %0, %cst_47 {dimension_numbers = #tpu.dot_dimension_numbers<[1], [0], [0], [1], [0, 0, 1, 1], [], []>} : vector<8x64xbf16>, vector<64x256xbf16>, vector<8x256xf32> -> vector<8x256xf32>
    %178 = arith.addf %175, %177 : vector<8x256xf32>
    %179 = vector.extract_strided_slice %178 {offsets = [0, 0], sizes = [8, 192], strides = [1, 1]} : vector<8x256xf32> to vector<8x192xf32>
    %180 = arith.negf %179 : vector<8x192xf32>
    %181 = math.exp %180 : vector<8x192xf32>
    %cst_48 = arith.constant 1.000000e+00 : f32
    %182 = vector.broadcast %cst_48 : f32 to vector<8x192xf32>
    %183 = arith.addf %182, %181 : vector<8x192xf32>
    %184 = arith.divf %182, %183 : vector<8x192xf32>
    %185 = vector.extract_strided_slice %178 {offsets = [0, 192], sizes = [8, 64], strides = [1, 1]} : vector<8x256xf32> to vector<8x64xf32>
    %186 = math.tanh %185 : vector<8x64xf32>
    %187 = vector.extract_strided_slice %184 {offsets = [0, 0], sizes = [8, 64], strides = [1, 1]} : vector<8x192xf32> to vector<8x64xf32>
    %188 = vector.extract_strided_slice %184 {offsets = [0, 64], sizes = [8, 64], strides = [1, 1]} : vector<8x192xf32> to vector<8x64xf32>
    %189 = vector.extract_strided_slice %184 {offsets = [0, 128], sizes = [8, 64], strides = [1, 1]} : vector<8x192xf32> to vector<8x64xf32>
    %190 = arith.mulf %188, %158 : vector<8x64xf32>
    %191 = arith.mulf %187, %186 : vector<8x64xf32>
    %192 = arith.addf %190, %191 : vector<8x64xf32>
    %193 = math.tanh %192 : vector<8x64xf32>
    %194 = arith.mulf %189, %193 : vector<8x64xf32>
    %195 = arith.truncf %194 : vector<8x64xf32> to vector<8x64xbf16>
    %196 = vector.extract_strided_slice %195 {offsets = [0, 0], sizes = [8, 32], strides = [1, 1]} : vector<8x64xbf16> to vector<8x32xbf16>
    %197 = arith.index_cast %c5_i32 : i32 to index
    %c0_49 = arith.constant 0 : index
    %c0_50 = arith.constant 0 : index
    %198 = vector.load %arg2[%197, %c0_49, %c0_50] : memref<8x8x64xbf16, #tpu.memory_space<vmem>>, vector<1x8x32xbf16>
    %199 = vector.shape_cast %198 : vector<1x8x32xbf16> to vector<8x32xbf16>
    %200 = vector.shape_cast %196 : vector<8x32xbf16> to vector<1x8x32xbf16>
    tpu.vector_store %arg2[%197, %c0_49, %c0_50], %200 {strides = array<i32>} : memref<8x8x64xbf16, #tpu.memory_space<vmem>>, vector<1x8x32xbf16>,
    %201 = vector.extract_strided_slice %195 {offsets = [0, 32], sizes = [8, 32], strides = [1, 1]} : vector<8x64xbf16> to vector<8x32xbf16>
    %c7_i32_51 = arith.constant 7 : i32
    %202 = arith.subi %c7_i32_51, %c5_i32 : i32
    %203 = arith.index_cast %202 : i32 to index
    %c0_52 = arith.constant 0 : index
    %c32_53 = arith.constant 32 : index
    %204 = vector.load %arg2[%203, %c0_52, %c32_53] : memref<8x8x64xbf16, #tpu.memory_space<vmem>>, vector<1x8x32xbf16>
    %205 = vector.shape_cast %204 : vector<1x8x32xbf16> to vector<8x32xbf16>
    %206 = vector.shape_cast %201 : vector<8x32xbf16> to vector<1x8x32xbf16>
    tpu.vector_store %arg2[%203, %c0_52, %c32_53], %206 {strides = array<i32>} : memref<8x8x64xbf16, #tpu.memory_space<vmem>>, vector<1x8x32xbf16>,
    %c6_i32 = arith.constant 6 : i32
    %207 = arith.index_cast %c6_i32 : i32 to index
    %c0_54 = arith.constant 0 : index
    %c0_55 = arith.constant 0 : index
    %208 = vector.load %arg0[%207, %c0_54, %c0_55] : memref<8x8x256xf32, #tpu.memory_space<vmem>>, vector<1x8x256xf32>
    %209 = vector.shape_cast %208 : vector<1x8x256xf32> to vector<8x256xf32>
    %210 = arith.truncf %194 : vector<8x64xf32> to vector<8x64xbf16>
    %cst_56 = arith.constant dense<0.000000e+00> : vector<8x256xf32>
    %211 = tpu.matmul %210, %0, %cst_56 {dimension_numbers = #tpu.dot_dimension_numbers<[1], [0], [0], [1], [0, 0, 1, 1], [], []>} : vector<8x64xbf16>, vector<64x256xbf16>, vector<8x256xf32> -> vector<8x256xf32>
    %212 = arith.addf %209, %211 : vector<8x256xf32>
    %213 = vector.extract_strided_slice %212 {offsets = [0, 0], sizes = [8, 192], strides = [1, 1]} : vector<8x256xf32> to vector<8x192xf32>
    %214 = arith.negf %213 : vector<8x192xf32>
    %215 = math.exp %214 : vector<8x192xf32>
    %cst_57 = arith.constant 1.000000e+00 : f32
    %216 = vector.broadcast %cst_57 : f32 to vector<8x192xf32>
    %217 = arith.addf %216, %215 : vector<8x192xf32>
    %218 = arith.divf %216, %217 : vector<8x192xf32>
    %219 = vector.extract_strided_slice %212 {offsets = [0, 192], sizes = [8, 64], strides = [1, 1]} : vector<8x256xf32> to vector<8x64xf32>
    %220 = math.tanh %219 : vector<8x64xf32>
    %221 = vector.extract_strided_slice %218 {offsets = [0, 0], sizes = [8, 64], strides = [1, 1]} : vector<8x192xf32> to vector<8x64xf32>
    %222 = vector.extract_strided_slice %218 {offsets = [0, 64], sizes = [8, 64], strides = [1, 1]} : vector<8x192xf32> to vector<8x64xf32>
    %223 = vector.extract_strided_slice %218 {offsets = [0, 128], sizes = [8, 64], strides = [1, 1]} : vector<8x192xf32> to vector<8x64xf32>
    %224 = arith.mulf %222, %192 : vector<8x64xf32>
    %225 = arith.mulf %221, %220 : vector<8x64xf32>
    %226 = arith.addf %224, %225 : vector<8x64xf32>
    %227 = math.tanh %226 : vector<8x64xf32>
    %228 = arith.mulf %223, %227 : vector<8x64xf32>
    %229 = arith.truncf %228 : vector<8x64xf32> to vector<8x64xbf16>
    %230 = vector.extract_strided_slice %229 {offsets = [0, 0], sizes = [8, 32], strides = [1, 1]} : vector<8x64xbf16> to vector<8x32xbf16>
    %231 = arith.index_cast %c6_i32 : i32 to index
    %c0_58 = arith.constant 0 : index
    %c0_59 = arith.constant 0 : index
    %232 = vector.load %arg2[%231, %c0_58, %c0_59] : memref<8x8x64xbf16, #tpu.memory_space<vmem>>, vector<1x8x32xbf16>
    %233 = vector.shape_cast %232 : vector<1x8x32xbf16> to vector<8x32xbf16>
    %234 = vector.shape_cast %230 : vector<8x32xbf16> to vector<1x8x32xbf16>
    tpu.vector_store %arg2[%231, %c0_58, %c0_59], %234 {strides = array<i32>} : memref<8x8x64xbf16, #tpu.memory_space<vmem>>, vector<1x8x32xbf16>,
    %235 = vector.extract_strided_slice %229 {offsets = [0, 32], sizes = [8, 32], strides = [1, 1]} : vector<8x64xbf16> to vector<8x32xbf16>
    %c7_i32_60 = arith.constant 7 : i32
    %236 = arith.subi %c7_i32_60, %c6_i32 : i32
    %237 = arith.index_cast %236 : i32 to index
    %c0_61 = arith.constant 0 : index
    %c32_62 = arith.constant 32 : index
    %238 = vector.load %arg2[%237, %c0_61, %c32_62] : memref<8x8x64xbf16, #tpu.memory_space<vmem>>, vector<1x8x32xbf16>
    %239 = vector.shape_cast %238 : vector<1x8x32xbf16> to vector<8x32xbf16>
    %240 = vector.shape_cast %235 : vector<8x32xbf16> to vector<1x8x32xbf16>
    tpu.vector_store %arg2[%237, %c0_61, %c32_62], %240 {strides = array<i32>} : memref<8x8x64xbf16, #tpu.memory_space<vmem>>, vector<1x8x32xbf16>,
    %c7_i32_63 = arith.constant 7 : i32
    %241 = arith.index_cast %c7_i32_63 : i32 to index
    %c0_64 = arith.constant 0 : index
    %c0_65 = arith.constant 0 : index
    %242 = vector.load %arg0[%241, %c0_64, %c0_65] : memref<8x8x256xf32, #tpu.memory_space<vmem>>, vector<1x8x256xf32>
    %243 = vector.shape_cast %242 : vector<1x8x256xf32> to vector<8x256xf32>
    %244 = arith.truncf %228 : vector<8x64xf32> to vector<8x64xbf16>
    %cst_66 = arith.constant dense<0.000000e+00> : vector<8x256xf32>
    %245 = tpu.matmul %244, %0, %cst_66 {dimension_numbers = #tpu.dot_dimension_numbers<[1], [0], [0], [1], [0, 0, 1, 1], [], []>} : vector<8x64xbf16>, vector<64x256xbf16>, vector<8x256xf32> -> vector<8x256xf32>
    %246 = arith.addf %243, %245 : vector<8x256xf32>
    %247 = vector.extract_strided_slice %246 {offsets = [0, 0], sizes = [8, 192], strides = [1, 1]} : vector<8x256xf32> to vector<8x192xf32>
    %248 = arith.negf %247 : vector<8x192xf32>
    %249 = math.exp %248 : vector<8x192xf32>
    %cst_67 = arith.constant 1.000000e+00 : f32
    %250 = vector.broadcast %cst_67 : f32 to vector<8x192xf32>
    %251 = arith.addf %250, %249 : vector<8x192xf32>
    %252 = arith.divf %250, %251 : vector<8x192xf32>
    %253 = vector.extract_strided_slice %246 {offsets = [0, 192], sizes = [8, 64], strides = [1, 1]} : vector<8x256xf32> to vector<8x64xf32>
    %254 = math.tanh %253 : vector<8x64xf32>
    %255 = vector.extract_strided_slice %252 {offsets = [0, 0], sizes = [8, 64], strides = [1, 1]} : vector<8x192xf32> to vector<8x64xf32>
    %256 = vector.extract_strided_slice %252 {offsets = [0, 64], sizes = [8, 64], strides = [1, 1]} : vector<8x192xf32> to vector<8x64xf32>
    %257 = vector.extract_strided_slice %252 {offsets = [0, 128], sizes = [8, 64], strides = [1, 1]} : vector<8x192xf32> to vector<8x64xf32>
    %258 = arith.mulf %256, %226 : vector<8x64xf32>
    %259 = arith.mulf %255, %254 : vector<8x64xf32>
    %260 = arith.addf %258, %259 : vector<8x64xf32>
    %261 = math.tanh %260 : vector<8x64xf32>
    %262 = arith.mulf %257, %261 : vector<8x64xf32>
    %263 = arith.truncf %262 : vector<8x64xf32> to vector<8x64xbf16>
    %264 = vector.extract_strided_slice %263 {offsets = [0, 0], sizes = [8, 32], strides = [1, 1]} : vector<8x64xbf16> to vector<8x32xbf16>
    %265 = arith.index_cast %c7_i32_63 : i32 to index
    %c0_68 = arith.constant 0 : index
    %c0_69 = arith.constant 0 : index
    %266 = vector.load %arg2[%265, %c0_68, %c0_69] : memref<8x8x64xbf16, #tpu.memory_space<vmem>>, vector<1x8x32xbf16>
    %267 = vector.shape_cast %266 : vector<1x8x32xbf16> to vector<8x32xbf16>
    %268 = vector.shape_cast %264 : vector<8x32xbf16> to vector<1x8x32xbf16>
    tpu.vector_store %arg2[%265, %c0_68, %c0_69], %268 {strides = array<i32>} : memref<8x8x64xbf16, #tpu.memory_space<vmem>>, vector<1x8x32xbf16>,
    %269 = vector.extract_strided_slice %263 {offsets = [0, 32], sizes = [8, 32], strides = [1, 1]} : vector<8x64xbf16> to vector<8x32xbf16>
    %c7_i32_70 = arith.constant 7 : i32
    %270 = arith.subi %c7_i32_70, %c7_i32_63 : i32
    %271 = arith.index_cast %270 : i32 to index
    %c0_71 = arith.constant 0 : index
    %c32_72 = arith.constant 32 : index
    %272 = vector.load %arg2[%271, %c0_71, %c32_72] : memref<8x8x64xbf16, #tpu.memory_space<vmem>>, vector<1x8x32xbf16>
    %273 = vector.shape_cast %272 : vector<1x8x32xbf16> to vector<8x32xbf16>
    %274 = vector.shape_cast %269 : vector<8x32xbf16> to vector<1x8x32xbf16>
    tpu.vector_store %arg2[%271, %c0_71, %c32_72], %274 {strides = array<i32>} : memref<8x8x64xbf16, #tpu.memory_space<vmem>>, vector<1x8x32xbf16>,
    %c8_i32 = arith.constant 8 : i32
    %c0_73 = arith.constant 0 : index
    %c0_74 = arith.constant 0 : index
    %275 = vector.load %arg3[%c0_73, %c0_74] : memref<8x64xf32, #tpu.memory_space<vmem>>, vector<8x64xf32>
    tpu.vector_store %arg3[%c0_73, %c0_74], %262 {strides = array<i32>} : memref<8x64xf32, #tpu.memory_space<vmem>>, vector<8x64xf32>,
    %c0_75 = arith.constant 0 : index
    %c0_76 = arith.constant 0 : index
    %276 = vector.load %arg4[%c0_75, %c0_76] : memref<8x64xf32, #tpu.memory_space<vmem>>, vector<8x64xf32>
    tpu.vector_store %arg4[%c0_75, %c0_76], %260 {strides = array<i32>} : memref<8x64xf32, #tpu.memory_space<vmem>>, vector<8x64xf32>,
    return
  }
}

module attributes {stable_mosaic.version = 11 : i64} {
  func.func @decoder_seq_kernel(%arg0: memref<7x8x256xf32, #tpu.memory_space<vmem>>, %arg1: memref<2x8x64xf32, #tpu.memory_space<vmem>>, %arg2: memref<2x8x64xf32, #tpu.memory_space<vmem>>, %arg3: memref<64x256xbf16, #tpu.memory_space<vmem>>, %arg4: memref<128x256xbf16, #tpu.memory_space<vmem>>, %arg5: memref<1x256xf32, #tpu.memory_space<vmem>>, %arg6: memref<64x128xbf16, #tpu.memory_space<vmem>>, %arg7: memref<1x128xf32, #tpu.memory_space<vmem>>, %arg8: memref<56x128xf32, #tpu.memory_space<vmem>>, %arg9: memref<56x64xbf16, #tpu.memory_space<vmem>>) attributes {dimension_semantics = [], scalar_prefetch = 0 : i64, scratch_operands = 1 : i64, tpu.core_type = #tpu.core_type<tc>} {
    %c0 = arith.constant 0 : index
    %c0_0 = arith.constant 0 : index
    %0 = vector.load %arg3[%c0, %c0_0] : memref<64x256xbf16, #tpu.memory_space<vmem>>, vector<64x256xbf16>
    %c0_1 = arith.constant 0 : index
    %c0_2 = arith.constant 0 : index
    %1 = vector.load %arg4[%c0_1, %c0_2] : memref<128x256xbf16, #tpu.memory_space<vmem>>, vector<128x256xbf16>
    %c0_3 = arith.constant 0 : index
    %c0_4 = arith.constant 0 : index
    %2 = vector.load %arg5[%c0_3, %c0_4] : memref<1x256xf32, #tpu.memory_space<vmem>>, vector<1x256xf32>
    %3 = vector.shape_cast %2 : vector<1x256xf32> to vector<1x256xf32>
    %4 = vector.broadcast %3 : vector<1x256xf32> to vector<8x256xf32>
    %c0_5 = arith.constant 0 : index
    %c0_6 = arith.constant 0 : index
    %c0_7 = arith.constant 0 : index
    %5 = vector.load %arg1[%c0_5, %c0_6, %c0_7] : memref<2x8x64xf32, #tpu.memory_space<vmem>>, vector<1x8x64xf32>
    %6 = vector.shape_cast %5 : vector<1x8x64xf32> to vector<8x64xf32>
    %c0_8 = arith.constant 0 : index
    %c0_9 = arith.constant 0 : index
    %c0_10 = arith.constant 0 : index
    %7 = vector.load %arg2[%c0_8, %c0_9, %c0_10] : memref<2x8x64xf32, #tpu.memory_space<vmem>>, vector<1x8x64xf32>
    %8 = vector.shape_cast %7 : vector<1x8x64xf32> to vector<8x64xf32>
    %c1 = arith.constant 1 : index
    %c0_11 = arith.constant 0 : index
    %c0_12 = arith.constant 0 : index
    %9 = vector.load %arg1[%c1, %c0_11, %c0_12] : memref<2x8x64xf32, #tpu.memory_space<vmem>>, vector<1x8x64xf32>
    %10 = vector.shape_cast %9 : vector<1x8x64xf32> to vector<8x64xf32>
    %c1_13 = arith.constant 1 : index
    %c0_14 = arith.constant 0 : index
    %c0_15 = arith.constant 0 : index
    %11 = vector.load %arg2[%c1_13, %c0_14, %c0_15] : memref<2x8x64xf32, #tpu.memory_space<vmem>>, vector<1x8x64xf32>
    %12 = vector.shape_cast %11 : vector<1x8x64xf32> to vector<8x64xf32>
    %c0_i32 = arith.constant 0 : i32
    %13 = arith.index_cast %c0_i32 : i32 to index
    %c0_16 = arith.constant 0 : index
    %c0_17 = arith.constant 0 : index
    %14 = vector.load %arg0[%13, %c0_16, %c0_17] : memref<7x8x256xf32, #tpu.memory_space<vmem>>, vector<1x8x256xf32>
    %15 = vector.shape_cast %14 : vector<1x8x256xf32> to vector<8x256xf32>
    %16 = arith.truncf %6 : vector<8x64xf32> to vector<8x64xbf16>
    %cst = arith.constant dense<0.000000e+00> : vector<8x256xf32>
    %17 = tpu.matmul %16, %0, %cst {dimension_numbers = #tpu.dot_dimension_numbers<[1], [0], [0], [1], [0, 0, 1, 1], [], []>} : vector<8x64xbf16>, vector<64x256xbf16>, vector<8x256xf32> -> vector<8x256xf32>
    %18 = arith.addf %15, %17 : vector<8x256xf32>
    %19 = vector.extract_strided_slice %18 {offsets = [0, 0], sizes = [8, 192], strides = [1, 1]} : vector<8x256xf32> to vector<8x192xf32>
    %20 = arith.negf %19 : vector<8x192xf32>
    %21 = math.exp %20 : vector<8x192xf32>
    %cst_18 = arith.constant 1.000000e+00 : f32
    %22 = vector.broadcast %cst_18 : f32 to vector<8x192xf32>
    %23 = arith.addf %22, %21 : vector<8x192xf32>
    %24 = arith.divf %22, %23 : vector<8x192xf32>
    %25 = vector.extract_strided_slice %18 {offsets = [0, 192], sizes = [8, 64], strides = [1, 1]} : vector<8x256xf32> to vector<8x64xf32>
    %26 = math.tanh %25 : vector<8x64xf32>
    %27 = vector.extract_strided_slice %24 {offsets = [0, 0], sizes = [8, 64], strides = [1, 1]} : vector<8x192xf32> to vector<8x64xf32>
    %28 = vector.extract_strided_slice %24 {offsets = [0, 64], sizes = [8, 64], strides = [1, 1]} : vector<8x192xf32> to vector<8x64xf32>
    %29 = vector.extract_strided_slice %24 {offsets = [0, 128], sizes = [8, 64], strides = [1, 1]} : vector<8x192xf32> to vector<8x64xf32>
    %30 = arith.mulf %28, %8 : vector<8x64xf32>
    %31 = arith.mulf %27, %26 : vector<8x64xf32>
    %32 = arith.addf %30, %31 : vector<8x64xf32>
    %33 = math.tanh %32 : vector<8x64xf32>
    %34 = arith.mulf %29, %33 : vector<8x64xf32>
    %35 = tpu.concatenate %34, %10 in 1 : vector<8x64xf32>, vector<8x64xf32> -> vector<8x128xf32>
    %36 = arith.truncf %35 : vector<8x128xf32> to vector<8x128xbf16>
    %cst_19 = arith.constant dense<0.000000e+00> : vector<8x256xf32>
    %37 = tpu.matmul %36, %1, %cst_19 {dimension_numbers = #tpu.dot_dimension_numbers<[1], [0], [0], [1], [0, 0, 1, 1], [], []>} : vector<8x128xbf16>, vector<128x256xbf16>, vector<8x256xf32> -> vector<8x256xf32>
    %38 = arith.addf %37, %4 : vector<8x256xf32>
    %39 = vector.extract_strided_slice %38 {offsets = [0, 0], sizes = [8, 192], strides = [1, 1]} : vector<8x256xf32> to vector<8x192xf32>
    %40 = arith.negf %39 : vector<8x192xf32>
    %41 = math.exp %40 : vector<8x192xf32>
    %cst_20 = arith.constant 1.000000e+00 : f32
    %42 = vector.broadcast %cst_20 : f32 to vector<8x192xf32>
    %43 = arith.addf %42, %41 : vector<8x192xf32>
    %44 = arith.divf %42, %43 : vector<8x192xf32>
    %45 = vector.extract_strided_slice %38 {offsets = [0, 192], sizes = [8, 64], strides = [1, 1]} : vector<8x256xf32> to vector<8x64xf32>
    %46 = math.tanh %45 : vector<8x64xf32>
    %47 = vector.extract_strided_slice %44 {offsets = [0, 0], sizes = [8, 64], strides = [1, 1]} : vector<8x192xf32> to vector<8x64xf32>
    %48 = vector.extract_strided_slice %44 {offsets = [0, 64], sizes = [8, 64], strides = [1, 1]} : vector<8x192xf32> to vector<8x64xf32>
    %49 = vector.extract_strided_slice %44 {offsets = [0, 128], sizes = [8, 64], strides = [1, 1]} : vector<8x192xf32> to vector<8x64xf32>
    %50 = arith.mulf %48, %12 : vector<8x64xf32>
    %51 = arith.mulf %47, %46 : vector<8x64xf32>
    %52 = arith.addf %50, %51 : vector<8x64xf32>
    %53 = math.tanh %52 : vector<8x64xf32>
    %54 = arith.mulf %49, %53 : vector<8x64xf32>
    %c8_i32 = arith.constant 8 : i32
    %55 = arith.muli %c0_i32, %c8_i32 : i32
    %56 = tpu.assume_multiple %55, 8 : i32
    %57 = arith.truncf %54 : vector<8x64xf32> to vector<8x64xbf16>
    %58 = arith.index_cast %56 : i32 to index
    %c0_21 = arith.constant 0 : index
    %59 = vector.load %arg9[%58, %c0_21] : memref<56x64xbf16, #tpu.memory_space<vmem>>, vector<8x64xbf16>
    tpu.vector_store %arg9[%58, %c0_21], %57 {strides = array<i32>} : memref<56x64xbf16, #tpu.memory_space<vmem>>, vector<8x64xbf16>,
    %c1_i32 = arith.constant 1 : i32
    %60 = arith.index_cast %c1_i32 : i32 to index
    %c0_22 = arith.constant 0 : index
    %c0_23 = arith.constant 0 : index
    %61 = vector.load %arg0[%60, %c0_22, %c0_23] : memref<7x8x256xf32, #tpu.memory_space<vmem>>, vector<1x8x256xf32>
    %62 = vector.shape_cast %61 : vector<1x8x256xf32> to vector<8x256xf32>
    %63 = arith.truncf %34 : vector<8x64xf32> to vector<8x64xbf16>
    %cst_24 = arith.constant dense<0.000000e+00> : vector<8x256xf32>
    %64 = tpu.matmul %63, %0, %cst_24 {dimension_numbers = #tpu.dot_dimension_numbers<[1], [0], [0], [1], [0, 0, 1, 1], [], []>} : vector<8x64xbf16>, vector<64x256xbf16>, vector<8x256xf32> -> vector<8x256xf32>
    %65 = arith.addf %62, %64 : vector<8x256xf32>
    %66 = vector.extract_strided_slice %65 {offsets = [0, 0], sizes = [8, 192], strides = [1, 1]} : vector<8x256xf32> to vector<8x192xf32>
    %67 = arith.negf %66 : vector<8x192xf32>
    %68 = math.exp %67 : vector<8x192xf32>
    %cst_25 = arith.constant 1.000000e+00 : f32
    %69 = vector.broadcast %cst_25 : f32 to vector<8x192xf32>
    %70 = arith.addf %69, %68 : vector<8x192xf32>
    %71 = arith.divf %69, %70 : vector<8x192xf32>
    %72 = vector.extract_strided_slice %65 {offsets = [0, 192], sizes = [8, 64], strides = [1, 1]} : vector<8x256xf32> to vector<8x64xf32>
    %73 = math.tanh %72 : vector<8x64xf32>
    %74 = vector.extract_strided_slice %71 {offsets = [0, 0], sizes = [8, 64], strides = [1, 1]} : vector<8x192xf32> to vector<8x64xf32>
    %75 = vector.extract_strided_slice %71 {offsets = [0, 64], sizes = [8, 64], strides = [1, 1]} : vector<8x192xf32> to vector<8x64xf32>
    %76 = vector.extract_strided_slice %71 {offsets = [0, 128], sizes = [8, 64], strides = [1, 1]} : vector<8x192xf32> to vector<8x64xf32>
    %77 = arith.mulf %75, %32 : vector<8x64xf32>
    %78 = arith.mulf %74, %73 : vector<8x64xf32>
    %79 = arith.addf %77, %78 : vector<8x64xf32>
    %80 = math.tanh %79 : vector<8x64xf32>
    %81 = arith.mulf %76, %80 : vector<8x64xf32>
    %82 = tpu.concatenate %81, %54 in 1 : vector<8x64xf32>, vector<8x64xf32> -> vector<8x128xf32>
    %83 = arith.truncf %82 : vector<8x128xf32> to vector<8x128xbf16>
    %cst_26 = arith.constant dense<0.000000e+00> : vector<8x256xf32>
    %84 = tpu.matmul %83, %1, %cst_26 {dimension_numbers = #tpu.dot_dimension_numbers<[1], [0], [0], [1], [0, 0, 1, 1], [], []>} : vector<8x128xbf16>, vector<128x256xbf16>, vector<8x256xf32> -> vector<8x256xf32>
    %85 = arith.addf %84, %4 : vector<8x256xf32>
    %86 = vector.extract_strided_slice %85 {offsets = [0, 0], sizes = [8, 192], strides = [1, 1]} : vector<8x256xf32> to vector<8x192xf32>
    %87 = arith.negf %86 : vector<8x192xf32>
    %88 = math.exp %87 : vector<8x192xf32>
    %cst_27 = arith.constant 1.000000e+00 : f32
    %89 = vector.broadcast %cst_27 : f32 to vector<8x192xf32>
    %90 = arith.addf %89, %88 : vector<8x192xf32>
    %91 = arith.divf %89, %90 : vector<8x192xf32>
    %92 = vector.extract_strided_slice %85 {offsets = [0, 192], sizes = [8, 64], strides = [1, 1]} : vector<8x256xf32> to vector<8x64xf32>
    %93 = math.tanh %92 : vector<8x64xf32>
    %94 = vector.extract_strided_slice %91 {offsets = [0, 0], sizes = [8, 64], strides = [1, 1]} : vector<8x192xf32> to vector<8x64xf32>
    %95 = vector.extract_strided_slice %91 {offsets = [0, 64], sizes = [8, 64], strides = [1, 1]} : vector<8x192xf32> to vector<8x64xf32>
    %96 = vector.extract_strided_slice %91 {offsets = [0, 128], sizes = [8, 64], strides = [1, 1]} : vector<8x192xf32> to vector<8x64xf32>
    %97 = arith.mulf %95, %52 : vector<8x64xf32>
    %98 = arith.mulf %94, %93 : vector<8x64xf32>
    %99 = arith.addf %97, %98 : vector<8x64xf32>
    %100 = math.tanh %99 : vector<8x64xf32>
    %101 = arith.mulf %96, %100 : vector<8x64xf32>
    %c8_i32_28 = arith.constant 8 : i32
    %102 = arith.muli %c1_i32, %c8_i32_28 : i32
    %103 = tpu.assume_multiple %102, 8 : i32
    %104 = arith.truncf %101 : vector<8x64xf32> to vector<8x64xbf16>
    %105 = arith.index_cast %103 : i32 to index
    %c0_29 = arith.constant 0 : index
    %106 = vector.load %arg9[%105, %c0_29] : memref<56x64xbf16, #tpu.memory_space<vmem>>, vector<8x64xbf16>
    tpu.vector_store %arg9[%105, %c0_29], %104 {strides = array<i32>} : memref<56x64xbf16, #tpu.memory_space<vmem>>, vector<8x64xbf16>,
    %c2_i32 = arith.constant 2 : i32
    %107 = arith.index_cast %c2_i32 : i32 to index
    %c0_30 = arith.constant 0 : index
    %c0_31 = arith.constant 0 : index
    %108 = vector.load %arg0[%107, %c0_30, %c0_31] : memref<7x8x256xf32, #tpu.memory_space<vmem>>, vector<1x8x256xf32>
    %109 = vector.shape_cast %108 : vector<1x8x256xf32> to vector<8x256xf32>
    %110 = arith.truncf %81 : vector<8x64xf32> to vector<8x64xbf16>
    %cst_32 = arith.constant dense<0.000000e+00> : vector<8x256xf32>
    %111 = tpu.matmul %110, %0, %cst_32 {dimension_numbers = #tpu.dot_dimension_numbers<[1], [0], [0], [1], [0, 0, 1, 1], [], []>} : vector<8x64xbf16>, vector<64x256xbf16>, vector<8x256xf32> -> vector<8x256xf32>
    %112 = arith.addf %109, %111 : vector<8x256xf32>
    %113 = vector.extract_strided_slice %112 {offsets = [0, 0], sizes = [8, 192], strides = [1, 1]} : vector<8x256xf32> to vector<8x192xf32>
    %114 = arith.negf %113 : vector<8x192xf32>
    %115 = math.exp %114 : vector<8x192xf32>
    %cst_33 = arith.constant 1.000000e+00 : f32
    %116 = vector.broadcast %cst_33 : f32 to vector<8x192xf32>
    %117 = arith.addf %116, %115 : vector<8x192xf32>
    %118 = arith.divf %116, %117 : vector<8x192xf32>
    %119 = vector.extract_strided_slice %112 {offsets = [0, 192], sizes = [8, 64], strides = [1, 1]} : vector<8x256xf32> to vector<8x64xf32>
    %120 = math.tanh %119 : vector<8x64xf32>
    %121 = vector.extract_strided_slice %118 {offsets = [0, 0], sizes = [8, 64], strides = [1, 1]} : vector<8x192xf32> to vector<8x64xf32>
    %122 = vector.extract_strided_slice %118 {offsets = [0, 64], sizes = [8, 64], strides = [1, 1]} : vector<8x192xf32> to vector<8x64xf32>
    %123 = vector.extract_strided_slice %118 {offsets = [0, 128], sizes = [8, 64], strides = [1, 1]} : vector<8x192xf32> to vector<8x64xf32>
    %124 = arith.mulf %122, %79 : vector<8x64xf32>
    %125 = arith.mulf %121, %120 : vector<8x64xf32>
    %126 = arith.addf %124, %125 : vector<8x64xf32>
    %127 = math.tanh %126 : vector<8x64xf32>
    %128 = arith.mulf %123, %127 : vector<8x64xf32>
    %129 = tpu.concatenate %128, %101 in 1 : vector<8x64xf32>, vector<8x64xf32> -> vector<8x128xf32>
    %130 = arith.truncf %129 : vector<8x128xf32> to vector<8x128xbf16>
    %cst_34 = arith.constant dense<0.000000e+00> : vector<8x256xf32>
    %131 = tpu.matmul %130, %1, %cst_34 {dimension_numbers = #tpu.dot_dimension_numbers<[1], [0], [0], [1], [0, 0, 1, 1], [], []>} : vector<8x128xbf16>, vector<128x256xbf16>, vector<8x256xf32> -> vector<8x256xf32>
    %132 = arith.addf %131, %4 : vector<8x256xf32>
    %133 = vector.extract_strided_slice %132 {offsets = [0, 0], sizes = [8, 192], strides = [1, 1]} : vector<8x256xf32> to vector<8x192xf32>
    %134 = arith.negf %133 : vector<8x192xf32>
    %135 = math.exp %134 : vector<8x192xf32>
    %cst_35 = arith.constant 1.000000e+00 : f32
    %136 = vector.broadcast %cst_35 : f32 to vector<8x192xf32>
    %137 = arith.addf %136, %135 : vector<8x192xf32>
    %138 = arith.divf %136, %137 : vector<8x192xf32>
    %139 = vector.extract_strided_slice %132 {offsets = [0, 192], sizes = [8, 64], strides = [1, 1]} : vector<8x256xf32> to vector<8x64xf32>
    %140 = math.tanh %139 : vector<8x64xf32>
    %141 = vector.extract_strided_slice %138 {offsets = [0, 0], sizes = [8, 64], strides = [1, 1]} : vector<8x192xf32> to vector<8x64xf32>
    %142 = vector.extract_strided_slice %138 {offsets = [0, 64], sizes = [8, 64], strides = [1, 1]} : vector<8x192xf32> to vector<8x64xf32>
    %143 = vector.extract_strided_slice %138 {offsets = [0, 128], sizes = [8, 64], strides = [1, 1]} : vector<8x192xf32> to vector<8x64xf32>
    %144 = arith.mulf %142, %99 : vector<8x64xf32>
    %145 = arith.mulf %141, %140 : vector<8x64xf32>
    %146 = arith.addf %144, %145 : vector<8x64xf32>
    %147 = math.tanh %146 : vector<8x64xf32>
    %148 = arith.mulf %143, %147 : vector<8x64xf32>
    %c8_i32_36 = arith.constant 8 : i32
    %149 = arith.muli %c2_i32, %c8_i32_36 : i32
    %150 = tpu.assume_multiple %149, 8 : i32
    %151 = arith.truncf %148 : vector<8x64xf32> to vector<8x64xbf16>
    %152 = arith.index_cast %150 : i32 to index
    %c0_37 = arith.constant 0 : index
    %153 = vector.load %arg9[%152, %c0_37] : memref<56x64xbf16, #tpu.memory_space<vmem>>, vector<8x64xbf16>
    tpu.vector_store %arg9[%152, %c0_37], %151 {strides = array<i32>} : memref<56x64xbf16, #tpu.memory_space<vmem>>, vector<8x64xbf16>,
    %c3_i32 = arith.constant 3 : i32
    %154 = arith.index_cast %c3_i32 : i32 to index
    %c0_38 = arith.constant 0 : index
    %c0_39 = arith.constant 0 : index
    %155 = vector.load %arg0[%154, %c0_38, %c0_39] : memref<7x8x256xf32, #tpu.memory_space<vmem>>, vector<1x8x256xf32>
    %156 = vector.shape_cast %155 : vector<1x8x256xf32> to vector<8x256xf32>
    %157 = arith.truncf %128 : vector<8x64xf32> to vector<8x64xbf16>
    %cst_40 = arith.constant dense<0.000000e+00> : vector<8x256xf32>
    %158 = tpu.matmul %157, %0, %cst_40 {dimension_numbers = #tpu.dot_dimension_numbers<[1], [0], [0], [1], [0, 0, 1, 1], [], []>} : vector<8x64xbf16>, vector<64x256xbf16>, vector<8x256xf32> -> vector<8x256xf32>
    %159 = arith.addf %156, %158 : vector<8x256xf32>
    %160 = vector.extract_strided_slice %159 {offsets = [0, 0], sizes = [8, 192], strides = [1, 1]} : vector<8x256xf32> to vector<8x192xf32>
    %161 = arith.negf %160 : vector<8x192xf32>
    %162 = math.exp %161 : vector<8x192xf32>
    %cst_41 = arith.constant 1.000000e+00 : f32
    %163 = vector.broadcast %cst_41 : f32 to vector<8x192xf32>
    %164 = arith.addf %163, %162 : vector<8x192xf32>
    %165 = arith.divf %163, %164 : vector<8x192xf32>
    %166 = vector.extract_strided_slice %159 {offsets = [0, 192], sizes = [8, 64], strides = [1, 1]} : vector<8x256xf32> to vector<8x64xf32>
    %167 = math.tanh %166 : vector<8x64xf32>
    %168 = vector.extract_strided_slice %165 {offsets = [0, 0], sizes = [8, 64], strides = [1, 1]} : vector<8x192xf32> to vector<8x64xf32>
    %169 = vector.extract_strided_slice %165 {offsets = [0, 64], sizes = [8, 64], strides = [1, 1]} : vector<8x192xf32> to vector<8x64xf32>
    %170 = vector.extract_strided_slice %165 {offsets = [0, 128], sizes = [8, 64], strides = [1, 1]} : vector<8x192xf32> to vector<8x64xf32>
    %171 = arith.mulf %169, %126 : vector<8x64xf32>
    %172 = arith.mulf %168, %167 : vector<8x64xf32>
    %173 = arith.addf %171, %172 : vector<8x64xf32>
    %174 = math.tanh %173 : vector<8x64xf32>
    %175 = arith.mulf %170, %174 : vector<8x64xf32>
    %176 = tpu.concatenate %175, %148 in 1 : vector<8x64xf32>, vector<8x64xf32> -> vector<8x128xf32>
    %177 = arith.truncf %176 : vector<8x128xf32> to vector<8x128xbf16>
    %cst_42 = arith.constant dense<0.000000e+00> : vector<8x256xf32>
    %178 = tpu.matmul %177, %1, %cst_42 {dimension_numbers = #tpu.dot_dimension_numbers<[1], [0], [0], [1], [0, 0, 1, 1], [], []>} : vector<8x128xbf16>, vector<128x256xbf16>, vector<8x256xf32> -> vector<8x256xf32>
    %179 = arith.addf %178, %4 : vector<8x256xf32>
    %180 = vector.extract_strided_slice %179 {offsets = [0, 0], sizes = [8, 192], strides = [1, 1]} : vector<8x256xf32> to vector<8x192xf32>
    %181 = arith.negf %180 : vector<8x192xf32>
    %182 = math.exp %181 : vector<8x192xf32>
    %cst_43 = arith.constant 1.000000e+00 : f32
    %183 = vector.broadcast %cst_43 : f32 to vector<8x192xf32>
    %184 = arith.addf %183, %182 : vector<8x192xf32>
    %185 = arith.divf %183, %184 : vector<8x192xf32>
    %186 = vector.extract_strided_slice %179 {offsets = [0, 192], sizes = [8, 64], strides = [1, 1]} : vector<8x256xf32> to vector<8x64xf32>
    %187 = math.tanh %186 : vector<8x64xf32>
    %188 = vector.extract_strided_slice %185 {offsets = [0, 0], sizes = [8, 64], strides = [1, 1]} : vector<8x192xf32> to vector<8x64xf32>
    %189 = vector.extract_strided_slice %185 {offsets = [0, 64], sizes = [8, 64], strides = [1, 1]} : vector<8x192xf32> to vector<8x64xf32>
    %190 = vector.extract_strided_slice %185 {offsets = [0, 128], sizes = [8, 64], strides = [1, 1]} : vector<8x192xf32> to vector<8x64xf32>
    %191 = arith.mulf %189, %146 : vector<8x64xf32>
    %192 = arith.mulf %188, %187 : vector<8x64xf32>
    %193 = arith.addf %191, %192 : vector<8x64xf32>
    %194 = math.tanh %193 : vector<8x64xf32>
    %195 = arith.mulf %190, %194 : vector<8x64xf32>
    %c8_i32_44 = arith.constant 8 : i32
    %196 = arith.muli %c3_i32, %c8_i32_44 : i32
    %197 = tpu.assume_multiple %196, 8 : i32
    %198 = arith.truncf %195 : vector<8x64xf32> to vector<8x64xbf16>
    %199 = arith.index_cast %197 : i32 to index
    %c0_45 = arith.constant 0 : index
    %200 = vector.load %arg9[%199, %c0_45] : memref<56x64xbf16, #tpu.memory_space<vmem>>, vector<8x64xbf16>
    tpu.vector_store %arg9[%199, %c0_45], %198 {strides = array<i32>} : memref<56x64xbf16, #tpu.memory_space<vmem>>, vector<8x64xbf16>,
    %c4_i32 = arith.constant 4 : i32
    %201 = arith.index_cast %c4_i32 : i32 to index
    %c0_46 = arith.constant 0 : index
    %c0_47 = arith.constant 0 : index
    %202 = vector.load %arg0[%201, %c0_46, %c0_47] : memref<7x8x256xf32, #tpu.memory_space<vmem>>, vector<1x8x256xf32>
    %203 = vector.shape_cast %202 : vector<1x8x256xf32> to vector<8x256xf32>
    %204 = arith.truncf %175 : vector<8x64xf32> to vector<8x64xbf16>
    %cst_48 = arith.constant dense<0.000000e+00> : vector<8x256xf32>
    %205 = tpu.matmul %204, %0, %cst_48 {dimension_numbers = #tpu.dot_dimension_numbers<[1], [0], [0], [1], [0, 0, 1, 1], [], []>} : vector<8x64xbf16>, vector<64x256xbf16>, vector<8x256xf32> -> vector<8x256xf32>
    %206 = arith.addf %203, %205 : vector<8x256xf32>
    %207 = vector.extract_strided_slice %206 {offsets = [0, 0], sizes = [8, 192], strides = [1, 1]} : vector<8x256xf32> to vector<8x192xf32>
    %208 = arith.negf %207 : vector<8x192xf32>
    %209 = math.exp %208 : vector<8x192xf32>
    %cst_49 = arith.constant 1.000000e+00 : f32
    %210 = vector.broadcast %cst_49 : f32 to vector<8x192xf32>
    %211 = arith.addf %210, %209 : vector<8x192xf32>
    %212 = arith.divf %210, %211 : vector<8x192xf32>
    %213 = vector.extract_strided_slice %206 {offsets = [0, 192], sizes = [8, 64], strides = [1, 1]} : vector<8x256xf32> to vector<8x64xf32>
    %214 = math.tanh %213 : vector<8x64xf32>
    %215 = vector.extract_strided_slice %212 {offsets = [0, 0], sizes = [8, 64], strides = [1, 1]} : vector<8x192xf32> to vector<8x64xf32>
    %216 = vector.extract_strided_slice %212 {offsets = [0, 64], sizes = [8, 64], strides = [1, 1]} : vector<8x192xf32> to vector<8x64xf32>
    %217 = vector.extract_strided_slice %212 {offsets = [0, 128], sizes = [8, 64], strides = [1, 1]} : vector<8x192xf32> to vector<8x64xf32>
    %218 = arith.mulf %216, %173 : vector<8x64xf32>
    %219 = arith.mulf %215, %214 : vector<8x64xf32>
    %220 = arith.addf %218, %219 : vector<8x64xf32>
    %221 = math.tanh %220 : vector<8x64xf32>
    %222 = arith.mulf %217, %221 : vector<8x64xf32>
    %223 = tpu.concatenate %222, %195 in 1 : vector<8x64xf32>, vector<8x64xf32> -> vector<8x128xf32>
    %224 = arith.truncf %223 : vector<8x128xf32> to vector<8x128xbf16>
    %cst_50 = arith.constant dense<0.000000e+00> : vector<8x256xf32>
    %225 = tpu.matmul %224, %1, %cst_50 {dimension_numbers = #tpu.dot_dimension_numbers<[1], [0], [0], [1], [0, 0, 1, 1], [], []>} : vector<8x128xbf16>, vector<128x256xbf16>, vector<8x256xf32> -> vector<8x256xf32>
    %226 = arith.addf %225, %4 : vector<8x256xf32>
    %227 = vector.extract_strided_slice %226 {offsets = [0, 0], sizes = [8, 192], strides = [1, 1]} : vector<8x256xf32> to vector<8x192xf32>
    %228 = arith.negf %227 : vector<8x192xf32>
    %229 = math.exp %228 : vector<8x192xf32>
    %cst_51 = arith.constant 1.000000e+00 : f32
    %230 = vector.broadcast %cst_51 : f32 to vector<8x192xf32>
    %231 = arith.addf %230, %229 : vector<8x192xf32>
    %232 = arith.divf %230, %231 : vector<8x192xf32>
    %233 = vector.extract_strided_slice %226 {offsets = [0, 192], sizes = [8, 64], strides = [1, 1]} : vector<8x256xf32> to vector<8x64xf32>
    %234 = math.tanh %233 : vector<8x64xf32>
    %235 = vector.extract_strided_slice %232 {offsets = [0, 0], sizes = [8, 64], strides = [1, 1]} : vector<8x192xf32> to vector<8x64xf32>
    %236 = vector.extract_strided_slice %232 {offsets = [0, 64], sizes = [8, 64], strides = [1, 1]} : vector<8x192xf32> to vector<8x64xf32>
    %237 = vector.extract_strided_slice %232 {offsets = [0, 128], sizes = [8, 64], strides = [1, 1]} : vector<8x192xf32> to vector<8x64xf32>
    %238 = arith.mulf %236, %193 : vector<8x64xf32>
    %239 = arith.mulf %235, %234 : vector<8x64xf32>
    %240 = arith.addf %238, %239 : vector<8x64xf32>
    %241 = math.tanh %240 : vector<8x64xf32>
    %242 = arith.mulf %237, %241 : vector<8x64xf32>
    %c8_i32_52 = arith.constant 8 : i32
    %243 = arith.muli %c4_i32, %c8_i32_52 : i32
    %244 = tpu.assume_multiple %243, 8 : i32
    %245 = arith.truncf %242 : vector<8x64xf32> to vector<8x64xbf16>
    %246 = arith.index_cast %244 : i32 to index
    %c0_53 = arith.constant 0 : index
    %247 = vector.load %arg9[%246, %c0_53] : memref<56x64xbf16, #tpu.memory_space<vmem>>, vector<8x64xbf16>
    tpu.vector_store %arg9[%246, %c0_53], %245 {strides = array<i32>} : memref<56x64xbf16, #tpu.memory_space<vmem>>, vector<8x64xbf16>,
    %c5_i32 = arith.constant 5 : i32
    %248 = arith.index_cast %c5_i32 : i32 to index
    %c0_54 = arith.constant 0 : index
    %c0_55 = arith.constant 0 : index
    %249 = vector.load %arg0[%248, %c0_54, %c0_55] : memref<7x8x256xf32, #tpu.memory_space<vmem>>, vector<1x8x256xf32>
    %250 = vector.shape_cast %249 : vector<1x8x256xf32> to vector<8x256xf32>
    %251 = arith.truncf %222 : vector<8x64xf32> to vector<8x64xbf16>
    %cst_56 = arith.constant dense<0.000000e+00> : vector<8x256xf32>
    %252 = tpu.matmul %251, %0, %cst_56 {dimension_numbers = #tpu.dot_dimension_numbers<[1], [0], [0], [1], [0, 0, 1, 1], [], []>} : vector<8x64xbf16>, vector<64x256xbf16>, vector<8x256xf32> -> vector<8x256xf32>
    %253 = arith.addf %250, %252 : vector<8x256xf32>
    %254 = vector.extract_strided_slice %253 {offsets = [0, 0], sizes = [8, 192], strides = [1, 1]} : vector<8x256xf32> to vector<8x192xf32>
    %255 = arith.negf %254 : vector<8x192xf32>
    %256 = math.exp %255 : vector<8x192xf32>
    %cst_57 = arith.constant 1.000000e+00 : f32
    %257 = vector.broadcast %cst_57 : f32 to vector<8x192xf32>
    %258 = arith.addf %257, %256 : vector<8x192xf32>
    %259 = arith.divf %257, %258 : vector<8x192xf32>
    %260 = vector.extract_strided_slice %253 {offsets = [0, 192], sizes = [8, 64], strides = [1, 1]} : vector<8x256xf32> to vector<8x64xf32>
    %261 = math.tanh %260 : vector<8x64xf32>
    %262 = vector.extract_strided_slice %259 {offsets = [0, 0], sizes = [8, 64], strides = [1, 1]} : vector<8x192xf32> to vector<8x64xf32>
    %263 = vector.extract_strided_slice %259 {offsets = [0, 64], sizes = [8, 64], strides = [1, 1]} : vector<8x192xf32> to vector<8x64xf32>
    %264 = vector.extract_strided_slice %259 {offsets = [0, 128], sizes = [8, 64], strides = [1, 1]} : vector<8x192xf32> to vector<8x64xf32>
    %265 = arith.mulf %263, %220 : vector<8x64xf32>
    %266 = arith.mulf %262, %261 : vector<8x64xf32>
    %267 = arith.addf %265, %266 : vector<8x64xf32>
    %268 = math.tanh %267 : vector<8x64xf32>
    %269 = arith.mulf %264, %268 : vector<8x64xf32>
    %270 = tpu.concatenate %269, %242 in 1 : vector<8x64xf32>, vector<8x64xf32> -> vector<8x128xf32>
    %271 = arith.truncf %270 : vector<8x128xf32> to vector<8x128xbf16>
    %cst_58 = arith.constant dense<0.000000e+00> : vector<8x256xf32>
    %272 = tpu.matmul %271, %1, %cst_58 {dimension_numbers = #tpu.dot_dimension_numbers<[1], [0], [0], [1], [0, 0, 1, 1], [], []>} : vector<8x128xbf16>, vector<128x256xbf16>, vector<8x256xf32> -> vector<8x256xf32>
    %273 = arith.addf %272, %4 : vector<8x256xf32>
    %274 = vector.extract_strided_slice %273 {offsets = [0, 0], sizes = [8, 192], strides = [1, 1]} : vector<8x256xf32> to vector<8x192xf32>
    %275 = arith.negf %274 : vector<8x192xf32>
    %276 = math.exp %275 : vector<8x192xf32>
    %cst_59 = arith.constant 1.000000e+00 : f32
    %277 = vector.broadcast %cst_59 : f32 to vector<8x192xf32>
    %278 = arith.addf %277, %276 : vector<8x192xf32>
    %279 = arith.divf %277, %278 : vector<8x192xf32>
    %280 = vector.extract_strided_slice %273 {offsets = [0, 192], sizes = [8, 64], strides = [1, 1]} : vector<8x256xf32> to vector<8x64xf32>
    %281 = math.tanh %280 : vector<8x64xf32>
    %282 = vector.extract_strided_slice %279 {offsets = [0, 0], sizes = [8, 64], strides = [1, 1]} : vector<8x192xf32> to vector<8x64xf32>
    %283 = vector.extract_strided_slice %279 {offsets = [0, 64], sizes = [8, 64], strides = [1, 1]} : vector<8x192xf32> to vector<8x64xf32>
    %284 = vector.extract_strided_slice %279 {offsets = [0, 128], sizes = [8, 64], strides = [1, 1]} : vector<8x192xf32> to vector<8x64xf32>
    %285 = arith.mulf %283, %240 : vector<8x64xf32>
    %286 = arith.mulf %282, %281 : vector<8x64xf32>
    %287 = arith.addf %285, %286 : vector<8x64xf32>
    %288 = math.tanh %287 : vector<8x64xf32>
    %289 = arith.mulf %284, %288 : vector<8x64xf32>
    %c8_i32_60 = arith.constant 8 : i32
    %290 = arith.muli %c5_i32, %c8_i32_60 : i32
    %291 = tpu.assume_multiple %290, 8 : i32
    %292 = arith.truncf %289 : vector<8x64xf32> to vector<8x64xbf16>
    %293 = arith.index_cast %291 : i32 to index
    %c0_61 = arith.constant 0 : index
    %294 = vector.load %arg9[%293, %c0_61] : memref<56x64xbf16, #tpu.memory_space<vmem>>, vector<8x64xbf16>
    tpu.vector_store %arg9[%293, %c0_61], %292 {strides = array<i32>} : memref<56x64xbf16, #tpu.memory_space<vmem>>, vector<8x64xbf16>,
    %c6_i32 = arith.constant 6 : i32
    %295 = arith.index_cast %c6_i32 : i32 to index
    %c0_62 = arith.constant 0 : index
    %c0_63 = arith.constant 0 : index
    %296 = vector.load %arg0[%295, %c0_62, %c0_63] : memref<7x8x256xf32, #tpu.memory_space<vmem>>, vector<1x8x256xf32>
    %297 = vector.shape_cast %296 : vector<1x8x256xf32> to vector<8x256xf32>
    %298 = arith.truncf %269 : vector<8x64xf32> to vector<8x64xbf16>
    %cst_64 = arith.constant dense<0.000000e+00> : vector<8x256xf32>
    %299 = tpu.matmul %298, %0, %cst_64 {dimension_numbers = #tpu.dot_dimension_numbers<[1], [0], [0], [1], [0, 0, 1, 1], [], []>} : vector<8x64xbf16>, vector<64x256xbf16>, vector<8x256xf32> -> vector<8x256xf32>
    %300 = arith.addf %297, %299 : vector<8x256xf32>
    %301 = vector.extract_strided_slice %300 {offsets = [0, 0], sizes = [8, 192], strides = [1, 1]} : vector<8x256xf32> to vector<8x192xf32>
    %302 = arith.negf %301 : vector<8x192xf32>
    %303 = math.exp %302 : vector<8x192xf32>
    %cst_65 = arith.constant 1.000000e+00 : f32
    %304 = vector.broadcast %cst_65 : f32 to vector<8x192xf32>
    %305 = arith.addf %304, %303 : vector<8x192xf32>
    %306 = arith.divf %304, %305 : vector<8x192xf32>
    %307 = vector.extract_strided_slice %300 {offsets = [0, 192], sizes = [8, 64], strides = [1, 1]} : vector<8x256xf32> to vector<8x64xf32>
    %308 = math.tanh %307 : vector<8x64xf32>
    %309 = vector.extract_strided_slice %306 {offsets = [0, 0], sizes = [8, 64], strides = [1, 1]} : vector<8x192xf32> to vector<8x64xf32>
    %310 = vector.extract_strided_slice %306 {offsets = [0, 64], sizes = [8, 64], strides = [1, 1]} : vector<8x192xf32> to vector<8x64xf32>
    %311 = vector.extract_strided_slice %306 {offsets = [0, 128], sizes = [8, 64], strides = [1, 1]} : vector<8x192xf32> to vector<8x64xf32>
    %312 = arith.mulf %310, %267 : vector<8x64xf32>
    %313 = arith.mulf %309, %308 : vector<8x64xf32>
    %314 = arith.addf %312, %313 : vector<8x64xf32>
    %315 = math.tanh %314 : vector<8x64xf32>
    %316 = arith.mulf %311, %315 : vector<8x64xf32>
    %317 = tpu.concatenate %316, %289 in 1 : vector<8x64xf32>, vector<8x64xf32> -> vector<8x128xf32>
    %318 = arith.truncf %317 : vector<8x128xf32> to vector<8x128xbf16>
    %cst_66 = arith.constant dense<0.000000e+00> : vector<8x256xf32>
    %319 = tpu.matmul %318, %1, %cst_66 {dimension_numbers = #tpu.dot_dimension_numbers<[1], [0], [0], [1], [0, 0, 1, 1], [], []>} : vector<8x128xbf16>, vector<128x256xbf16>, vector<8x256xf32> -> vector<8x256xf32>
    %320 = arith.addf %319, %4 : vector<8x256xf32>
    %321 = vector.extract_strided_slice %320 {offsets = [0, 0], sizes = [8, 192], strides = [1, 1]} : vector<8x256xf32> to vector<8x192xf32>
    %322 = arith.negf %321 : vector<8x192xf32>
    %323 = math.exp %322 : vector<8x192xf32>
    %cst_67 = arith.constant 1.000000e+00 : f32
    %324 = vector.broadcast %cst_67 : f32 to vector<8x192xf32>
    %325 = arith.addf %324, %323 : vector<8x192xf32>
    %326 = arith.divf %324, %325 : vector<8x192xf32>
    %327 = vector.extract_strided_slice %320 {offsets = [0, 192], sizes = [8, 64], strides = [1, 1]} : vector<8x256xf32> to vector<8x64xf32>
    %328 = math.tanh %327 : vector<8x64xf32>
    %329 = vector.extract_strided_slice %326 {offsets = [0, 0], sizes = [8, 64], strides = [1, 1]} : vector<8x192xf32> to vector<8x64xf32>
    %330 = vector.extract_strided_slice %326 {offsets = [0, 64], sizes = [8, 64], strides = [1, 1]} : vector<8x192xf32> to vector<8x64xf32>
    %331 = vector.extract_strided_slice %326 {offsets = [0, 128], sizes = [8, 64], strides = [1, 1]} : vector<8x192xf32> to vector<8x64xf32>
    %332 = arith.mulf %330, %287 : vector<8x64xf32>
    %333 = arith.mulf %329, %328 : vector<8x64xf32>
    %334 = arith.addf %332, %333 : vector<8x64xf32>
    %335 = math.tanh %334 : vector<8x64xf32>
    %336 = arith.mulf %331, %335 : vector<8x64xf32>
    %c8_i32_68 = arith.constant 8 : i32
    %337 = arith.muli %c6_i32, %c8_i32_68 : i32
    %338 = tpu.assume_multiple %337, 8 : i32
    %339 = arith.truncf %336 : vector<8x64xf32> to vector<8x64xbf16>
    %340 = arith.index_cast %338 : i32 to index
    %c0_69 = arith.constant 0 : index
    %341 = vector.load %arg9[%340, %c0_69] : memref<56x64xbf16, #tpu.memory_space<vmem>>, vector<8x64xbf16>
    tpu.vector_store %arg9[%340, %c0_69], %339 {strides = array<i32>} : memref<56x64xbf16, #tpu.memory_space<vmem>>, vector<8x64xbf16>,
    %c7_i32 = arith.constant 7 : i32
    %c0_70 = arith.constant 0 : index
    %c0_71 = arith.constant 0 : index
    %342 = vector.load %arg6[%c0_70, %c0_71] : memref<64x128xbf16, #tpu.memory_space<vmem>>, vector<64x128xbf16>
    %c0_72 = arith.constant 0 : index
    %c0_73 = arith.constant 0 : index
    %343 = vector.load %arg9[%c0_72, %c0_73] : memref<56x64xbf16, #tpu.memory_space<vmem>>, vector<56x64xbf16>
    %cst_74 = arith.constant dense<0.000000e+00> : vector<56x128xf32>
    %344 = tpu.matmul %343, %342, %cst_74 {dimension_numbers = #tpu.dot_dimension_numbers<[1], [0], [0], [1], [0, 0, 1, 1], [], []>} : vector<56x64xbf16>, vector<64x128xbf16>, vector<56x128xf32> -> vector<56x128xf32>
    %c0_75 = arith.constant 0 : index
    %c0_76 = arith.constant 0 : index
    %345 = vector.load %arg7[%c0_75, %c0_76] : memref<1x128xf32, #tpu.memory_space<vmem>>, vector<1x128xf32>
    %346 = vector.broadcast %345 : vector<1x128xf32> to vector<56x128xf32>
    %347 = arith.addf %344, %346 : vector<56x128xf32>
    %c0_77 = arith.constant 0 : index
    %c0_78 = arith.constant 0 : index
    %348 = vector.load %arg8[%c0_77, %c0_78] : memref<56x128xf32, #tpu.memory_space<vmem>>, vector<56x128xf32>
    tpu.vector_store %arg8[%c0_77, %c0_78], %347 {strides = array<i32>} : memref<56x128xf32, #tpu.memory_space<vmem>>, vector<56x128xf32>,
    return
  }
}

</mosaic_0001>

<llo_original>
// kernel: medical_qa_forward.3
$region0: #{medical_qa_forward.3}
  #allocation0 [shape = 'u32[]', space=smem, size = 0x4, offset = 0x4, fixed_abs, tag = 'smem constant byte address 0x4 - core index']
  #allocation1 [shape = 'u32[144,128]{1,0:T(1,128)}', space=vmem, size = 0x12000, scoped, tag = 'internal scratch']
  %s0 = inlined_call_operand.vmem [shape: f32[8,8,256], index: 0, kind: input, shape index: {}]
  %s1 = inlined_call_operand.vmem [shape: bf16[64,256], index: 1, kind: input, shape index: {}]
  %s2 = inlined_call_operand.vmem [shape: bf16[8,8,64], index: 2, kind: output, shape index: {0}]
  %s3 = inlined_call_operand.vmem [shape: f32[8,64], index: 3, kind: output, shape index: {1}]
  %s4 = inlined_call_operand.vmem [shape: f32[8,64], index: 4, kind: output, shape index: {2}]
  %5 = xla_tuple %s2, %s3, %s4
  %s6 = sld [smem:[#allocation0]]
  $region34: #{medical_qa_forward.3} parent=0
    _
  %s8 = ssub.s32 1, %s6
  %s9 = scalar_select 0, %s8, %s6
  // Predicated region
  $region2: #{medical_qa_forward.3} parent=0 // pred_check
    _
  $region3: #{medical_qa_forward.3} parent=0 // pred_check_branch
    %11 = sbr.rel (0) target = $region5
  $region4: #{medical_qa_forward.3} parent=0 // pred_region
    _
  $region5: #{medical_qa_forward.3} parent=0 // pred_fallthru
    _
  // Predicated region
  $region6: #{medical_qa_forward.3} parent=0 // pred_check
    _
  $region7: #{medical_qa_forward.3} parent=0 // pred_check_branch
    %13 = sbr.rel (0) target = $region9
  $region8: #{medical_qa_forward.3} parent=0 // pred_region
    _
  $region9: #{medical_qa_forward.3} parent=0 // pred_fallthru
    _
  %v15 = vld [vmem:[%s1] sm:$0xff]
  %v16 = vld [vmem:[%s1 + $0x8] sm:$0xff]
  %v17 = vld [vmem:[%s1 + $0x10] sm:$0xff]
  %v18 = vld [vmem:[%s1 + $0x18] sm:$0xff]
  %v19 = vld [vmem:[%s1 + $0x20] sm:$0xff]
  %v20 = vld [vmem:[%s1 + $0x28] sm:$0xff]
  %v21 = vld [vmem:[%s1 + $0x30] sm:$0xff]
  %v22 = vld [vmem:[%s1 + $0x38] sm:$0xff]
  %v23 = vld [vmem:[%s0] sm:$0xff]
  %v24 = vld [vmem:[%s0 + $0x8] sm:$0xff]
  %v33 = vunpack.c.l.b16 %v15
  %v34 = vunpack.c.h.b16 %v15
  %v35 = vunpack.c.l.b16 %v16
  %v36 = vunpack.c.h.b16 %v16
  %v37 = vunpack.c.l.b16 %v17
  %v38 = vunpack.c.h.b16 %v17
  %v39 = vunpack.c.l.b16 %v18
  %v40 = vunpack.c.h.b16 %v18
  %v41 = vunpack.c.l.b16 %v19
  %v42 = vunpack.c.h.b16 %v19
  %v43 = vunpack.c.l.b16 %v20
  %v44 = vunpack.c.h.b16 %v20
  %v45 = vunpack.c.l.b16 %v21
  %v46 = vunpack.c.h.b16 %v21
  %v47 = vunpack.c.l.b16 %v22
  %v48 = vunpack.c.h.b16 %v22
  %v49 = vpack.c.b16 %v35, %v33
  %v50 = vpack.c.b16 %v36, %v34
  %v51 = vpack.c.b16 %v39, %v37
  %v52 = vpack.c.b16 %v40, %v38
  %v53 = vpack.c.b16 %v43, %v41
  %v54 = vpack.c.b16 %v44, %v42
  %v55 = vpack.c.b16 %v47, %v45
  %v56 = vpack.c.b16 %v48, %v46
  %vm65 = vcmask 523264
  %v67 = vsel %vm65, 0, 0
  %69 = vmatprep.subr.bf16.mxu0 0
  %70 = vmatpush1.bf16.msra.mxu0 0
  %71 = vmatprep.subr.bf16.mxu0 0
  %72 = vmatpush1.bf16.msra.mxu0 0
  %73 = vmatprep.subr.bf16.mxu0 0
  %74 = vmatpush1.bf16.msra.mxu0 0
  %75 = vmatprep.subr.bf16.mxu0 0
  %76 = vmatpush1.bf16.msra.mxu0 0
  %77 = vmatprep.subr.bf16.mxu0 %v56
  %78 = vmatpush1.bf16.msra.mxu0 %v55
  %79 = vmatprep.subr.bf16.mxu0 %v54
  %80 = vmatpush1.bf16.msra.mxu0 %v53
  %81 = vmatprep.subr.bf16.mxu0 %v52
  %82 = vmatpush1.bf16.msra.mxu0 %v51
  %83 = vmatprep.subr.bf16.mxu0 %v50
  %84 = vmatpush1.bf16.msra.mxu0 %v49
  %85 = vmatprep.subr.bf16.mxu0 0
  %86 = vmatpush2.bf16.msra.mxu0 0
  %87 = vmatprep.subr.bf16.mxu0 0
  %88 = vmatpush2.bf16.msra.mxu0 0
  %89 = vmatprep.subr.bf16.mxu0 0
  %90 = vmatpush2.bf16.msra.mxu0 0
  %91 = vmatprep.subr.bf16.mxu0 0
  %92 = vmatpush2.bf16.msra.mxu0 0
  %93 = vmatprep.subr.bf16.mxu0 0
  %94 = vmatpush2.bf16.msra.mxu0 0
  %95 = vmatprep.subr.bf16.mxu0 0
  %96 = vmatpush2.bf16.msra.mxu0 0
  %97 = vmatprep.subr.bf16.mxu0 0
  %98 = vmatpush2.bf16.msra.mxu0 0
  %99 = vmatprep.subr.bf16.mxu0 0
  %100 = vmatpush2.bf16.msra.mxu0 0
  %101 = vmatprep.mubr.bf16.mxu0 0
  %102 = vmatmul.mubr.bf16.gmra.mxu0 %v67
  %v103 = vpop.f32.mrf.mxu0
  %v104 = vadd.f32 0.0, %v103
  %v105 = vpop.f32.mrf.mxu0
  %v106 = vadd.f32 0.0, %v105
  %v107 = vpop.f32.mrf.mxu0
  %v108 = vpop.f32.mrf.mxu0
  %109 = vdwg.mxu0
  %v110 = vadd.f32 %v23, %v104
  %v111 = vadd.f32 %v24, %v106
  %v112 = vxor.u32 %v110, 2147483648
  %v113 = vxor.u32 %v111, 2147483648
  %v114 = vmul.f32 %v112, 1.442695
  %v115 = vpow.pop %v114
  %v116 = vmul.f32 %v113, 1.442695
  %v117 = vpow.pop %v116
  %v118 = vadd.f32 %v115, 1.0
  %v119 = vadd.f32 %v117, 1.0
  %v120 = vrcp.pop %v118
  %v121 = vmul.f32 1.0, %v120
  %v122 = vrcp.pop %v119
  %v123 = vmul.f32 1.0, %v122
  %v124 = vtanh.pop %v111
  %v125 = vmul.f32 %v121, 0.0
  %127 = vrot.lane.b32.xlu0 %v124, 64
  %v128 = vpop.permute.xlu0 %127
  %v130 = vmul.f32 %v121, %v128
  %132 = vrot.lane.b32.xlu0 %v130, 64
  %v133 = vpop.permute.xlu0 %132
  %v135 = vadd.f32 %v125, %v133
  %v136 = vtanh.pop %v135
  %138 = vrot.lane.b32.xlu0 %v136, 64
  %v139 = vpop.permute.xlu0 %138
  %v141 = vmul.f32 %v123, %v139
  %v142 = vpack.c.bf16 %v141, %v141
  %vm143 = vcmask 257024
  %144 = vst.msk [vmem:[%s2] sm:$0xf] %vm143, %v142
  %s145 = scalar_lea.vmem %s2, 28
  %vm146 = vcmask 519424
  %147 = vst.msk [vmem:[%s145] sm:$0xf] %vm146, %v142
  %s148 = scalar_lea.vmem %s0, 16
  %v149 = vld [vmem:[%s148] sm:$0xff]
  %v150 = vld [vmem:[%s148 + $0x8] sm:$0xff]
  %v152 = vsel %vm65, %v142, 0
  %154 = vmatprep.subr.bf16.mxu0 0
  %155 = vmatpush1.bf16.msra.mxu0 0
  %156 = vmatprep.subr.bf16.mxu0 0
  %157 = vmatpush1.bf16.msra.mxu0 0
  %158 = vmatprep.subr.bf16.mxu0 0
  %159 = vmatpush1.bf16.msra.mxu0 0
  %160 = vmatprep.subr.bf16.mxu0 0
  %161 = vmatpush1.bf16.msra.mxu0 0
  %162 = vmatprep.subr.bf16.mxu0 %v56
  %163 = vmatpush1.bf16.msra.mxu0 %v55
  %164 = vmatprep.subr.bf16.mxu0 %v54
  %165 = vmatpush1.bf16.msra.mxu0 %v53
  %166 = vmatprep.subr.bf16.mxu0 %v52
  %167 = vmatpush1.bf16.msra.mxu0 %v51
  %168 = vmatprep.subr.bf16.mxu0 %v50
  %169 = vmatpush1.bf16.msra.mxu0 %v49
  %170 = vmatprep.subr.bf16.mxu0 0
  %171 = vmatpush2.bf16.msra.mxu0 0
  %172 = vmatprep.subr.bf16.mxu0 0
  %173 = vmatpush2.bf16.msra.mxu0 0
  %174 = vmatprep.subr.bf16.mxu0 0
  %175 = vmatpush2.bf16.msra.mxu0 0
  %176 = vmatprep.subr.bf16.mxu0 0
  %177 = vmatpush2.bf16.msra.mxu0 0
  %178 = vmatprep.subr.bf16.mxu0 0
  %179 = vmatpush2.bf16.msra.mxu0 0
  %180 = vmatprep.subr.bf16.mxu0 0
  %181 = vmatpush2.bf16.msra.mxu0 0
  %182 = vmatprep.subr.bf16.mxu0 0
  %183 = vmatpush2.bf16.msra.mxu0 0
  %184 = vmatprep.subr.bf16.mxu0 0
  %185 = vmatpush2.bf16.msra.mxu0 0
  %186 = vmatprep.mubr.bf16.mxu0 0
  %187 = vmatmul.mubr.bf16.gmra.mxu0 %v152
  %v188 = vpop.f32.mrf.mxu0
  %v189 = vadd.f32 0.0, %v188
  %v190 = vpop.f32.mrf.mxu0
  %v191 = vadd.f32 0.0, %v190
  %v192 = vpop.f32.mrf.mxu0
  %v193 = vpop.f32.mrf.mxu0
  %194 = vdwg.mxu0
  %v195 = vadd.f32 %v149, %v189
  %v196 = vadd.f32 %v150, %v191
  %v197 = vxor.u32 %v195, 2147483648
  %v198 = vxor.u32 %v196, 2147483648
  %v199 = vmul.f32 %v197, 1.442695
  %v200 = vpow.pop %v199
  %v201 = vmul.f32 %v198, 1.442695
  %v202 = vpow.pop %v201
  %v203 = vadd.f32 %v200, 1.0
  %v204 = vadd.f32 %v202, 1.0
  %v205 = vrcp.pop %v203
  %v206 = vmul.f32 1.0, %v205
  %v207 = vrcp.pop %v204
  %v208 = vmul.f32 1.0, %v207
  %v209 = vtanh.pop %v196
  %v210 = vmul.f32 %v206, %v135
  %212 = vrot.lane.b32.xlu0 %v209, 64
  %v213 = vpop.permute.xlu0 %212
  %v215 = vmul.f32 %v206, %v213
  %217 = vrot.lane.b32.xlu0 %v215, 64
  %v218 = vpop.permute.xlu0 %217
  %v220 = vadd.f32 %v210, %v218
  %v221 = vtanh.pop %v220
  %223 = vrot.lane.b32.xlu0 %v221, 64
  %v224 = vpop.permute.xlu0 %223
  %v226 = vmul.f32 %v208, %v224
  %v227 = vpack.c.bf16 %v226, %v226
  %s228 = scalar_lea.vmem %s2, 4
  %229 = vst.msk [vmem:[%s228] sm:$0xf] %vm143, %v227
  %s230 = scalar_lea.vmem %s2, 24
  %231 = vst.msk [vmem:[%s230] sm:$0xf] %vm146, %v227
  %s232 = scalar_lea.vmem %s0, 32
  %v233 = vld [vmem:[%s232] sm:$0xff]
  %v234 = vld [vmem:[%s232 + $0x8] sm:$0xff]
  %v236 = vsel %vm65, %v227, 0
  %238 = vmatprep.subr.bf16.mxu0 0
  %239 = vmatpush1.bf16.msra.mxu0 0
  %240 = vmatprep.subr.bf16.mxu0 0
  %241 = vmatpush1.bf16.msra.mxu0 0
  %242 = vmatprep.subr.bf16.mxu0 0
  %243 = vmatpush1.bf16.msra.mxu0 0
  %244 = vmatprep.subr.bf16.mxu0 0
  %245 = vmatpush1.bf16.msra.mxu0 0
  %246 = vmatprep.subr.bf16.mxu0 %v56
  %247 = vmatpush1.bf16.msra.mxu0 %v55
  %248 = vmatprep.subr.bf16.mxu0 %v54
  %249 = vmatpush1.bf16.msra.mxu0 %v53
  %250 = vmatprep.subr.bf16.mxu0 %v52
  %251 = vmatpush1.bf16.msra.mxu0 %v51
  %252 = vmatprep.subr.bf16.mxu0 %v50
  %253 = vmatpush1.bf16.msra.mxu0 %v49
  %254 = vmatprep.subr.bf16.mxu0 0
  %255 = vmatpush2.bf16.msra.mxu0 0
  %256 = vmatprep.subr.bf16.mxu0 0
  %257 = vmatpush2.bf16.msra.mxu0 0
  %258 = vmatprep.subr.bf16.mxu0 0
  %259 = vmatpush2.bf16.msra.mxu0 0
  %260 = vmatprep.subr.bf16.mxu0 0
  %261 = vmatpush2.bf16.msra.mxu0 0
  %262 = vmatprep.subr.bf16.mxu0 0
  %263 = vmatpush2.bf16.msra.mxu0 0
  %264 = vmatprep.subr.bf16.mxu0 0
  %265 = vmatpush2.bf16.msra.mxu0 0
  %266 = vmatprep.subr.bf16.mxu0 0
  %267 = vmatpush2.bf16.msra.mxu0 0
  %268 = vmatprep.subr.bf16.mxu0 0
  %269 = vmatpush2.bf16.msra.mxu0 0
  %270 = vmatprep.mubr.bf16.mxu0 0
  %271 = vmatmul.mubr.bf16.gmra.mxu0 %v236
  %v272 = vpop.f32.mrf.mxu0
  %v273 = vadd.f32 0.0, %v272
  %v274 = vpop.f32.mrf.mxu0
  %v275 = vadd.f32 0.0, %v274
  %v276 = vpop.f32.mrf.mxu0
  %v277 = vpop.f32.mrf.mxu0
  %278 = vdwg.mxu0
  %v279 = vadd.f32 %v233, %v273
  %v280 = vadd.f32 %v234, %v275
  %v281 = vxor.u32 %v279, 2147483648
  %v282 = vxor.u32 %v280, 2147483648
  %v283 = vmul.f32 %v281, 1.442695
  %v284 = vpow.pop %v283
  %v285 = vmul.f32 %v282, 1.442695
  %v286 = vpow.pop %v285
  %v287 = vadd.f32 %v284, 1.0
  %v288 = vadd.f32 %v286, 1.0
  %v289 = vrcp.pop %v287
  %v290 = vmul.f32 1.0, %v289
  %v291 = vrcp.pop %v288
  %v292 = vmul.f32 1.0, %v291
  %v293 = vtanh.pop %v280
  %v294 = vmul.f32 %v290, %v220
  %296 = vrot.lane.b32.xlu0 %v293, 64
  %v297 = vpop.permute.xlu0 %296
  %v299 = vmul.f32 %v290, %v297
  %301 = vrot.lane.b32.xlu0 %v299, 64
  %v302 = vpop.permute.xlu0 %301
  %v304 = vadd.f32 %v294, %v302
  %v305 = vtanh.pop %v304
  %307 = vrot.lane.b32.xlu0 %v305, 64
  %v308 = vpop.permute.xlu0 %307
  %v310 = vmul.f32 %v292, %v308
  %v311 = vpack.c.bf16 %v310, %v310
  %s312 = scalar_lea.vmem %s2, 8
  %313 = vst.msk [vmem:[%s312] sm:$0xf] %vm143, %v311
  %s314 = scalar_lea.vmem %s2, 20
  %315 = vst.msk [vmem:[%s314] sm:$0xf] %vm146, %v311
  %s316 = scalar_lea.vmem %s0, 48
  %v317 = vld [vmem:[%s316] sm:$0xff]
  %v318 = vld [vmem:[%s316 + $0x8] sm:$0xff]
  %v320 = vsel %vm65, %v311, 0
  %322 = vmatprep.subr.bf16.mxu0 0
  %323 = vmatpush1.bf16.msra.mxu0 0
  %324 = vmatprep.subr.bf16.mxu0 0
  %325 = vmatpush1.bf16.msra.mxu0 0
  %326 = vmatprep.subr.bf16.mxu0 0
  %327 = vmatpush1.bf16.msra.mxu0 0
  %328 = vmatprep.subr.bf16.mxu0 0
  %329 = vmatpush1.bf16.msra.mxu0 0
  %330 = vmatprep.subr.bf16.mxu0 %v56
  %331 = vmatpush1.bf16.msra.mxu0 %v55
  %332 = vmatprep.subr.bf16.mxu0 %v54
  %333 = vmatpush1.bf16.msra.mxu0 %v53
  %334 = vmatprep.subr.bf16.mxu0 %v52
  %335 = vmatpush1.bf16.msra.mxu0 %v51
  %336 = vmatprep.subr.bf16.mxu0 %v50
  %337 = vmatpush1.bf16.msra.mxu0 %v49
  %338 = vmatprep.subr.bf16.mxu0 0
  %339 = vmatpush2.bf16.msra.mxu0 0
  %340 = vmatprep.subr.bf16.mxu0 0
  %341 = vmatpush2.bf16.msra.mxu0 0
  %342 = vmatprep.subr.bf16.mxu0 0
  %343 = vmatpush2.bf16.msra.mxu0 0
  %344 = vmatprep.subr.bf16.mxu0 0
  %345 = vmatpush2.bf16.msra.mxu0 0
  %346 = vmatprep.subr.bf16.mxu0 0
  %347 = vmatpush2.bf16.msra.mxu0 0
  %348 = vmatprep.subr.bf16.mxu0 0
  %349 = vmatpush2.bf16.msra.mxu0 0
  %350 = vmatprep.subr.bf16.mxu0 0
  %351 = vmatpush2.bf16.msra.mxu0 0
  %352 = vmatprep.subr.bf16.mxu0 0
  %353 = vmatpush2.bf16.msra.mxu0 0
  %354 = vmatprep.mubr.bf16.mxu0 0
  %355 = vmatmul.mubr.bf16.gmra.mxu0 %v320
  %v356 = vpop.f32.mrf.mxu0
  %v357 = vadd.f32 0.0, %v356
  %v358 = vpop.f32.mrf.mxu0
  %v359 = vadd.f32 0.0, %v358
  %v360 = vpop.f32.mrf.mxu0
  %v361 = vpop.f32.mrf.mxu0
  %362 = vdwg.mxu0
  %v363 = vadd.f32 %v317, %v357
  %v364 = vadd.f32 %v318, %v359
  %v365 = vxor.u32 %v363, 2147483648
  %v366 = vxor.u32 %v364, 2147483648
  %v367 = vmul.f32 %v365, 1.442695
  %v368 = vpow.pop %v367
  %v369 = vmul.f32 %v366, 1.442695
  %v370 = vpow.pop %v369
  %v371 = vadd.f32 %v368, 1.0
  %v372 = vadd.f32 %v370, 1.0
  %v373 = vrcp.pop %v371
  %v374 = vmul.f32 1.0, %v373
  %v375 = vrcp.pop %v372
  %v376 = vmul.f32 1.0, %v375
  %v377 = vtanh.pop %v364
  %v378 = vmul.f32 %v374, %v304
  %380 = vrot.lane.b32.xlu0 %v377, 64
  %v381 = vpop.permute.xlu0 %380
  %v383 = vmul.f32 %v374, %v381
  %385 = vrot.lane.b32.xlu0 %v383, 64
  %v386 = vpop.permute.xlu0 %385
  %v388 = vadd.f32 %v378, %v386
  %v389 = vtanh.pop %v388
  %391 = vrot.lane.b32.xlu0 %v389, 64
  %v392 = vpop.permute.xlu0 %391
  %v394 = vmul.f32 %v376, %v392
  %v395 = vpack.c.bf16 %v394, %v394
  %s396 = scalar_lea.vmem %s2, 12
  %397 = vst.msk [vmem:[%s396] sm:$0xf] %vm143, %v395
  %s398 = scalar_lea.vmem %s2, 16
  %399 = vst.msk [vmem:[%s398] sm:$0xf] %vm146, %v395
  %s400 = scalar_lea.vmem %s0, 64
  %v401 = vld [vmem:[%s400] sm:$0xff]
  %v402 = vld [vmem:[%s400 + $0x8] sm:$0xff]
  %v404 = vsel %vm65, %v395, 0
  %406 = vmatprep.subr.bf16.mxu0 0
  %407 = vmatpush1.bf16.msra.mxu0 0
  %408 = vmatprep.subr.bf16.mxu0 0
  %409 = vmatpush1.bf16.msra.mxu0 0
  %410 = vmatprep.subr.bf16.mxu0 0
  %411 = vmatpush1.bf16.msra.mxu0 0
  %412 = vmatprep.subr.bf16.mxu0 0
  %413 = vmatpush1.bf16.msra.mxu0 0
  %414 = vmatprep.subr.bf16.mxu0 %v56
  %415 = vmatpush1.bf16.msra.mxu0 %v55
  %416 = vmatprep.subr.bf16.mxu0 %v54
  %417 = vmatpush1.bf16.msra.mxu0 %v53
  %418 = vmatprep.subr.bf16.mxu0 %v52
  %419 = vmatpush1.bf16.msra.mxu0 %v51
  %420 = vmatprep.subr.bf16.mxu0 %v50
  %421 = vmatpush1.bf16.msra.mxu0 %v49
  %422 = vmatprep.subr.bf16.mxu0 0
  %423 = vmatpush2.bf16.msra.mxu0 0
  %424 = vmatprep.subr.bf16.mxu0 0
  %425 = vmatpush2.bf16.msra.mxu0 0
  %426 = vmatprep.subr.bf16.mxu0 0
  %427 = vmatpush2.bf16.msra.mxu0 0
  %428 = vmatprep.subr.bf16.mxu0 0
  %429 = vmatpush2.bf16.msra.mxu0 0
  %430 = vmatprep.subr.bf16.mxu0 0
  %431 = vmatpush2.bf16.msra.mxu0 0
  %432 = vmatprep.subr.bf16.mxu0 0
  %433 = vmatpush2.bf16.msra.mxu0 0
  %434 = vmatprep.subr.bf16.mxu0 0
  %435 = vmatpush2.bf16.msra.mxu0 0
  %436 = vmatprep.subr.bf16.mxu0 0
  %437 = vmatpush2.bf16.msra.mxu0 0
  %438 = vmatprep.mubr.bf16.mxu0 0
  %439 = vmatmul.mubr.bf16.gmra.mxu0 %v404
  %v440 = vpop.f32.mrf.mxu0
  %v441 = vadd.f32 0.0, %v440
  %v442 = vpop.f32.mrf.mxu0
  %v443 = vadd.f32 0.0, %v442
  %v444 = vpop.f32.mrf.mxu0
  %v445 = vpop.f32.mrf.mxu0
  %446 = vdwg.mxu0
  %v447 = vadd.f32 %v401, %v441
  %v448 = vadd.f32 %v402, %v443
  %v449 = vxor.u32 %v447, 2147483648
  %v450 = vxor.u32 %v448, 2147483648
  %v451 = vmul.f32 %v449, 1.442695
  %v452 = vpow.pop %v451
  %v453 = vmul.f32 %v450, 1.442695
  %v454 = vpow.pop %v453
  %v455 = vadd.f32 %v452, 1.0
  %v456 = vadd.f32 %v454, 1.0
  %v457 = vrcp.pop %v455
  %v458 = vmul.f32 1.0, %v457
  %v459 = vrcp.pop %v456
  %v460 = vmul.f32 1.0, %v459
  %v461 = vtanh.pop %v448
  %v462 = vmul.f32 %v458, %v388
  %464 = vrot.lane.b32.xlu0 %v461, 64
  %v465 = vpop.permute.xlu0 %464
  %v467 = vmul.f32 %v458, %v465
  %469 = vrot.lane.b32.xlu0 %v467, 64
  %v470 = vpop.permute.xlu0 %469
  %v472 = vadd.f32 %v462, %v470
  %v473 = vtanh.pop %v472
  %475 = vrot.lane.b32.xlu0 %v473, 64
  %v476 = vpop.permute.xlu0 %475
  %v478 = vmul.f32 %v460, %v476
  %v479 = vpack.c.bf16 %v478, %v478
  %480 = vst.msk [vmem:[%s398] sm:$0xf] %vm143, %v479
  %481 = vst.msk [vmem:[%s396] sm:$0xf] %vm146, %v479
  %s482 = scalar_lea.vmem %s0, 80
  %v483 = vld [vmem:[%s482] sm:$0xff]
  %v484 = vld [vmem:[%s482 + $0x8] sm:$0xff]
  %v486 = vsel %vm65, %v479, 0
  %488 = vmatprep.subr.bf16.mxu0 0
  %489 = vmatpush1.bf16.msra.mxu0 0
  %490 = vmatprep.subr.bf16.mxu0 0
  %491 = vmatpush1.bf16.msra.mxu0 0
  %492 = vmatprep.subr.bf16.mxu0 0
  %493 = vmatpush1.bf16.msra.mxu0 0
  %494 = vmatprep.subr.bf16.mxu0 0
  %495 = vmatpush1.bf16.msra.mxu0 0
  %496 = vmatprep.subr.bf16.mxu0 %v56
  %497 = vmatpush1.bf16.msra.mxu0 %v55
  %498 = vmatprep.subr.bf16.mxu0 %v54
  %499 = vmatpush1.bf16.msra.mxu0 %v53
  %500 = vmatprep.subr.bf16.mxu0 %v52
  %501 = vmatpush1.bf16.msra.mxu0 %v51
  %502 = vmatprep.subr.bf16.mxu0 %v50
  %503 = vmatpush1.bf16.msra.mxu0 %v49
  %504 = vmatprep.subr.bf16.mxu0 0
  %505 = vmatpush2.bf16.msra.mxu0 0
  %506 = vmatprep.subr.bf16.mxu0 0
  %507 = vmatpush2.bf16.msra.mxu0 0
  %508 = vmatprep.subr.bf16.mxu0 0
  %509 = vmatpush2.bf16.msra.mxu0 0
  %510 = vmatprep.subr.bf16.mxu0 0
  %511 = vmatpush2.bf16.msra.mxu0 0
  %512 = vmatprep.subr.bf16.mxu0 0
  %513 = vmatpush2.bf16.msra.mxu0 0
  %514 = vmatprep.subr.bf16.mxu0 0
  %515 = vmatpush2.bf16.msra.mxu0 0
  %516 = vmatprep.subr.bf16.mxu0 0
  %517 = vmatpush2.bf16.msra.mxu0 0
  %518 = vmatprep.subr.bf16.mxu0 0
  %519 = vmatpush2.bf16.msra.mxu0 0
  %520 = vmatprep.mubr.bf16.mxu0 0
  %521 = vmatmul.mubr.bf16.gmra.mxu0 %v486
  %v522 = vpop.f32.mrf.mxu0
  %v523 = vadd.f32 0.0, %v522
  %v524 = vpop.f32.mrf.mxu0
  %v525 = vadd.f32 0.0, %v524
  %v526 = vpop.f32.mrf.mxu0
  %v527 = vpop.f32.mrf.mxu0
  %528 = vdwg.mxu0
  %v529 = vadd.f32 %v483, %v523
  %v530 = vadd.f32 %v484, %v525
  %v531 = vxor.u32 %v529, 2147483648
  %v532 = vxor.u32 %v530, 2147483648
  %v533 = vmul.f32 %v531, 1.442695
  %v534 = vpow.pop %v533
  %v535 = vmul.f32 %v532, 1.442695
  %v536 = vpow.pop %v535
  %v537 = vadd.f32 %v534, 1.0
  %v538 = vadd.f32 %v536, 1.0
  %v539 = vrcp.pop %v537
  %v540 = vmul.f32 1.0, %v539
  %v541 = vrcp.pop %v538
  %v542 = vmul.f32 1.0, %v541
  %v543 = vtanh.pop %v530
  %v544 = vmul.f32 %v540, %v472
  %546 = vrot.lane.b32.xlu0 %v543, 64
  %v547 = vpop.permute.xlu0 %546
  %v549 = vmul.f32 %v540, %v547
  %551 = vrot.lane.b32.xlu0 %v549, 64
  %v552 = vpop.permute.xlu0 %551
  %v554 = vadd.f32 %v544, %v552
  %v555 = vtanh.pop %v554
  %557 = vrot.lane.b32.xlu0 %v555, 64
  %v558 = vpop.permute.xlu0 %557
  %v560 = vmul.f32 %v542, %v558
  %v561 = vpack.c.bf16 %v560, %v560
  %562 = vst.msk [vmem:[%s314] sm:$0xf] %vm143, %v561
  %563 = vst.msk [vmem:[%s312] sm:$0xf] %vm146, %v561
  %s564 = scalar_lea.vmem %s0, 96
  %v565 = vld [vmem:[%s564] sm:$0xff]
  %v566 = vld [vmem:[%s564 + $0x8] sm:$0xff]
  %v568 = vsel %vm65, %v561, 0
  %570 = vmatprep.subr.bf16.mxu0 0
  %571 = vmatpush1.bf16.msra.mxu0 0
  %572 = vmatprep.subr.bf16.mxu0 0
  %573 = vmatpush1.bf16.msra.mxu0 0
  %574 = vmatprep.subr.bf16.mxu0 0
  %575 = vmatpush1.bf16.msra.mxu0 0
  %576 = vmatprep.subr.bf16.mxu0 0
  %577 = vmatpush1.bf16.msra.mxu0 0
  %578 = vmatprep.subr.bf16.mxu0 %v56
  %579 = vmatpush1.bf16.msra.mxu0 %v55
  %580 = vmatprep.subr.bf16.mxu0 %v54
  %581 = vmatpush1.bf16.msra.mxu0 %v53
  %582 = vmatprep.subr.bf16.mxu0 %v52
  %583 = vmatpush1.bf16.msra.mxu0 %v51
  %584 = vmatprep.subr.bf16.mxu0 %v50
  %585 = vmatpush1.bf16.msra.mxu0 %v49
  %586 = vmatprep.subr.bf16.mxu0 0
  %587 = vmatpush2.bf16.msra.mxu0 0
  %588 = vmatprep.subr.bf16.mxu0 0
  %589 = vmatpush2.bf16.msra.mxu0 0
  %590 = vmatprep.subr.bf16.mxu0 0
  %591 = vmatpush2.bf16.msra.mxu0 0
  %592 = vmatprep.subr.bf16.mxu0 0
  %593 = vmatpush2.bf16.msra.mxu0 0
  %594 = vmatprep.subr.bf16.mxu0 0
  %595 = vmatpush2.bf16.msra.mxu0 0
  %596 = vmatprep.subr.bf16.mxu0 0
  %597 = vmatpush2.bf16.msra.mxu0 0
  %598 = vmatprep.subr.bf16.mxu0 0
  %599 = vmatpush2.bf16.msra.mxu0 0
  %600 = vmatprep.subr.bf16.mxu0 0
  %601 = vmatpush2.bf16.msra.mxu0 0
  %602 = vmatprep.mubr.bf16.mxu0 0
  %603 = vmatmul.mubr.bf16.gmra.mxu0 %v568
  %v604 = vpop.f32.mrf.mxu0
  %v605 = vadd.f32 0.0, %v604
  %v606 = vpop.f32.mrf.mxu0
  %v607 = vadd.f32 0.0, %v606
  %v608 = vpop.f32.mrf.mxu0
  %v609 = vpop.f32.mrf.mxu0
  %610 = vdwg.mxu0
  %v611 = vadd.f32 %v565, %v605
  %v612 = vadd.f32 %v566, %v607
  %v613 = vxor.u32 %v611, 2147483648
  %v614 = vxor.u32 %v612, 2147483648
  %v615 = vmul.f32 %v613, 1.442695
  %v616 = vpow.pop %v615
  %v617 = vmul.f32 %v614, 1.442695
  %v618 = vpow.pop %v617
  %v619 = vadd.f32 %v616, 1.0
  %v620 = vadd.f32 %v618, 1.0
  %v621 = vrcp.pop %v619
  %v622 = vmul.f32 1.0, %v621
  %v623 = vrcp.pop %v620
  %v624 = vmul.f32 1.0, %v623
  %v625 = vtanh.pop %v612
  %v626 = vmul.f32 %v622, %v554
  %628 = vrot.lane.b32.xlu0 %v625, 64
  %v629 = vpop.permute.xlu0 %628
  %v631 = vmul.f32 %v622, %v629
  %633 = vrot.lane.b32.xlu0 %v631, 64
  %v634 = vpop.permute.xlu0 %633
  %v636 = vadd.f32 %v626, %v634
  %v637 = vtanh.pop %v636
  %639 = vrot.lane.b32.xlu0 %v637, 64
  %v640 = vpop.permute.xlu0 %639
  %v642 = vmul.f32 %v624, %v640
  %v643 = vpack.c.bf16 %v642, %v642
  %644 = vst.msk [vmem:[%s230] sm:$0xf] %vm143, %v643
  %645 = vst.msk [vmem:[%s228] sm:$0xf] %vm146, %v643
  %s646 = scalar_lea.vmem %s0, 112
  %v647 = vld [vmem:[%s646] sm:$0xff]
  %v648 = vld [vmem:[%s646 + $0x8] sm:$0xff]
  %v650 = vsel %vm65, %v643, 0
  %652 = vmatprep.subr.bf16.mxu0 0
  %653 = vmatpush1.bf16.msra.mxu0 0
  %654 = vmatprep.subr.bf16.mxu0 0
  %655 = vmatpush1.bf16.msra.mxu0 0
  %656 = vmatprep.subr.bf16.mxu0 0
  %657 = vmatpush1.bf16.msra.mxu0 0
  %658 = vmatprep.subr.bf16.mxu0 0
  %659 = vmatpush1.bf16.msra.mxu0 0
  %660 = vmatprep.subr.bf16.mxu0 %v56
  %661 = vmatpush1.bf16.msra.mxu0 %v55
  %662 = vmatprep.subr.bf16.mxu0 %v54
  %663 = vmatpush1.bf16.msra.mxu0 %v53
  %664 = vmatprep.subr.bf16.mxu0 %v52
  %665 = vmatpush1.bf16.msra.mxu0 %v51
  %666 = vmatprep.subr.bf16.mxu0 %v50
  %667 = vmatpush1.bf16.msra.mxu0 %v49
  %668 = vmatprep.subr.bf16.mxu0 0
  %669 = vmatpush2.bf16.msra.mxu0 0
  %670 = vmatprep.subr.bf16.mxu0 0
  %671 = vmatpush2.bf16.msra.mxu0 0
  %672 = vmatprep.subr.bf16.mxu0 0
  %673 = vmatpush2.bf16.msra.mxu0 0
  %674 = vmatprep.subr.bf16.mxu0 0
  %675 = vmatpush2.bf16.msra.mxu0 0
  %676 = vmatprep.subr.bf16.mxu0 0
  %677 = vmatpush2.bf16.msra.mxu0 0
  %678 = vmatprep.subr.bf16.mxu0 0
  %679 = vmatpush2.bf16.msra.mxu0 0
  %680 = vmatprep.subr.bf16.mxu0 0
  %681 = vmatpush2.bf16.msra.mxu0 0
  %682 = vmatprep.subr.bf16.mxu0 0
  %683 = vmatpush2.bf16.msra.mxu0 0
  %684 = vmatprep.mubr.bf16.mxu0 0
  %685 = vmatmul.mubr.bf16.gmra.mxu0 %v650
  %v686 = vpop.f32.mrf.mxu0
  %v687 = vadd.f32 0.0, %v686
  %v688 = vpop.f32.mrf.mxu0
  %v689 = vadd.f32 0.0, %v688
  %v690 = vpop.f32.mrf.mxu0
  %v691 = vpop.f32.mrf.mxu0
  %692 = vdwg.mxu0
  %v693 = vadd.f32 %v647, %v687
  %v694 = vadd.f32 %v648, %v689
  %v695 = vxor.u32 %v693, 2147483648
  %v696 = vxor.u32 %v694, 2147483648
  %v697 = vmul.f32 %v695, 1.442695
  %v698 = vpow.pop %v697
  %v699 = vmul.f32 %v696, 1.442695
  %v700 = vpow.pop %v699
  %v701 = vadd.f32 %v698, 1.0
  %v702 = vadd.f32 %v700, 1.0
  %v703 = vrcp.pop %v701
  %v704 = vmul.f32 1.0, %v703
  %v705 = vrcp.pop %v702
  %v706 = vmul.f32 1.0, %v705
  %v707 = vtanh.pop %v694
  %v708 = vmul.f32 %v704, %v636
  %710 = vrot.lane.b32.xlu0 %v707, 64
  %v711 = vpop.permute.xlu0 %710
  %v713 = vmul.f32 %v704, %v711
  %715 = vrot.lane.b32.xlu0 %v713, 64
  %v716 = vpop.permute.xlu0 %715
  %v718 = vadd.f32 %v708, %v716
  %v719 = vtanh.pop %v718
  %721 = vrot.lane.b32.xlu0 %v719, 64
  %v722 = vpop.permute.xlu0 %721
  %v724 = vmul.f32 %v706, %v722
  %v725 = vpack.c.bf16 %v724, %v724
  %726 = vst.msk [vmem:[%s145] sm:$0xf] %vm143, %v725
  %727 = vst.msk [vmem:[%s2] sm:$0xf] %vm146, %v725
  %728 = vst.msk [vmem:[%s3] sm:$0xff] %vm65, %v724
  %730 = vrot.lane.b32.xlu0 %v718, 64
  %v731 = vpop.permute.xlu0 %730
  %733 = vst.msk [vmem:[%s4] sm:$0xff] %vm65, %v731
  // Predicated region
  $region10: #{medical_qa_forward.3} parent=0 // pred_check
    _
  $region11: #{medical_qa_forward.3} parent=0 // pred_check_branch
    %735 = sbr.rel (0) target = $region13
  $region12: #{medical_qa_forward.3} parent=0 // pred_region
    _
  $region13: #{medical_qa_forward.3} parent=0 // pred_fallthru
    _
  // Predicated region
  $region14: #{medical_qa_forward.3} parent=0 // pred_check
    _
  $region15: #{medical_qa_forward.3} parent=0 // pred_check_branch
    %737 = sbr.rel (0) target = $region17
  $region16: #{medical_qa_forward.3} parent=0 // pred_region
    _
  $region17: #{medical_qa_forward.3} parent=0 // pred_fallthru
    _
  // Predicated region
  $region18: #{medical_qa_forward.3} parent=0 // pred_check
    _
  $region19: #{medical_qa_forward.3} parent=0 // pred_check_branch
    %739 = sbr.rel (0) target = $region21
  $region20: #{medical_qa_forward.3} parent=0 // pred_region
    _
  $region21: #{medical_qa_forward.3} parent=0 // pred_fallthru
    _
  // Predicated region
  $region22: #{medical_qa_forward.3} parent=0 // pred_check
    _
  $region23: #{medical_qa_forward.3} parent=0 // pred_check_branch
    %741 = sbr.rel (0) target = $region25
  $region24: #{medical_qa_forward.3} parent=0 // pred_region
    _
  $region25: #{medical_qa_forward.3} parent=0 // pred_fallthru
    _
  // Predicated region
  $region26: #{medical_qa_forward.3} parent=0 // pred_check
    _
  $region27: #{medical_qa_forward.3} parent=0 // pred_check_branch
    %743 = sbr.rel (0) target = $region29
  $region28: #{medical_qa_forward.3} parent=0 // pred_region
    _
  $region29: #{medical_qa_forward.3} parent=0 // pred_fallthru
    _
  // Predicated region
  $region30: #{medical_qa_forward.3} parent=0 // pred_check
    _
  $region31: #{medical_qa_forward.3} parent=0 // pred_check_branch
    %745 = sbr.rel (0) target = $region33
  $region32: #{medical_qa_forward.3} parent=0 // pred_region
    _
  $region33: #{medical_qa_forward.3} parent=0 // pred_fallthru
    _

// kernel: medical_qa_forward.4
$region0: #{medical_qa_forward.4}
  #allocation0 [shape = 'u32[]', space=smem, size = 0x4, offset = 0x4, fixed_abs, tag = 'smem constant byte address 0x4 - core index']
  #allocation1 [shape = 'u32[144,128]{1,0:T(1,128)}', space=vmem, size = 0x12000, scoped, tag = 'internal scratch']
  %s0 = inlined_call_operand.vmem [shape: f32[8,8,256], index: 0, kind: input, shape index: {}]
  %s1 = inlined_call_operand.vmem [shape: bf16[64,256], index: 1, kind: input, shape index: {}]
  %s2 = inlined_call_operand.hbm [shape: bf16[8,8,64], index: 2, kind: output, shape index: {0}]
  %s3 = inlined_call_operand.vmem [shape: f32[8,64], index: 3, kind: output, shape index: {1}]
  %s4 = inlined_call_operand.vmem [shape: f32[8,64], index: 4, kind: output, shape index: {2}]
  %5 = xla_tuple %s2, %s3, %s4
  %s6 = sld [smem:[#allocation0]]
  $region34: #{medical_qa_forward.4} parent=0
    _
  %s8 = ssub.s32 1, %s6
  %s9 = scalar_select 0, %s8, %s6
  $region1: #{medical_qa_forward.4} parent=0
    #allocation2 [shape = 'u8[16384]{0}', space=vmem, size = 0x4000, scoped, tag = 'output window, operand 0, single buffered']
    #allocation3 [shape = 's32[1]{0}', space=sflag, size = 0x4, scoped, tag = 'scoped memory for medical_qa_forward.4']
    %10 = vsyncpa [#allocation3], 0
    // Predicated region
    $region2: #{medical_qa_forward.4} parent=1 // pred_check
      _
    $region3: #{medical_qa_forward.4} parent=1 // pred_check_branch
      %12 = sbr.rel (0) target = $region5
    $region4: #{medical_qa_forward.4} parent=1 // pred_region
      _
    $region5: #{medical_qa_forward.4} parent=1 // pred_fallthru
      _
    // Predicated region
    $region6: #{medical_qa_forward.4} parent=1 // pred_check
      _
    $region7: #{medical_qa_forward.4} parent=1 // pred_check_branch
      %14 = sbr.rel (0) target = $region9
    $region8: #{medical_qa_forward.4} parent=1 // pred_region
      _
    $region9: #{medical_qa_forward.4} parent=1 // pred_fallthru
      _
    %v16 = vld [vmem:[%s1] sm:$0xff]
    %v17 = vld [vmem:[%s1 + $0x8] sm:$0xff]
    %v18 = vld [vmem:[%s1 + $0x10] sm:$0xff]
    %v19 = vld [vmem:[%s1 + $0x18] sm:$0xff]
    %v20 = vld [vmem:[%s1 + $0x20] sm:$0xff]
    %v21 = vld [vmem:[%s1 + $0x28] sm:$0xff]
    %v22 = vld [vmem:[%s1 + $0x30] sm:$0xff]
    %v23 = vld [vmem:[%s1 + $0x38] sm:$0xff]
    %v24 = vld [vmem:[%s0] sm:$0xff]
    %v25 = vld [vmem:[%s0 + $0x8] sm:$0xff]
    %v34 = vunpack.c.l.b16 %v16
    %v35 = vunpack.c.h.b16 %v16
    %v36 = vunpack.c.l.b16 %v17
    %v37 = vunpack.c.h.b16 %v17
    %v38 = vunpack.c.l.b16 %v18
    %v39 = vunpack.c.h.b16 %v18
    %v40 = vunpack.c.l.b16 %v19
    %v41 = vunpack.c.h.b16 %v19
    %v42 = vunpack.c.l.b16 %v20
    %v43 = vunpack.c.h.b16 %v20
    %v44 = vunpack.c.l.b16 %v21
    %v45 = vunpack.c.h.b16 %v21
    %v46 = vunpack.c.l.b16 %v22
    %v47 = vunpack.c.h.b16 %v22
    %v48 = vunpack.c.l.b16 %v23
    %v49 = vunpack.c.h.b16 %v23
    %v50 = vpack.c.b16 %v36, %v34
    %v51 = vpack.c.b16 %v37, %v35
    %v52 = vpack.c.b16 %v40, %v38
    %v53 = vpack.c.b16 %v41, %v39
    %v54 = vpack.c.b16 %v44, %v42
    %v55 = vpack.c.b16 %v45, %v43
    %v56 = vpack.c.b16 %v48, %v46
    %v57 = vpack.c.b16 %v49, %v47
    %vm66 = vcmask 523264
    %v68 = vsel %vm66, 0, 0
    %70 = vmatprep.subr.bf16.mxu0 0
    %71 = vmatpush1.bf16.msra.mxu0 0
    %72 = vmatprep.subr.bf16.mxu0 0
    %73 = vmatpush1.bf16.msra.mxu0 0
    %74 = vmatprep.subr.bf16.mxu0 0
    %75 = vmatpush1.bf16.msra.mxu0 0
    %76 = vmatprep.subr.bf16.mxu0 0
    %77 = vmatpush1.bf16.msra.mxu0 0
    %78 = vmatprep.subr.bf16.mxu0 %v57
    %79 = vmatpush1.bf16.msra.mxu0 %v56
    %80 = vmatprep.subr.bf16.mxu0 %v55
    %81 = vmatpush1.bf16.msra.mxu0 %v54
    %82 = vmatprep.subr.bf16.mxu0 %v53
    %83 = vmatpush1.bf16.msra.mxu0 %v52
    %84 = vmatprep.subr.bf16.mxu0 %v51
    %85 = vmatpush1.bf16.msra.mxu0 %v50
    %86 = vmatprep.subr.bf16.mxu0 0
    %87 = vmatpush2.bf16.msra.mxu0 0
    %88 = vmatprep.subr.bf16.mxu0 0
    %89 = vmatpush2.bf16.msra.mxu0 0
    %90 = vmatprep.subr.bf16.mxu0 0
    %91 = vmatpush2.bf16.msra.mxu0 0
    %92 = vmatprep.subr.bf16.mxu0 0
    %93 = vmatpush2.bf16.msra.mxu0 0
    %94 = vmatprep.subr.bf16.mxu0 0
    %95 = vmatpush2.bf16.msra.mxu0 0
    %96 = vmatprep.subr.bf16.mxu0 0
    %97 = vmatpush2.bf16.msra.mxu0 0
    %98 = vmatprep.subr.bf16.mxu0 0
    %99 = vmatpush2.bf16.msra.mxu0 0
    %100 = vmatprep.subr.bf16.mxu0 0
    %101 = vmatpush2.bf16.msra.mxu0 0
    %102 = vmatprep.mubr.bf16.mxu0 0
    %103 = vmatmul.mubr.bf16.gmra.mxu0 %v68
    %v104 = vpop.f32.mrf.mxu0
    %v105 = vadd.f32 0.0, %v104
    %v106 = vpop.f32.mrf.mxu0
    %v107 = vadd.f32 0.0, %v106
    %v108 = vpop.f32.mrf.mxu0
    %v109 = vpop.f32.mrf.mxu0
    %110 = vdwg.mxu0
    %v111 = vadd.f32 %v24, %v105
    %v112 = vadd.f32 %v25, %v107
    %v113 = vxor.u32 %v111, 2147483648
    %v114 = vxor.u32 %v112, 2147483648
    %v115 = vmul.f32 %v113, 1.442695
    %v116 = vpow.pop %v115
    %v117 = vmul.f32 %v114, 1.442695
    %v118 = vpow.pop %v117
    %v119 = vadd.f32 %v116, 1.0
    %v120 = vadd.f32 %v118, 1.0
    %v121 = vrcp.pop %v119
    %v122 = vmul.f32 1.0, %v121
    %v123 = vrcp.pop %v120
    %v124 = vmul.f32 1.0, %v123
    %v125 = vtanh.pop %v112
    %v126 = vmul.f32 %v122, 0.0
    %128 = vrot.lane.b32.xlu0 %v125, 64
    %v129 = vpop.permute.xlu0 %128
    %v131 = vmul.f32 %v122, %v129
    %133 = vrot.lane.b32.xlu0 %v131, 64
    %v134 = vpop.permute.xlu0 %133
    %v136 = vadd.f32 %v126, %v134
    %v137 = vtanh.pop %v136
    %139 = vrot.lane.b32.xlu0 %v137, 64
    %v140 = vpop.permute.xlu0 %139
    %v142 = vmul.f32 %v124, %v140
    %v143 = vpack.c.bf16 %v142, %v142
    %vm144 = vcmask 257024
    %145 = vst.msk [vmem:[#allocation2] sm:$0xf] %vm144, %v143
    %s146 = scalar_lea.vmem [#allocation2], 28
    %vm147 = vcmask 519424
    %148 = vst.msk [vmem:[%s146] sm:$0xf] %vm147, %v143
    %s149 = scalar_lea.vmem %s0, 16
    %v150 = vld [vmem:[%s149] sm:$0xff]
    %v151 = vld [vmem:[%s149 + $0x8] sm:$0xff]
    %v153 = vsel %vm66, %v143, 0
    %155 = vmatprep.subr.bf16.mxu0 0
    %156 = vmatpush1.bf16.msra.mxu0 0
    %157 = vmatprep.subr.bf16.mxu0 0
    %158 = vmatpush1.bf16.msra.mxu0 0
    %159 = vmatprep.subr.bf16.mxu0 0
    %160 = vmatpush1.bf16.msra.mxu0 0
    %161 = vmatprep.subr.bf16.mxu0 0
    %162 = vmatpush1.bf16.msra.mxu0 0
    %163 = vmatprep.subr.bf16.mxu0 %v57
    %164 = vmatpush1.bf16.msra.mxu0 %v56
    %165 = vmatprep.subr.bf16.mxu0 %v55
    %166 = vmatpush1.bf16.msra.mxu0 %v54
    %167 = vmatprep.subr.bf16.mxu0 %v53
    %168 = vmatpush1.bf16.msra.mxu0 %v52
    %169 = vmatprep.subr.bf16.mxu0 %v51
    %170 = vmatpush1.bf16.msra.mxu0 %v50
    %171 = vmatprep.subr.bf16.mxu0 0
    %172 = vmatpush2.bf16.msra.mxu0 0
    %173 = vmatprep.subr.bf16.mxu0 0
    %174 = vmatpush2.bf16.msra.mxu0 0
    %175 = vmatprep.subr.bf16.mxu0 0
    %176 = vmatpush2.bf16.msra.mxu0 0
    %177 = vmatprep.subr.bf16.mxu0 0
    %178 = vmatpush2.bf16.msra.mxu0 0
    %179 = vmatprep.subr.bf16.mxu0 0
    %180 = vmatpush2.bf16.msra.mxu0 0
    %181 = vmatprep.subr.bf16.mxu0 0
    %182 = vmatpush2.bf16.msra.mxu0 0
    %183 = vmatprep.subr.bf16.mxu0 0
    %184 = vmatpush2.bf16.msra.mxu0 0
    %185 = vmatprep.subr.bf16.mxu0 0
    %186 = vmatpush2.bf16.msra.mxu0 0
    %187 = vmatprep.mubr.bf16.mxu0 0
    %188 = vmatmul.mubr.bf16.gmra.mxu0 %v153
    %v189 = vpop.f32.mrf.mxu0
    %v190 = vadd.f32 0.0, %v189
    %v191 = vpop.f32.mrf.mxu0
    %v192 = vadd.f32 0.0, %v191
    %v193 = vpop.f32.mrf.mxu0
    %v194 = vpop.f32.mrf.mxu0
    %195 = vdwg.mxu0
    %v196 = vadd.f32 %v150, %v190
    %v197 = vadd.f32 %v151, %v192
    %v198 = vxor.u32 %v196, 2147483648
    %v199 = vxor.u32 %v197, 2147483648
    %v200 = vmul.f32 %v198, 1.442695
    %v201 = vpow.pop %v200
    %v202 = vmul.f32 %v199, 1.442695
    %v203 = vpow.pop %v202
    %v204 = vadd.f32 %v201, 1.0
    %v205 = vadd.f32 %v203, 1.0
    %v206 = vrcp.pop %v204
    %v207 = vmul.f32 1.0, %v206
    %v208 = vrcp.pop %v205
    %v209 = vmul.f32 1.0, %v208
    %v210 = vtanh.pop %v197
    %v211 = vmul.f32 %v207, %v136
    %213 = vrot.lane.b32.xlu0 %v210, 64
    %v214 = vpop.permute.xlu0 %213
    %v216 = vmul.f32 %v207, %v214
    %218 = vrot.lane.b32.xlu0 %v216, 64
    %v219 = vpop.permute.xlu0 %218
    %v221 = vadd.f32 %v211, %v219
    %v222 = vtanh.pop %v221
    %224 = vrot.lane.b32.xlu0 %v222, 64
    %v225 = vpop.permute.xlu0 %224
    %v227 = vmul.f32 %v209, %v225
    %v228 = vpack.c.bf16 %v227, %v227
    %s229 = scalar_lea.vmem [#allocation2], 4
    %230 = vst.msk [vmem:[%s229] sm:$0xf] %vm144, %v228
    %s231 = scalar_lea.vmem [#allocation2], 24
    %232 = vst.msk [vmem:[%s231] sm:$0xf] %vm147, %v228
    %s233 = scalar_lea.vmem %s0, 32
    %v234 = vld [vmem:[%s233] sm:$0xff]
    %v235 = vld [vmem:[%s233 + $0x8] sm:$0xff]
    %v237 = vsel %vm66, %v228, 0
    %239 = vmatprep.subr.bf16.mxu0 0
    %240 = vmatpush1.bf16.msra.mxu0 0
    %241 = vmatprep.subr.bf16.mxu0 0
    %242 = vmatpush1.bf16.msra.mxu0 0
    %243 = vmatprep.subr.bf16.mxu0 0
    %244 = vmatpush1.bf16.msra.mxu0 0
    %245 = vmatprep.subr.bf16.mxu0 0
    %246 = vmatpush1.bf16.msra.mxu0 0
    %247 = vmatprep.subr.bf16.mxu0 %v57
    %248 = vmatpush1.bf16.msra.mxu0 %v56
    %249 = vmatprep.subr.bf16.mxu0 %v55
    %250 = vmatpush1.bf16.msra.mxu0 %v54
    %251 = vmatprep.subr.bf16.mxu0 %v53
    %252 = vmatpush1.bf16.msra.mxu0 %v52
    %253 = vmatprep.subr.bf16.mxu0 %v51
    %254 = vmatpush1.bf16.msra.mxu0 %v50
    %255 = vmatprep.subr.bf16.mxu0 0
    %256 = vmatpush2.bf16.msra.mxu0 0
    %257 = vmatprep.subr.bf16.mxu0 0
    %258 = vmatpush2.bf16.msra.mxu0 0
    %259 = vmatprep.subr.bf16.mxu0 0
    %260 = vmatpush2.bf16.msra.mxu0 0
    %261 = vmatprep.subr.bf16.mxu0 0
    %262 = vmatpush2.bf16.msra.mxu0 0
    %263 = vmatprep.subr.bf16.mxu0 0
    %264 = vmatpush2.bf16.msra.mxu0 0
    %265 = vmatprep.subr.bf16.mxu0 0
    %266 = vmatpush2.bf16.msra.mxu0 0
    %267 = vmatprep.subr.bf16.mxu0 0
    %268 = vmatpush2.bf16.msra.mxu0 0
    %269 = vmatprep.subr.bf16.mxu0 0
    %270 = vmatpush2.bf16.msra.mxu0 0
    %271 = vmatprep.mubr.bf16.mxu0 0
    %272 = vmatmul.mubr.bf16.gmra.mxu0 %v237
    %v273 = vpop.f32.mrf.mxu0
    %v274 = vadd.f32 0.0, %v273
    %v275 = vpop.f32.mrf.mxu0
    %v276 = vadd.f32 0.0, %v275
    %v277 = vpop.f32.mrf.mxu0
    %v278 = vpop.f32.mrf.mxu0
    %279 = vdwg.mxu0
    %v280 = vadd.f32 %v234, %v274
    %v281 = vadd.f32 %v235, %v276
    %v282 = vxor.u32 %v280, 2147483648
    %v283 = vxor.u32 %v281, 2147483648
    %v284 = vmul.f32 %v282, 1.442695
    %v285 = vpow.pop %v284
    %v286 = vmul.f32 %v283, 1.442695
    %v287 = vpow.pop %v286
    %v288 = vadd.f32 %v285, 1.0
    %v289 = vadd.f32 %v287, 1.0
    %v290 = vrcp.pop %v288
    %v291 = vmul.f32 1.0, %v290
    %v292 = vrcp.pop %v289
    %v293 = vmul.f32 1.0, %v292
    %v294 = vtanh.pop %v281
    %v295 = vmul.f32 %v291, %v221
    %297 = vrot.lane.b32.xlu0 %v294, 64
    %v298 = vpop.permute.xlu0 %297
    %v300 = vmul.f32 %v291, %v298
    %302 = vrot.lane.b32.xlu0 %v300, 64
    %v303 = vpop.permute.xlu0 %302
    %v305 = vadd.f32 %v295, %v303
    %v306 = vtanh.pop %v305
    %308 = vrot.lane.b32.xlu0 %v306, 64
    %v309 = vpop.permute.xlu0 %308
    %v311 = vmul.f32 %v293, %v309
    %v312 = vpack.c.bf16 %v311, %v311
    %s313 = scalar_lea.vmem [#allocation2], 8
    %314 = vst.msk [vmem:[%s313] sm:$0xf] %vm144, %v312
    %s315 = scalar_lea.vmem [#allocation2], 20
    %316 = vst.msk [vmem:[%s315] sm:$0xf] %vm147, %v312
    %s317 = scalar_lea.vmem %s0, 48
    %v318 = vld [vmem:[%s317] sm:$0xff]
    %v319 = vld [vmem:[%s317 + $0x8] sm:$0xff]
    %v321 = vsel %vm66, %v312, 0
    %323 = vmatprep.subr.bf16.mxu0 0
    %324 = vmatpush1.bf16.msra.mxu0 0
    %325 = vmatprep.subr.bf16.mxu0 0
    %326 = vmatpush1.bf16.msra.mxu0 0
    %327 = vmatprep.subr.bf16.mxu0 0
    %328 = vmatpush1.bf16.msra.mxu0 0
    %329 = vmatprep.subr.bf16.mxu0 0
    %330 = vmatpush1.bf16.msra.mxu0 0
    %331 = vmatprep.subr.bf16.mxu0 %v57
    %332 = vmatpush1.bf16.msra.mxu0 %v56
    %333 = vmatprep.subr.bf16.mxu0 %v55
    %334 = vmatpush1.bf16.msra.mxu0 %v54
    %335 = vmatprep.subr.bf16.mxu0 %v53
    %336 = vmatpush1.bf16.msra.mxu0 %v52
    %337 = vmatprep.subr.bf16.mxu0 %v51
    %338 = vmatpush1.bf16.msra.mxu0 %v50
    %339 = vmatprep.subr.bf16.mxu0 0
    %340 = vmatpush2.bf16.msra.mxu0 0
    %341 = vmatprep.subr.bf16.mxu0 0
    %342 = vmatpush2.bf16.msra.mxu0 0
    %343 = vmatprep.subr.bf16.mxu0 0
    %344 = vmatpush2.bf16.msra.mxu0 0
    %345 = vmatprep.subr.bf16.mxu0 0
    %346 = vmatpush2.bf16.msra.mxu0 0
    %347 = vmatprep.subr.bf16.mxu0 0
    %348 = vmatpush2.bf16.msra.mxu0 0
    %349 = vmatprep.subr.bf16.mxu0 0
    %350 = vmatpush2.bf16.msra.mxu0 0
    %351 = vmatprep.subr.bf16.mxu0 0
    %352 = vmatpush2.bf16.msra.mxu0 0
    %353 = vmatprep.subr.bf16.mxu0 0
    %354 = vmatpush2.bf16.msra.mxu0 0
    %355 = vmatprep.mubr.bf16.mxu0 0
    %356 = vmatmul.mubr.bf16.gmra.mxu0 %v321
    %v357 = vpop.f32.mrf.mxu0
    %v358 = vadd.f32 0.0, %v357
    %v359 = vpop.f32.mrf.mxu0
    %v360 = vadd.f32 0.0, %v359
    %v361 = vpop.f32.mrf.mxu0
    %v362 = vpop.f32.mrf.mxu0
    %363 = vdwg.mxu0
    %v364 = vadd.f32 %v318, %v358
    %v365 = vadd.f32 %v319, %v360
    %v366 = vxor.u32 %v364, 2147483648
    %v367 = vxor.u32 %v365, 2147483648
    %v368 = vmul.f32 %v366, 1.442695
    %v369 = vpow.pop %v368
    %v370 = vmul.f32 %v367, 1.442695
    %v371 = vpow.pop %v370
    %v372 = vadd.f32 %v369, 1.0
    %v373 = vadd.f32 %v371, 1.0
    %v374 = vrcp.pop %v372
    %v375 = vmul.f32 1.0, %v374
    %v376 = vrcp.pop %v373
    %v377 = vmul.f32 1.0, %v376
    %v378 = vtanh.pop %v365
    %v379 = vmul.f32 %v375, %v305
    %381 = vrot.lane.b32.xlu0 %v378, 64
    %v382 = vpop.permute.xlu0 %381
    %v384 = vmul.f32 %v375, %v382
    %386 = vrot.lane.b32.xlu0 %v384, 64
    %v387 = vpop.permute.xlu0 %386
    %v389 = vadd.f32 %v379, %v387
    %v390 = vtanh.pop %v389
    %392 = vrot.lane.b32.xlu0 %v390, 64
    %v393 = vpop.permute.xlu0 %392
    %v395 = vmul.f32 %v377, %v393
    %v396 = vpack.c.bf16 %v395, %v395
    %s397 = scalar_lea.vmem [#allocation2], 12
    %398 = vst.msk [vmem:[%s397] sm:$0xf] %vm144, %v396
    %s399 = scalar_lea.vmem [#allocation2], 16
    %400 = vst.msk [vmem:[%s399] sm:$0xf] %vm147, %v396
    %s401 = scalar_lea.vmem %s0, 64
    %v402 = vld [vmem:[%s401] sm:$0xff]
    %v403 = vld [vmem:[%s401 + $0x8] sm:$0xff]
    %v405 = vsel %vm66, %v396, 0
    %407 = vmatprep.subr.bf16.mxu0 0
    %408 = vmatpush1.bf16.msra.mxu0 0
    %409 = vmatprep.subr.bf16.mxu0 0
    %410 = vmatpush1.bf16.msra.mxu0 0
    %411 = vmatprep.subr.bf16.mxu0 0
    %412 = vmatpush1.bf16.msra.mxu0 0
    %413 = vmatprep.subr.bf16.mxu0 0
    %414 = vmatpush1.bf16.msra.mxu0 0
    %415 = vmatprep.subr.bf16.mxu0 %v57
    %416 = vmatpush1.bf16.msra.mxu0 %v56
    %417 = vmatprep.subr.bf16.mxu0 %v55
    %418 = vmatpush1.bf16.msra.mxu0 %v54
    %419 = vmatprep.subr.bf16.mxu0 %v53
    %420 = vmatpush1.bf16.msra.mxu0 %v52
    %421 = vmatprep.subr.bf16.mxu0 %v51
    %422 = vmatpush1.bf16.msra.mxu0 %v50
    %423 = vmatprep.subr.bf16.mxu0 0
    %424 = vmatpush2.bf16.msra.mxu0 0
    %425 = vmatprep.subr.bf16.mxu0 0
    %426 = vmatpush2.bf16.msra.mxu0 0
    %427 = vmatprep.subr.bf16.mxu0 0
    %428 = vmatpush2.bf16.msra.mxu0 0
    %429 = vmatprep.subr.bf16.mxu0 0
    %430 = vmatpush2.bf16.msra.mxu0 0
    %431 = vmatprep.subr.bf16.mxu0 0
    %432 = vmatpush2.bf16.msra.mxu0 0
    %433 = vmatprep.subr.bf16.mxu0 0
    %434 = vmatpush2.bf16.msra.mxu0 0
    %435 = vmatprep.subr.bf16.mxu0 0
    %436 = vmatpush2.bf16.msra.mxu0 0
    %437 = vmatprep.subr.bf16.mxu0 0
    %438 = vmatpush2.bf16.msra.mxu0 0
    %439 = vmatprep.mubr.bf16.mxu0 0
    %440 = vmatmul.mubr.bf16.gmra.mxu0 %v405
    %v441 = vpop.f32.mrf.mxu0
    %v442 = vadd.f32 0.0, %v441
    %v443 = vpop.f32.mrf.mxu0
    %v444 = vadd.f32 0.0, %v443
    %v445 = vpop.f32.mrf.mxu0
    %v446 = vpop.f32.mrf.mxu0
    %447 = vdwg.mxu0
    %v448 = vadd.f32 %v402, %v442
    %v449 = vadd.f32 %v403, %v444
    %v450 = vxor.u32 %v448, 2147483648
    %v451 = vxor.u32 %v449, 2147483648
    %v452 = vmul.f32 %v450, 1.442695
    %v453 = vpow.pop %v452
    %v454 = vmul.f32 %v451, 1.442695
    %v455 = vpow.pop %v454
    %v456 = vadd.f32 %v453, 1.0
    %v457 = vadd.f32 %v455, 1.0
    %v458 = vrcp.pop %v456
    %v459 = vmul.f32 1.0, %v458
    %v460 = vrcp.pop %v457
    %v461 = vmul.f32 1.0, %v460
    %v462 = vtanh.pop %v449
    %v463 = vmul.f32 %v459, %v389
    %465 = vrot.lane.b32.xlu0 %v462, 64
    %v466 = vpop.permute.xlu0 %465
    %v468 = vmul.f32 %v459, %v466
    %470 = vrot.lane.b32.xlu0 %v468, 64
    %v471 = vpop.permute.xlu0 %470
    %v473 = vadd.f32 %v463, %v471
    %v474 = vtanh.pop %v473
    %476 = vrot.lane.b32.xlu0 %v474, 64
    %v477 = vpop.permute.xlu0 %476
    %v479 = vmul.f32 %v461, %v477
    %v480 = vpack.c.bf16 %v479, %v479
    %481 = vst.msk [vmem:[%s399] sm:$0xf] %vm144, %v480
    %482 = vst.msk [vmem:[%s397] sm:$0xf] %vm147, %v480
    %s483 = scalar_lea.vmem %s0, 80
    %v484 = vld [vmem:[%s483] sm:$0xff]
    %v485 = vld [vmem:[%s483 + $0x8] sm:$0xff]
    %v487 = vsel %vm66, %v480, 0
    %489 = vmatprep.subr.bf16.mxu0 0
    %490 = vmatpush1.bf16.msra.mxu0 0
    %491 = vmatprep.subr.bf16.mxu0 0
    %492 = vmatpush1.bf16.msra.mxu0 0
    %493 = vmatprep.subr.bf16.mxu0 0
    %494 = vmatpush1.bf16.msra.mxu0 0
    %495 = vmatprep.subr.bf16.mxu0 0
    %496 = vmatpush1.bf16.msra.mxu0 0
    %497 = vmatprep.subr.bf16.mxu0 %v57
    %498 = vmatpush1.bf16.msra.mxu0 %v56
    %499 = vmatprep.subr.bf16.mxu0 %v55
    %500 = vmatpush1.bf16.msra.mxu0 %v54
    %501 = vmatprep.subr.bf16.mxu0 %v53
    %502 = vmatpush1.bf16.msra.mxu0 %v52
    %503 = vmatprep.subr.bf16.mxu0 %v51
    %504 = vmatpush1.bf16.msra.mxu0 %v50
    %505 = vmatprep.subr.bf16.mxu0 0
    %506 = vmatpush2.bf16.msra.mxu0 0
    %507 = vmatprep.subr.bf16.mxu0 0
    %508 = vmatpush2.bf16.msra.mxu0 0
    %509 = vmatprep.subr.bf16.mxu0 0
    %510 = vmatpush2.bf16.msra.mxu0 0
    %511 = vmatprep.subr.bf16.mxu0 0
    %512 = vmatpush2.bf16.msra.mxu0 0
    %513 = vmatprep.subr.bf16.mxu0 0
    %514 = vmatpush2.bf16.msra.mxu0 0
    %515 = vmatprep.subr.bf16.mxu0 0
    %516 = vmatpush2.bf16.msra.mxu0 0
    %517 = vmatprep.subr.bf16.mxu0 0
    %518 = vmatpush2.bf16.msra.mxu0 0
    %519 = vmatprep.subr.bf16.mxu0 0
    %520 = vmatpush2.bf16.msra.mxu0 0
    %521 = vmatprep.mubr.bf16.mxu0 0
    %522 = vmatmul.mubr.bf16.gmra.mxu0 %v487
    %v523 = vpop.f32.mrf.mxu0
    %v524 = vadd.f32 0.0, %v523
    %v525 = vpop.f32.mrf.mxu0
    %v526 = vadd.f32 0.0, %v525
    %v527 = vpop.f32.mrf.mxu0
    %v528 = vpop.f32.mrf.mxu0
    %529 = vdwg.mxu0
    %v530 = vadd.f32 %v484, %v524
    %v531 = vadd.f32 %v485, %v526
    %v532 = vxor.u32 %v530, 2147483648
    %v533 = vxor.u32 %v531, 2147483648
    %v534 = vmul.f32 %v532, 1.442695
    %v535 = vpow.pop %v534
    %v536 = vmul.f32 %v533, 1.442695
    %v537 = vpow.pop %v536
    %v538 = vadd.f32 %v535, 1.0
    %v539 = vadd.f32 %v537, 1.0
    %v540 = vrcp.pop %v538
    %v541 = vmul.f32 1.0, %v540
    %v542 = vrcp.pop %v539
    %v543 = vmul.f32 1.0, %v542
    %v544 = vtanh.pop %v531
    %v545 = vmul.f32 %v541, %v473
    %547 = vrot.lane.b32.xlu0 %v544, 64
    %v548 = vpop.permute.xlu0 %547
    %v550 = vmul.f32 %v541, %v548
    %552 = vrot.lane.b32.xlu0 %v550, 64
    %v553 = vpop.permute.xlu0 %552
    %v555 = vadd.f32 %v545, %v553
    %v556 = vtanh.pop %v555
    %558 = vrot.lane.b32.xlu0 %v556, 64
    %v559 = vpop.permute.xlu0 %558
    %v561 = vmul.f32 %v543, %v559
    %v562 = vpack.c.bf16 %v561, %v561
    %563 = vst.msk [vmem:[%s315] sm:$0xf] %vm144, %v562
    %564 = vst.msk [vmem:[%s313] sm:$0xf] %vm147, %v562
    %s565 = scalar_lea.vmem %s0, 96
    %v566 = vld [vmem:[%s565] sm:$0xff]
    %v567 = vld [vmem:[%s565 + $0x8] sm:$0xff]
    %v569 = vsel %vm66, %v562, 0
    %571 = vmatprep.subr.bf16.mxu0 0
    %572 = vmatpush1.bf16.msra.mxu0 0
    %573 = vmatprep.subr.bf16.mxu0 0
    %574 = vmatpush1.bf16.msra.mxu0 0
    %575 = vmatprep.subr.bf16.mxu0 0
    %576 = vmatpush1.bf16.msra.mxu0 0
    %577 = vmatprep.subr.bf16.mxu0 0
    %578 = vmatpush1.bf16.msra.mxu0 0
    %579 = vmatprep.subr.bf16.mxu0 %v57
    %580 = vmatpush1.bf16.msra.mxu0 %v56
    %581 = vmatprep.subr.bf16.mxu0 %v55
    %582 = vmatpush1.bf16.msra.mxu0 %v54
    %583 = vmatprep.subr.bf16.mxu0 %v53
    %584 = vmatpush1.bf16.msra.mxu0 %v52
    %585 = vmatprep.subr.bf16.mxu0 %v51
    %586 = vmatpush1.bf16.msra.mxu0 %v50
    %587 = vmatprep.subr.bf16.mxu0 0
    %588 = vmatpush2.bf16.msra.mxu0 0
    %589 = vmatprep.subr.bf16.mxu0 0
    %590 = vmatpush2.bf16.msra.mxu0 0
    %591 = vmatprep.subr.bf16.mxu0 0
    %592 = vmatpush2.bf16.msra.mxu0 0
    %593 = vmatprep.subr.bf16.mxu0 0
    %594 = vmatpush2.bf16.msra.mxu0 0
    %595 = vmatprep.subr.bf16.mxu0 0
    %596 = vmatpush2.bf16.msra.mxu0 0
    %597 = vmatprep.subr.bf16.mxu0 0
    %598 = vmatpush2.bf16.msra.mxu0 0
    %599 = vmatprep.subr.bf16.mxu0 0
    %600 = vmatpush2.bf16.msra.mxu0 0
    %601 = vmatprep.subr.bf16.mxu0 0
    %602 = vmatpush2.bf16.msra.mxu0 0
    %603 = vmatprep.mubr.bf16.mxu0 0
    %604 = vmatmul.mubr.bf16.gmra.mxu0 %v569
    %v605 = vpop.f32.mrf.mxu0
    %v606 = vadd.f32 0.0, %v605
    %v607 = vpop.f32.mrf.mxu0
    %v608 = vadd.f32 0.0, %v607
    %v609 = vpop.f32.mrf.mxu0
    %v610 = vpop.f32.mrf.mxu0
    %611 = vdwg.mxu0
    %v612 = vadd.f32 %v566, %v606
    %v613 = vadd.f32 %v567, %v608
    %v614 = vxor.u32 %v612, 2147483648
    %v615 = vxor.u32 %v613, 2147483648
    %v616 = vmul.f32 %v614, 1.442695
    %v617 = vpow.pop %v616
    %v618 = vmul.f32 %v615, 1.442695
    %v619 = vpow.pop %v618
    %v620 = vadd.f32 %v617, 1.0
    %v621 = vadd.f32 %v619, 1.0
    %v622 = vrcp.pop %v620
    %v623 = vmul.f32 1.0, %v622
    %v624 = vrcp.pop %v621
    %v625 = vmul.f32 1.0, %v624
    %v626 = vtanh.pop %v613
    %v627 = vmul.f32 %v623, %v555
    %629 = vrot.lane.b32.xlu0 %v626, 64
    %v630 = vpop.permute.xlu0 %629
    %v632 = vmul.f32 %v623, %v630
    %634 = vrot.lane.b32.xlu0 %v632, 64
    %v635 = vpop.permute.xlu0 %634
    %v637 = vadd.f32 %v627, %v635
    %v638 = vtanh.pop %v637
    %640 = vrot.lane.b32.xlu0 %v638, 64
    %v641 = vpop.permute.xlu0 %640
    %v643 = vmul.f32 %v625, %v641
    %v644 = vpack.c.bf16 %v643, %v643
    %645 = vst.msk [vmem:[%s231] sm:$0xf] %vm144, %v644
    %646 = vst.msk [vmem:[%s229] sm:$0xf] %vm147, %v644
    %s647 = scalar_lea.vmem %s0, 112
    %v648 = vld [vmem:[%s647] sm:$0xff]
    %v649 = vld [vmem:[%s647 + $0x8] sm:$0xff]
    %v651 = vsel %vm66, %v644, 0
    %653 = vmatprep.subr.bf16.mxu0 0
    %654 = vmatpush1.bf16.msra.mxu0 0
    %655 = vmatprep.subr.bf16.mxu0 0
    %656 = vmatpush1.bf16.msra.mxu0 0
    %657 = vmatprep.subr.bf16.mxu0 0
    %658 = vmatpush1.bf16.msra.mxu0 0
    %659 = vmatprep.subr.bf16.mxu0 0
    %660 = vmatpush1.bf16.msra.mxu0 0
    %661 = vmatprep.subr.bf16.mxu0 %v57
    %662 = vmatpush1.bf16.msra.mxu0 %v56
    %663 = vmatprep.subr.bf16.mxu0 %v55
    %664 = vmatpush1.bf16.msra.mxu0 %v54
    %665 = vmatprep.subr.bf16.mxu0 %v53
    %666 = vmatpush1.bf16.msra.mxu0 %v52
    %667 = vmatprep.subr.bf16.mxu0 %v51
    %668 = vmatpush1.bf16.msra.mxu0 %v50
    %669 = vmatprep.subr.bf16.mxu0 0
    %670 = vmatpush2.bf16.msra.mxu0 0
    %671 = vmatprep.subr.bf16.mxu0 0
    %672 = vmatpush2.bf16.msra.mxu0 0
    %673 = vmatprep.subr.bf16.mxu0 0
    %674 = vmatpush2.bf16.msra.mxu0 0
    %675 = vmatprep.subr.bf16.mxu0 0
    %676 = vmatpush2.bf16.msra.mxu0 0
    %677 = vmatprep.subr.bf16.mxu0 0
    %678 = vmatpush2.bf16.msra.mxu0 0
    %679 = vmatprep.subr.bf16.mxu0 0
    %680 = vmatpush2.bf16.msra.mxu0 0
    %681 = vmatprep.subr.bf16.mxu0 0
    %682 = vmatpush2.bf16.msra.mxu0 0
    %683 = vmatprep.subr.bf16.mxu0 0
    %684 = vmatpush2.bf16.msra.mxu0 0
    %685 = vmatprep.mubr.bf16.mxu0 0
    %686 = vmatmul.mubr.bf16.gmra.mxu0 %v651
    %v687 = vpop.f32.mrf.mxu0
    %v688 = vadd.f32 0.0, %v687
    %v689 = vpop.f32.mrf.mxu0
    %v690 = vadd.f32 0.0, %v689
    %v691 = vpop.f32.mrf.mxu0
    %v692 = vpop.f32.mrf.mxu0
    %693 = vdwg.mxu0
    %v694 = vadd.f32 %v648, %v688
    %v695 = vadd.f32 %v649, %v690
    %v696 = vxor.u32 %v694, 2147483648
    %v697 = vxor.u32 %v695, 2147483648
    %v698 = vmul.f32 %v696, 1.442695
    %v699 = vpow.pop %v698
    %v700 = vmul.f32 %v697, 1.442695
    %v701 = vpow.pop %v700
    %v702 = vadd.f32 %v699, 1.0
    %v703 = vadd.f32 %v701, 1.0
    %v704 = vrcp.pop %v702
    %v705 = vmul.f32 1.0, %v704
    %v706 = vrcp.pop %v703
    %v707 = vmul.f32 1.0, %v706
    %v708 = vtanh.pop %v695
    %v709 = vmul.f32 %v705, %v637
    %711 = vrot.lane.b32.xlu0 %v708, 64
    %v712 = vpop.permute.xlu0 %711
    %v714 = vmul.f32 %v705, %v712
    %716 = vrot.lane.b32.xlu0 %v714, 64
    %v717 = vpop.permute.xlu0 %716
    %v719 = vadd.f32 %v709, %v717
    %v720 = vtanh.pop %v719
    %722 = vrot.lane.b32.xlu0 %v720, 64
    %v723 = vpop.permute.xlu0 %722
    %v725 = vmul.f32 %v707, %v723
    %v726 = vpack.c.bf16 %v725, %v725
    %727 = vst.msk [vmem:[%s146] sm:$0xf] %vm144, %v726
    %728 = vst.msk [vmem:[#allocation2] sm:$0xf] %vm147, %v726
    %729 = vst.msk [vmem:[%s3] sm:$0xff] %vm66, %v725
    %731 = vrot.lane.b32.xlu0 %v719, 64
    %v732 = vpop.permute.xlu0 %731
    %734 = vst.msk [vmem:[%s4] sm:$0xff] %vm66, %v732
    // Predicated region
    $region10: #{medical_qa_forward.4} parent=1 // pred_check
      _
    $region11: #{medical_qa_forward.4} parent=1 // pred_check_branch
      %736 = sbr.rel (0) target = $region13
    $region12: #{medical_qa_forward.4} parent=1 // pred_region
      %s738 = ssub.s32 512, 512
      %739 = vsyncadd [#allocation3], %s738
      %s740 = sshll.u32 [#allocation2], 4
      %s741 = int_to_ptr.vmem [resolvable:$true] %s740
      %746 = dma.vmem_to_hbm [thread:$0]  %s741, 512, %s2, [#allocation3], 64, 64, 4
    $region13: #{medical_qa_forward.4} parent=1 // pred_fallthru
      _
    // Predicated region
    $region14: #{medical_qa_forward.4} parent=1 // pred_check
      _
    $region15: #{medical_qa_forward.4} parent=1 // pred_check_branch
      %748 = sbr.rel (0) target = $region17
    $region16: #{medical_qa_forward.4} parent=1 // pred_region
      _
    $region17: #{medical_qa_forward.4} parent=1 // pred_fallthru
      _
    // Predicated region
    $region18: #{medical_qa_forward.4} parent=1 // pred_check
      _
    $region19: #{medical_qa_forward.4} parent=1 // pred_check_branch
      %750 = sbr.rel (0) target = $region21
    $region20: #{medical_qa_forward.4} parent=1 // pred_region
      _
    $region21: #{medical_qa_forward.4} parent=1 // pred_fallthru
      _
    // Predicated region
    $region22: #{medical_qa_forward.4} parent=1 // pred_check
      _
    $region23: #{medical_qa_forward.4} parent=1 // pred_check_branch
      %752 = sbr.rel (0) target = $region25
    $region24: #{medical_qa_forward.4} parent=1 // pred_region
      %753 = dma.done [#allocation3], 512
    $region25: #{medical_qa_forward.4} parent=1 // pred_fallthru
      _
    // Predicated region
    $region26: #{medical_qa_forward.4} parent=1 // pred_check
      _
    $region27: #{medical_qa_forward.4} parent=1 // pred_check_branch
      %755 = sbr.rel (0) target = $region29
    $region28: #{medical_qa_forward.4} parent=1 // pred_region
      _
    $region29: #{medical_qa_forward.4} parent=1 // pred_fallthru
      _
    // Predicated region
    $region30: #{medical_qa_forward.4} parent=1 // pred_check
      _
    $region31: #{medical_qa_forward.4} parent=1 // pred_check_branch
      %757 = sbr.rel (0) target = $region33
    $region32: #{medical_qa_forward.4} parent=1 // pred_region
      _
    $region33: #{medical_qa_forward.4} parent=1 // pred_fallthru
      _
    %758 = vsyncpa [#allocation3], 1

// kernel: medical_qa_forward.5
$region0: #{medical_qa_forward.5}
  #allocation0 [shape = 'u32[]', space=smem, size = 0x4, offset = 0x4, fixed_abs, tag = 'smem constant byte address 0x4 - core index']
  #allocation1 [shape = 'u32[144,128]{1,0:T(1,128)}', space=vmem, size = 0x12000, scoped, tag = 'internal scratch']
  #allocation2 [shape = 'bf16[56,64]{1,0:T(8,128)(2,1)}', space=vmem, size = 0x3800, scoped, tag = 'scratch operand']
  %s0 = inlined_call_operand.vmem [shape: f32[7,8,256], index: 0, kind: input, shape index: {}]
  %s1 = inlined_call_operand.vmem [shape: f32[2,8,64], index: 1, kind: input, shape index: {}]
  %s2 = inlined_call_operand.vmem [shape: f32[2,8,64], index: 2, kind: input, shape index: {}]
  %s3 = inlined_call_operand.vmem [shape: bf16[64,256], index: 3, kind: input, shape index: {}]
  %s4 = inlined_call_operand.vmem [shape: bf16[128,256], index: 4, kind: input, shape index: {}]
  %s5 = inlined_call_operand.vmem [shape: f32[1,256], index: 5, kind: input, shape index: {}]
  %s6 = inlined_call_operand.vmem [shape: bf16[64,128], index: 6, kind: input, shape index: {}]
  %s7 = inlined_call_operand.vmem [shape: f32[1,128], index: 7, kind: input, shape index: {}]
  %s8 = inlined_call_operand.vmem [shape: f32[56,128], index: 8, kind: output, shape index: {}]
  %s9 = sld [smem:[#allocation0]]
  $region42: #{medical_qa_forward.5} parent=0
    _
  %s11 = ssub.s32 1, %s9
  %s12 = scalar_select 0, %s11, %s9
  // Predicated region
  $region2: #{medical_qa_forward.5} parent=0 // pred_check
    _
  $region3: #{medical_qa_forward.5} parent=0 // pred_check_branch
    %14 = sbr.rel (0) target = $region5
  $region4: #{medical_qa_forward.5} parent=0 // pred_region
    _
  $region5: #{medical_qa_forward.5} parent=0 // pred_fallthru
    _
  // Predicated region
  $region6: #{medical_qa_forward.5} parent=0 // pred_check
    _
  $region7: #{medical_qa_forward.5} parent=0 // pred_check_branch
    %16 = sbr.rel (0) target = $region9
  $region8: #{medical_qa_forward.5} parent=0 // pred_region
    _
  $region9: #{medical_qa_forward.5} parent=0 // pred_fallthru
    _
  // Predicated region
  $region10: #{medical_qa_forward.5} parent=0 // pred_check
    _
  $region11: #{medical_qa_forward.5} parent=0 // pred_check_branch
    %18 = sbr.rel (0) target = $region13
  $region12: #{medical_qa_forward.5} parent=0 // pred_region
    _
  $region13: #{medical_qa_forward.5} parent=0 // pred_fallthru
    _
  // Predicated region
  $region14: #{medical_qa_forward.5} parent=0 // pred_check
    _
  $region15: #{medical_qa_forward.5} parent=0 // pred_check_branch
    %20 = sbr.rel (0) target = $region17
  $region16: #{medical_qa_forward.5} parent=0 // pred_region
    _
  $region17: #{medical_qa_forward.5} parent=0 // pred_fallthru
    _
  // Predicated region
  $region18: #{medical_qa_forward.5} parent=0 // pred_check
    _
  $region19: #{medical_qa_forward.5} parent=0 // pred_check_branch
    %22 = sbr.rel (0) target = $region21
  $region20: #{medical_qa_forward.5} parent=0 // pred_region
    _
  $region21: #{medical_qa_forward.5} parent=0 // pred_fallthru
    _
  // Predicated region
  $region22: #{medical_qa_forward.5} parent=0 // pred_check
    _
  $region23: #{medical_qa_forward.5} parent=0 // pred_check_branch
    %24 = sbr.rel (0) target = $region25
  $region24: #{medical_qa_forward.5} parent=0 // pred_region
    _
  $region25: #{medical_qa_forward.5} parent=0 // pred_fallthru
    _
  // Predicated region
  $region26: #{medical_qa_forward.5} parent=0 // pred_check
    _
  $region27: #{medical_qa_forward.5} parent=0 // pred_check_branch
    %26 = sbr.rel (0) target = $region29
  $region28: #{medical_qa_forward.5} parent=0 // pred_region
    _
  $region29: #{medical_qa_forward.5} parent=0 // pred_fallthru
    _
  // Predicated region
  $region30: #{medical_qa_forward.5} parent=0 // pred_check
    _
  $region31: #{medical_qa_forward.5} parent=0 // pred_check_branch
    %28 = sbr.rel (0) target = $region33
  $region32: #{medical_qa_forward.5} parent=0 // pred_region
    _
  $region33: #{medical_qa_forward.5} parent=0 // pred_fallthru
    _
  %v30 = vld [vmem:[%s3] sm:$0xff]
  %v31 = vld [vmem:[%s3 + $0x8] sm:$0xff]
  %v32 = vld [vmem:[%s3 + $0x10] sm:$0xff]
  %v33 = vld [vmem:[%s3 + $0x18] sm:$0xff]
  %v34 = vld [vmem:[%s3 + $0x20] sm:$0xff]
  %v35 = vld [vmem:[%s3 + $0x28] sm:$0xff]
  %v36 = vld [vmem:[%s3 + $0x30] sm:$0xff]
  %v37 = vld [vmem:[%s3 + $0x38] sm:$0xff]
  %v38 = vld [vmem:[%s4] sm:$0xff]
  %v39 = vld [vmem:[%s4 + $0x8] sm:$0xff]
  %v40 = vld [vmem:[%s4 + $0x10] sm:$0xff]
  %v41 = vld [vmem:[%s4 + $0x18] sm:$0xff]
  %v42 = vld [vmem:[%s4 + $0x20] sm:$0xff]
  %v43 = vld [vmem:[%s4 + $0x28] sm:$0xff]
  %v44 = vld [vmem:[%s4 + $0x30] sm:$0xff]
  %v45 = vld [vmem:[%s4 + $0x38] sm:$0xff]
  %v46 = vld [vmem:[%s4 + $0x40] sm:$0xff]
  %v47 = vld [vmem:[%s4 + $0x48] sm:$0xff]
  %v48 = vld [vmem:[%s4 + $0x50] sm:$0xff]
  %v49 = vld [vmem:[%s4 + $0x58] sm:$0xff]
  %v50 = vld [vmem:[%s4 + $0x60] sm:$0xff]
  %v51 = vld [vmem:[%s4 + $0x68] sm:$0xff]
  %v52 = vld [vmem:[%s4 + $0x70] sm:$0xff]
  %v53 = vld [vmem:[%s4 + $0x78] sm:$0xff]
  %v54 = vld [vmem:[%s5] sm:$0x3]
  %v56 = vlaneseq
  %v57 = vshrl.u32 %v56, 7
  %v58 = vsub.s32 0, %v57
  %v59 = vrot.slane %v54, %v58
  %v60 = vlaneseq
  %v61 = vshrl.u32 %v60, 7
  %v62 = vsub.s32 1, %v61
  %v63 = vrot.slane %v54, %v62
  %v66 = vld [vmem:[%s1] sm:$0xff]
  %v67 = vld [vmem:[%s2] sm:$0xff]
  %s68 = scalar_lea.vmem %s1, 8
  %v69 = vld [vmem:[%s68] sm:$0xff]
  %s70 = scalar_lea.vmem %s2, 8
  %v71 = vld [vmem:[%s70] sm:$0xff]
  %v72 = vld [vmem:[%s0] sm:$0xff]
  %v73 = vld [vmem:[%s0 + $0x8] sm:$0xff]
  %v74 = vpack.c.bf16 %v66, %v66
  %v83 = vunpack.c.l.b16 %v30
  %v84 = vunpack.c.h.b16 %v30
  %v85 = vunpack.c.l.b16 %v31
  %v86 = vunpack.c.h.b16 %v31
  %v87 = vunpack.c.l.b16 %v32
  %v88 = vunpack.c.h.b16 %v32
  %v89 = vunpack.c.l.b16 %v33
  %v90 = vunpack.c.h.b16 %v33
  %v91 = vunpack.c.l.b16 %v34
  %v92 = vunpack.c.h.b16 %v34
  %v93 = vunpack.c.l.b16 %v35
  %v94 = vunpack.c.h.b16 %v35
  %v95 = vunpack.c.l.b16 %v36
  %v96 = vunpack.c.h.b16 %v36
  %v97 = vunpack.c.l.b16 %v37
  %v98 = vunpack.c.h.b16 %v37
  %v99 = vpack.c.b16 %v85, %v83
  %v100 = vpack.c.b16 %v86, %v84
  %v101 = vpack.c.b16 %v89, %v87
  %v102 = vpack.c.b16 %v90, %v88
  %v103 = vpack.c.b16 %v93, %v91
  %v104 = vpack.c.b16 %v94, %v92
  %v105 = vpack.c.b16 %v97, %v95
  %v106 = vpack.c.b16 %v98, %v96
  %vm115 = vcmask 523264
  %v117 = vsel %vm115, %v74, 0
  %119 = vmatprep.subr.bf16.mxu0 0
  %120 = vmatpush1.bf16.msra.mxu0 0
  %121 = vmatprep.subr.bf16.mxu0 0
  %122 = vmatpush1.bf16.msra.mxu0 0
  %123 = vmatprep.subr.bf16.mxu0 0
  %124 = vmatpush1.bf16.msra.mxu0 0
  %125 = vmatprep.subr.bf16.mxu0 0
  %126 = vmatpush1.bf16.msra.mxu0 0
  %127 = vmatprep.subr.bf16.mxu0 %v106
  %128 = vmatpush1.bf16.msra.mxu0 %v105
  %129 = vmatprep.subr.bf16.mxu0 %v104
  %130 = vmatpush1.bf16.msra.mxu0 %v103
  %131 = vmatprep.subr.bf16.mxu0 %v102
  %132 = vmatpush1.bf16.msra.mxu0 %v101
  %133 = vmatprep.subr.bf16.mxu0 %v100
  %134 = vmatpush1.bf16.msra.mxu0 %v99
  %135 = vmatprep.subr.bf16.mxu0 0
  %136 = vmatpush2.bf16.msra.mxu0 0
  %137 = vmatprep.subr.bf16.mxu0 0
  %138 = vmatpush2.bf16.msra.mxu0 0
  %139 = vmatprep.subr.bf16.mxu0 0
  %140 = vmatpush2.bf16.msra.mxu0 0
  %141 = vmatprep.subr.bf16.mxu0 0
  %142 = vmatpush2.bf16.msra.mxu0 0
  %143 = vmatprep.subr.bf16.mxu0 0
  %144 = vmatpush2.bf16.msra.mxu0 0
  %145 = vmatprep.subr.bf16.mxu0 0
  %146 = vmatpush2.bf16.msra.mxu0 0
  %147 = vmatprep.subr.bf16.mxu0 0
  %148 = vmatpush2.bf16.msra.mxu0 0
  %149 = vmatprep.subr.bf16.mxu0 0
  %150 = vmatpush2.bf16.msra.mxu0 0
  %151 = vmatprep.mubr.bf16.mxu0 0
  %152 = vmatmul.mubr.bf16.gmra.mxu0 %v117
  %v153 = vpop.f32.mrf.mxu0
  %v154 = vadd.f32 0.0, %v153
  %v155 = vpop.f32.mrf.mxu0
  %v156 = vadd.f32 0.0, %v155
  %v157 = vpop.f32.mrf.mxu0
  %v158 = vpop.f32.mrf.mxu0
  %159 = vdwg.mxu0
  %v160 = vadd.f32 %v72, %v154
  %v161 = vadd.f32 %v73, %v156
  %v162 = vxor.u32 %v160, 2147483648
  %v163 = vxor.u32 %v161, 2147483648
  %v164 = vmul.f32 %v162, 1.442695
  %v165 = vpow.pop %v164
  %v166 = vmul.f32 %v163, 1.442695
  %v167 = vpow.pop %v166
  %v168 = vadd.f32 %v165, 1.0
  %v169 = vadd.f32 %v167, 1.0
  %v170 = vrcp.pop %v168
  %v171 = vmul.f32 1.0, %v170
  %v172 = vrcp.pop %v169
  %v173 = vmul.f32 1.0, %v172
  %v174 = vtanh.pop %v161
  %176 = vrot.lane.b32.xlu0 %v67, 64
  %v177 = vpop.permute.xlu0 %176
  %v179 = vmul.f32 %v171, %v177
  %181 = vrot.lane.b32.xlu0 %v174, 64
  %v182 = vpop.permute.xlu0 %181
  %v184 = vmul.f32 %v171, %v182
  %186 = vrot.lane.b32.xlu0 %v184, 64
  %v187 = vpop.permute.xlu0 %186
  %v189 = vadd.f32 %v179, %v187
  %v190 = vtanh.pop %v189
  %192 = vrot.lane.b32.xlu0 %v190, 64
  %v193 = vpop.permute.xlu0 %192
  %v195 = vmul.f32 %v173, %v193
  %197 = vrot.lane.b32.xlu0 %v69, 64
  %v198 = vpop.permute.xlu0 %197
  %v200 = vsel %vm115, %v195, %v198
  %v201 = vpack.c.bf16 %v200, %v200
  %v218 = vunpack.c.l.b16 %v38
  %v219 = vunpack.c.h.b16 %v38
  %v220 = vunpack.c.l.b16 %v39
  %v221 = vunpack.c.h.b16 %v39
  %v222 = vunpack.c.l.b16 %v40
  %v223 = vunpack.c.h.b16 %v40
  %v224 = vunpack.c.l.b16 %v41
  %v225 = vunpack.c.h.b16 %v41
  %v226 = vunpack.c.l.b16 %v42
  %v227 = vunpack.c.h.b16 %v42
  %v228 = vunpack.c.l.b16 %v43
  %v229 = vunpack.c.h.b16 %v43
  %v230 = vunpack.c.l.b16 %v44
  %v231 = vunpack.c.h.b16 %v44
  %v232 = vunpack.c.l.b16 %v45
  %v233 = vunpack.c.h.b16 %v45
  %v234 = vunpack.c.l.b16 %v46
  %v235 = vunpack.c.h.b16 %v46
  %v236 = vunpack.c.l.b16 %v47
  %v237 = vunpack.c.h.b16 %v47
  %v238 = vunpack.c.l.b16 %v48
  %v239 = vunpack.c.h.b16 %v48
  %v240 = vunpack.c.l.b16 %v49
  %v241 = vunpack.c.h.b16 %v49
  %v242 = vunpack.c.l.b16 %v50
  %v243 = vunpack.c.h.b16 %v50
  %v244 = vunpack.c.l.b16 %v51
  %v245 = vunpack.c.h.b16 %v51
  %v246 = vunpack.c.l.b16 %v52
  %v247 = vunpack.c.h.b16 %v52
  %v248 = vunpack.c.l.b16 %v53
  %v249 = vunpack.c.h.b16 %v53
  %v250 = vpack.c.b16 %v220, %v218
  %v251 = vpack.c.b16 %v221, %v219
  %v252 = vpack.c.b16 %v224, %v222
  %v253 = vpack.c.b16 %v225, %v223
  %v254 = vpack.c.b16 %v228, %v226
  %v255 = vpack.c.b16 %v229, %v227
  %v256 = vpack.c.b16 %v232, %v230
  %v257 = vpack.c.b16 %v233, %v231
  %v258 = vpack.c.b16 %v236, %v234
  %v259 = vpack.c.b16 %v237, %v235
  %v260 = vpack.c.b16 %v240, %v238
  %v261 = vpack.c.b16 %v241, %v239
  %v262 = vpack.c.b16 %v244, %v242
  %v263 = vpack.c.b16 %v245, %v243
  %v264 = vpack.c.b16 %v248, %v246
  %v265 = vpack.c.b16 %v249, %v247
  %282 = vmatprep.subr.bf16.mxu0 %v265
  %283 = vmatpush1.bf16.msra.mxu0 %v264
  %284 = vmatprep.subr.bf16.mxu0 %v263
  %285 = vmatpush1.bf16.msra.mxu0 %v262
  %286 = vmatprep.subr.bf16.mxu0 %v261
  %287 = vmatpush1.bf16.msra.mxu0 %v260
  %288 = vmatprep.subr.bf16.mxu0 %v259
  %289 = vmatpush1.bf16.msra.mxu0 %v258
  %290 = vmatprep.subr.bf16.mxu0 %v257
  %291 = vmatpush1.bf16.msra.mxu0 %v256
  %292 = vmatprep.subr.bf16.mxu0 %v255
  %293 = vmatpush1.bf16.msra.mxu0 %v254
  %294 = vmatprep.subr.bf16.mxu0 %v253
  %295 = vmatpush1.bf16.msra.mxu0 %v252
  %296 = vmatprep.subr.bf16.mxu0 %v251
  %297 = vmatpush1.bf16.msra.mxu0 %v250
  %298 = vmatprep.subr.bf16.mxu0 0
  %299 = vmatpush2.bf16.msra.mxu0 0
  %300 = vmatprep.subr.bf16.mxu0 0
  %301 = vmatpush2.bf16.msra.mxu0 0
  %302 = vmatprep.subr.bf16.mxu0 0
  %303 = vmatpush2.bf16.msra.mxu0 0
  %304 = vmatprep.subr.bf16.mxu0 0
  %305 = vmatpush2.bf16.msra.mxu0 0
  %306 = vmatprep.subr.bf16.mxu0 0
  %307 = vmatpush2.bf16.msra.mxu0 0
  %308 = vmatprep.subr.bf16.mxu0 0
  %309 = vmatpush2.bf16.msra.mxu0 0
  %310 = vmatprep.subr.bf16.mxu0 0
  %311 = vmatpush2.bf16.msra.mxu0 0
  %312 = vmatprep.subr.bf16.mxu0 0
  %313 = vmatpush2.bf16.msra.mxu0 0
  %314 = vmatprep.mubr.bf16.mxu0 0
  %315 = vmatmul.mubr.bf16.gmra.mxu0 %v201
  %v316 = vpop.f32.mrf.mxu0
  %v317 = vadd.f32 %v59, %v316
  %v318 = vpop.f32.mrf.mxu0
  %v319 = vadd.f32 %v63, %v318
  %v320 = vpop.f32.mrf.mxu0
  %v321 = vpop.f32.mrf.mxu0
  %322 = vdwg.mxu0
  %v323 = vxor.u32 %v317, 2147483648
  %v324 = vxor.u32 %v319, 2147483648
  %v325 = vmul.f32 %v323, 1.442695
  %v326 = vpow.pop %v325
  %v327 = vmul.f32 %v324, 1.442695
  %v328 = vpow.pop %v327
  %v329 = vadd.f32 %v326, 1.0
  %v330 = vadd.f32 %v328, 1.0
  %v331 = vrcp.pop %v329
  %v332 = vmul.f32 1.0, %v331
  %v333 = vrcp.pop %v330
  %v334 = vmul.f32 1.0, %v333
  %v335 = vtanh.pop %v319
  %337 = vrot.lane.b32.xlu0 %v71, 64
  %v338 = vpop.permute.xlu0 %337
  %v340 = vmul.f32 %v332, %v338
  %342 = vrot.lane.b32.xlu0 %v335, 64
  %v343 = vpop.permute.xlu0 %342
  %v345 = vmul.f32 %v332, %v343
  %347 = vrot.lane.b32.xlu0 %v345, 64
  %v348 = vpop.permute.xlu0 %347
  %v350 = vadd.f32 %v340, %v348
  %v351 = vtanh.pop %v350
  %353 = vrot.lane.b32.xlu0 %v351, 64
  %v354 = vpop.permute.xlu0 %353
  %v356 = vmul.f32 %v334, %v354
  %v357 = vpack.c.bf16 %v356, %v356
  %vm358 = vcmask 519168
  %359 = vst.msk [vmem:[#allocation2] sm:$0xf] %vm358, %v357
  %s360 = scalar_lea.vmem %s0, 16
  %v361 = vld [vmem:[%s360] sm:$0xff]
  %v362 = vld [vmem:[%s360 + $0x8] sm:$0xff]
  %v363 = vpack.c.bf16 %v195, %v195
  %v365 = vsel %vm115, %v363, 0
  %367 = vmatprep.subr.bf16.mxu0 0
  %368 = vmatpush1.bf16.msra.mxu0 0
  %369 = vmatprep.subr.bf16.mxu0 0
  %370 = vmatpush1.bf16.msra.mxu0 0
  %371 = vmatprep.subr.bf16.mxu0 0
  %372 = vmatpush1.bf16.msra.mxu0 0
  %373 = vmatprep.subr.bf16.mxu0 0
  %374 = vmatpush1.bf16.msra.mxu0 0
  %375 = vmatprep.subr.bf16.mxu0 %v106
  %376 = vmatpush1.bf16.msra.mxu0 %v105
  %377 = vmatprep.subr.bf16.mxu0 %v104
  %378 = vmatpush1.bf16.msra.mxu0 %v103
  %379 = vmatprep.subr.bf16.mxu0 %v102
  %380 = vmatpush1.bf16.msra.mxu0 %v101
  %381 = vmatprep.subr.bf16.mxu0 %v100
  %382 = vmatpush1.bf16.msra.mxu0 %v99
  %383 = vmatprep.subr.bf16.mxu0 0
  %384 = vmatpush2.bf16.msra.mxu0 0
  %385 = vmatprep.subr.bf16.mxu0 0
  %386 = vmatpush2.bf16.msra.mxu0 0
  %387 = vmatprep.subr.bf16.mxu0 0
  %388 = vmatpush2.bf16.msra.mxu0 0
  %389 = vmatprep.subr.bf16.mxu0 0
  %390 = vmatpush2.bf16.msra.mxu0 0
  %391 = vmatprep.subr.bf16.mxu0 0
  %392 = vmatpush2.bf16.msra.mxu0 0
  %393 = vmatprep.subr.bf16.mxu0 0
  %394 = vmatpush2.bf16.msra.mxu0 0
  %395 = vmatprep.subr.bf16.mxu0 0
  %396 = vmatpush2.bf16.msra.mxu0 0
  %397 = vmatprep.subr.bf16.mxu0 0
  %398 = vmatpush2.bf16.msra.mxu0 0
  %399 = vmatprep.mubr.bf16.mxu0 0
  %400 = vmatmul.mubr.bf16.gmra.mxu0 %v365
  %v401 = vpop.f32.mrf.mxu0
  %v402 = vadd.f32 0.0, %v401
  %v403 = vpop.f32.mrf.mxu0
  %v404 = vadd.f32 0.0, %v403
  %v405 = vpop.f32.mrf.mxu0
  %v406 = vpop.f32.mrf.mxu0
  %407 = vdwg.mxu0
  %v408 = vadd.f32 %v361, %v402
  %v409 = vadd.f32 %v362, %v404
  %v410 = vxor.u32 %v408, 2147483648
  %v411 = vxor.u32 %v409, 2147483648
  %v412 = vmul.f32 %v410, 1.442695
  %v413 = vpow.pop %v412
  %v414 = vmul.f32 %v411, 1.442695
  %v415 = vpow.pop %v414
  %v416 = vadd.f32 %v413, 1.0
  %v417 = vadd.f32 %v415, 1.0
  %v418 = vrcp.pop %v416
  %v419 = vmul.f32 1.0, %v418
  %v420 = vrcp.pop %v417
  %v421 = vmul.f32 1.0, %v420
  %v422 = vtanh.pop %v409
  %v423 = vmul.f32 %v419, %v189
  %425 = vrot.lane.b32.xlu0 %v422, 64
  %v426 = vpop.permute.xlu0 %425
  %v428 = vmul.f32 %v419, %v426
  %430 = vrot.lane.b32.xlu0 %v428, 64
  %v431 = vpop.permute.xlu0 %430
  %v433 = vadd.f32 %v423, %v431
  %v434 = vtanh.pop %v433
  %436 = vrot.lane.b32.xlu0 %v434, 64
  %v437 = vpop.permute.xlu0 %436
  %v439 = vmul.f32 %v421, %v437
  %441 = vrot.lane.b32.xlu0 %v356, 64
  %v442 = vpop.permute.xlu0 %441
  %v444 = vsel %vm115, %v439, %v442
  %v445 = vpack.c.bf16 %v444, %v444
  %446 = vmatprep.subr.bf16.mxu0 %v265
  %447 = vmatpush1.bf16.msra.mxu0 %v264
  %448 = vmatprep.subr.bf16.mxu0 %v263
  %449 = vmatpush1.bf16.msra.mxu0 %v262
  %450 = vmatprep.subr.bf16.mxu0 %v261
  %451 = vmatpush1.bf16.msra.mxu0 %v260
  %452 = vmatprep.subr.bf16.mxu0 %v259
  %453 = vmatpush1.bf16.msra.mxu0 %v258
  %454 = vmatprep.subr.bf16.mxu0 %v257
  %455 = vmatpush1.bf16.msra.mxu0 %v256
  %456 = vmatprep.subr.bf16.mxu0 %v255
  %457 = vmatpush1.bf16.msra.mxu0 %v254
  %458 = vmatprep.subr.bf16.mxu0 %v253
  %459 = vmatpush1.bf16.msra.mxu0 %v252
  %460 = vmatprep.subr.bf16.mxu0 %v251
  %461 = vmatpush1.bf16.msra.mxu0 %v250
  %462 = vmatprep.subr.bf16.mxu0 0
  %463 = vmatpush2.bf16.msra.mxu0 0
  %464 = vmatprep.subr.bf16.mxu0 0
  %465 = vmatpush2.bf16.msra.mxu0 0
  %466 = vmatprep.subr.bf16.mxu0 0
  %467 = vmatpush2.bf16.msra.mxu0 0
  %468 = vmatprep.subr.bf16.mxu0 0
  %469 = vmatpush2.bf16.msra.mxu0 0
  %470 = vmatprep.subr.bf16.mxu0 0
  %471 = vmatpush2.bf16.msra.mxu0 0
  %472 = vmatprep.subr.bf16.mxu0 0
  %473 = vmatpush2.bf16.msra.mxu0 0
  %474 = vmatprep.subr.bf16.mxu0 0
  %475 = vmatpush2.bf16.msra.mxu0 0
  %476 = vmatprep.subr.bf16.mxu0 0
  %477 = vmatpush2.bf16.msra.mxu0 0
  %478 = vmatprep.mubr.bf16.mxu0 0
  %479 = vmatmul.mubr.bf16.gmra.mxu0 %v445
  %v480 = vpop.f32.mrf.mxu0
  %v481 = vadd.f32 %v59, %v480
  %v482 = vpop.f32.mrf.mxu0
  %v483 = vadd.f32 %v63, %v482
  %v484 = vpop.f32.mrf.mxu0
  %v485 = vpop.f32.mrf.mxu0
  %486 = vdwg.mxu0
  %v487 = vxor.u32 %v481, 2147483648
  %v488 = vxor.u32 %v483, 2147483648
  %v489 = vmul.f32 %v487, 1.442695
  %v490 = vpow.pop %v489
  %v491 = vmul.f32 %v488, 1.442695
  %v492 = vpow.pop %v491
  %v493 = vadd.f32 %v490, 1.0
  %v494 = vadd.f32 %v492, 1.0
  %v495 = vrcp.pop %v493
  %v496 = vmul.f32 1.0, %v495
  %v497 = vrcp.pop %v494
  %v498 = vmul.f32 1.0, %v497
  %v499 = vtanh.pop %v483
  %v500 = vmul.f32 %v496, %v350
  %502 = vrot.lane.b32.xlu0 %v499, 64
  %v503 = vpop.permute.xlu0 %502
  %v505 = vmul.f32 %v496, %v503
  %507 = vrot.lane.b32.xlu0 %v505, 64
  %v508 = vpop.permute.xlu0 %507
  %v510 = vadd.f32 %v500, %v508
  %v511 = vtanh.pop %v510
  %513 = vrot.lane.b32.xlu0 %v511, 64
  %v514 = vpop.permute.xlu0 %513
  %v516 = vmul.f32 %v498, %v514
  %v517 = vpack.c.bf16 %v516, %v516
  %s518 = scalar_lea.vmem [#allocation2], 4
  %519 = vst.msk [vmem:[%s518] sm:$0xf] %vm358, %v517
  %s520 = scalar_lea.vmem %s0, 32
  %v521 = vld [vmem:[%s520] sm:$0xff]
  %v522 = vld [vmem:[%s520 + $0x8] sm:$0xff]
  %v523 = vpack.c.bf16 %v439, %v439
  %v525 = vsel %vm115, %v523, 0
  %527 = vmatprep.subr.bf16.mxu0 0
  %528 = vmatpush1.bf16.msra.mxu0 0
  %529 = vmatprep.subr.bf16.mxu0 0
  %530 = vmatpush1.bf16.msra.mxu0 0
  %531 = vmatprep.subr.bf16.mxu0 0
  %532 = vmatpush1.bf16.msra.mxu0 0
  %533 = vmatprep.subr.bf16.mxu0 0
  %534 = vmatpush1.bf16.msra.mxu0 0
  %535 = vmatprep.subr.bf16.mxu0 %v106
  %536 = vmatpush1.bf16.msra.mxu0 %v105
  %537 = vmatprep.subr.bf16.mxu0 %v104
  %538 = vmatpush1.bf16.msra.mxu0 %v103
  %539 = vmatprep.subr.bf16.mxu0 %v102
  %540 = vmatpush1.bf16.msra.mxu0 %v101
  %541 = vmatprep.subr.bf16.mxu0 %v100
  %542 = vmatpush1.bf16.msra.mxu0 %v99
  %543 = vmatprep.subr.bf16.mxu0 0
  %544 = vmatpush2.bf16.msra.mxu0 0
  %545 = vmatprep.subr.bf16.mxu0 0
  %546 = vmatpush2.bf16.msra.mxu0 0
  %547 = vmatprep.subr.bf16.mxu0 0
  %548 = vmatpush2.bf16.msra.mxu0 0
  %549 = vmatprep.subr.bf16.mxu0 0
  %550 = vmatpush2.bf16.msra.mxu0 0
  %551 = vmatprep.subr.bf16.mxu0 0
  %552 = vmatpush2.bf16.msra.mxu0 0
  %553 = vmatprep.subr.bf16.mxu0 0
  %554 = vmatpush2.bf16.msra.mxu0 0
  %555 = vmatprep.subr.bf16.mxu0 0
  %556 = vmatpush2.bf16.msra.mxu0 0
  %557 = vmatprep.subr.bf16.mxu0 0
  %558 = vmatpush2.bf16.msra.mxu0 0
  %559 = vmatprep.mubr.bf16.mxu0 0
  %560 = vmatmul.mubr.bf16.gmra.mxu0 %v525
  %v561 = vpop.f32.mrf.mxu0
  %v562 = vadd.f32 0.0, %v561
  %v563 = vpop.f32.mrf.mxu0
  %v564 = vadd.f32 0.0, %v563
  %v565 = vpop.f32.mrf.mxu0
  %v566 = vpop.f32.mrf.mxu0
  %567 = vdwg.mxu0
  %v568 = vadd.f32 %v521, %v562
  %v569 = vadd.f32 %v522, %v564
  %v570 = vxor.u32 %v568, 2147483648
  %v571 = vxor.u32 %v569, 2147483648
  %v572 = vmul.f32 %v570, 1.442695
  %v573 = vpow.pop %v572
  %v574 = vmul.f32 %v571, 1.442695
  %v575 = vpow.pop %v574
  %v576 = vadd.f32 %v573, 1.0
  %v577 = vadd.f32 %v575, 1.0
  %v578 = vrcp.pop %v576
  %v579 = vmul.f32 1.0, %v578
  %v580 = vrcp.pop %v577
  %v581 = vmul.f32 1.0, %v580
  %v582 = vtanh.pop %v569
  %v583 = vmul.f32 %v579, %v433
  %585 = vrot.lane.b32.xlu0 %v582, 64
  %v586 = vpop.permute.xlu0 %585
  %v588 = vmul.f32 %v579, %v586
  %590 = vrot.lane.b32.xlu0 %v588, 64
  %v591 = vpop.permute.xlu0 %590
  %v593 = vadd.f32 %v583, %v591
  %v594 = vtanh.pop %v593
  %596 = vrot.lane.b32.xlu0 %v594, 64
  %v597 = vpop.permute.xlu0 %596
  %v599 = vmul.f32 %v581, %v597
  %601 = vrot.lane.b32.xlu0 %v516, 64
  %v602 = vpop.permute.xlu0 %601
  %v604 = vsel %vm115, %v599, %v602
  %v605 = vpack.c.bf16 %v604, %v604
  %606 = vmatprep.subr.bf16.mxu0 %v265
  %607 = vmatpush1.bf16.msra.mxu0 %v264
  %608 = vmatprep.subr.bf16.mxu0 %v263
  %609 = vmatpush1.bf16.msra.mxu0 %v262
  %610 = vmatprep.subr.bf16.mxu0 %v261
  %611 = vmatpush1.bf16.msra.mxu0 %v260
  %612 = vmatprep.subr.bf16.mxu0 %v259
  %613 = vmatpush1.bf16.msra.mxu0 %v258
  %614 = vmatprep.subr.bf16.mxu0 %v257
  %615 = vmatpush1.bf16.msra.mxu0 %v256
  %616 = vmatprep.subr.bf16.mxu0 %v255
  %617 = vmatpush1.bf16.msra.mxu0 %v254
  %618 = vmatprep.subr.bf16.mxu0 %v253
  %619 = vmatpush1.bf16.msra.mxu0 %v252
  %620 = vmatprep.subr.bf16.mxu0 %v251
  %621 = vmatpush1.bf16.msra.mxu0 %v250
  %622 = vmatprep.subr.bf16.mxu0 0
  %623 = vmatpush2.bf16.msra.mxu0 0
  %624 = vmatprep.subr.bf16.mxu0 0
  %625 = vmatpush2.bf16.msra.mxu0 0
  %626 = vmatprep.subr.bf16.mxu0 0
  %627 = vmatpush2.bf16.msra.mxu0 0
  %628 = vmatprep.subr.bf16.mxu0 0
  %629 = vmatpush2.bf16.msra.mxu0 0
  %630 = vmatprep.subr.bf16.mxu0 0
  %631 = vmatpush2.bf16.msra.mxu0 0
  %632 = vmatprep.subr.bf16.mxu0 0
  %633 = vmatpush2.bf16.msra.mxu0 0
  %634 = vmatprep.subr.bf16.mxu0 0
  %635 = vmatpush2.bf16.msra.mxu0 0
  %636 = vmatprep.subr.bf16.mxu0 0
  %637 = vmatpush2.bf16.msra.mxu0 0
  %638 = vmatprep.mubr.bf16.mxu0 0
  %639 = vmatmul.mubr.bf16.gmra.mxu0 %v605
  %v640 = vpop.f32.mrf.mxu0
  %v641 = vadd.f32 %v59, %v640
  %v642 = vpop.f32.mrf.mxu0
  %v643 = vadd.f32 %v63, %v642
  %v644 = vpop.f32.mrf.mxu0
  %v645 = vpop.f32.mrf.mxu0
  %646 = vdwg.mxu0
  %v647 = vxor.u32 %v641, 2147483648
  %v648 = vxor.u32 %v643, 2147483648
  %v649 = vmul.f32 %v647, 1.442695
  %v650 = vpow.pop %v649
  %v651 = vmul.f32 %v648, 1.442695
  %v652 = vpow.pop %v651
  %v653 = vadd.f32 %v650, 1.0
  %v654 = vadd.f32 %v652, 1.0
  %v655 = vrcp.pop %v653
  %v656 = vmul.f32 1.0, %v655
  %v657 = vrcp.pop %v654
  %v658 = vmul.f32 1.0, %v657
  %v659 = vtanh.pop %v643
  %v660 = vmul.f32 %v656, %v510
  %662 = vrot.lane.b32.xlu0 %v659, 64
  %v663 = vpop.permute.xlu0 %662
  %v665 = vmul.f32 %v656, %v663
  %667 = vrot.lane.b32.xlu0 %v665, 64
  %v668 = vpop.permute.xlu0 %667
  %v670 = vadd.f32 %v660, %v668
  %v671 = vtanh.pop %v670
  %673 = vrot.lane.b32.xlu0 %v671, 64
  %v674 = vpop.permute.xlu0 %673
  %v676 = vmul.f32 %v658, %v674
  %v677 = vpack.c.bf16 %v676, %v676
  %s678 = scalar_lea.vmem [#allocation2], 8
  %679 = vst.msk [vmem:[%s678] sm:$0xf] %vm358, %v677
  %s680 = scalar_lea.vmem %s0, 48
  %v681 = vld [vmem:[%s680] sm:$0xff]
  %v682 = vld [vmem:[%s680 + $0x8] sm:$0xff]
  %v683 = vpack.c.bf16 %v599, %v599
  %v685 = vsel %vm115, %v683, 0
  %687 = vmatprep.subr.bf16.mxu0 0
  %688 = vmatpush1.bf16.msra.mxu0 0
  %689 = vmatprep.subr.bf16.mxu0 0
  %690 = vmatpush1.bf16.msra.mxu0 0
  %691 = vmatprep.subr.bf16.mxu0 0
  %692 = vmatpush1.bf16.msra.mxu0 0
  %693 = vmatprep.subr.bf16.mxu0 0
  %694 = vmatpush1.bf16.msra.mxu0 0
  %695 = vmatprep.subr.bf16.mxu0 %v106
  %696 = vmatpush1.bf16.msra.mxu0 %v105
  %697 = vmatprep.subr.bf16.mxu0 %v104
  %698 = vmatpush1.bf16.msra.mxu0 %v103
  %699 = vmatprep.subr.bf16.mxu0 %v102
  %700 = vmatpush1.bf16.msra.mxu0 %v101
  %701 = vmatprep.subr.bf16.mxu0 %v100
  %702 = vmatpush1.bf16.msra.mxu0 %v99
  %703 = vmatprep.subr.bf16.mxu0 0
  %704 = vmatpush2.bf16.msra.mxu0 0
  %705 = vmatprep.subr.bf16.mxu0 0
  %706 = vmatpush2.bf16.msra.mxu0 0
  %707 = vmatprep.subr.bf16.mxu0 0
  %708 = vmatpush2.bf16.msra.mxu0 0
  %709 = vmatprep.subr.bf16.mxu0 0
  %710 = vmatpush2.bf16.msra.mxu0 0
  %711 = vmatprep.subr.bf16.mxu0 0
  %712 = vmatpush2.bf16.msra.mxu0 0
  %713 = vmatprep.subr.bf16.mxu0 0
  %714 = vmatpush2.bf16.msra.mxu0 0
  %715 = vmatprep.subr.bf16.mxu0 0
  %716 = vmatpush2.bf16.msra.mxu0 0
  %717 = vmatprep.subr.bf16.mxu0 0
  %718 = vmatpush2.bf16.msra.mxu0 0
  %719 = vmatprep.mubr.bf16.mxu0 0
  %720 = vmatmul.mubr.bf16.gmra.mxu0 %v685
  %v721 = vpop.f32.mrf.mxu0
  %v722 = vadd.f32 0.0, %v721
  %v723 = vpop.f32.mrf.mxu0
  %v724 = vadd.f32 0.0, %v723
  %v725 = vpop.f32.mrf.mxu0
  %v726 = vpop.f32.mrf.mxu0
  %727 = vdwg.mxu0
  %v728 = vadd.f32 %v681, %v722
  %v729 = vadd.f32 %v682, %v724
  %v730 = vxor.u32 %v728, 2147483648
  %v731 = vxor.u32 %v729, 2147483648
  %v732 = vmul.f32 %v730, 1.442695
  %v733 = vpow.pop %v732
  %v734 = vmul.f32 %v731, 1.442695
  %v735 = vpow.pop %v734
  %v736 = vadd.f32 %v733, 1.0
  %v737 = vadd.f32 %v735, 1.0
  %v738 = vrcp.pop %v736
  %v739 = vmul.f32 1.0, %v738
  %v740 = vrcp.pop %v737
  %v741 = vmul.f32 1.0, %v740
  %v742 = vtanh.pop %v729
  %v743 = vmul.f32 %v739, %v593
  %745 = vrot.lane.b32.xlu0 %v742, 64
  %v746 = vpop.permute.xlu0 %745
  %v748 = vmul.f32 %v739, %v746
  %750 = vrot.lane.b32.xlu0 %v748, 64
  %v751 = vpop.permute.xlu0 %750
  %v753 = vadd.f32 %v743, %v751
  %v754 = vtanh.pop %v753
  %756 = vrot.lane.b32.xlu0 %v754, 64
  %v757 = vpop.permute.xlu0 %756
  %v759 = vmul.f32 %v741, %v757
  %761 = vrot.lane.b32.xlu0 %v676, 64
  %v762 = vpop.permute.xlu0 %761
  %v764 = vsel %vm115, %v759, %v762
  %v765 = vpack.c.bf16 %v764, %v764
  %766 = vmatprep.subr.bf16.mxu0 %v265
  %767 = vmatpush1.bf16.msra.mxu0 %v264
  %768 = vmatprep.subr.bf16.mxu0 %v263
  %769 = vmatpush1.bf16.msra.mxu0 %v262
  %770 = vmatprep.subr.bf16.mxu0 %v261
  %771 = vmatpush1.bf16.msra.mxu0 %v260
  %772 = vmatprep.subr.bf16.mxu0 %v259
  %773 = vmatpush1.bf16.msra.mxu0 %v258
  %774 = vmatprep.subr.bf16.mxu0 %v257
  %775 = vmatpush1.bf16.msra.mxu0 %v256
  %776 = vmatprep.subr.bf16.mxu0 %v255
  %777 = vmatpush1.bf16.msra.mxu0 %v254
  %778 = vmatprep.subr.bf16.mxu0 %v253
  %779 = vmatpush1.bf16.msra.mxu0 %v252
  %780 = vmatprep.subr.bf16.mxu0 %v251
  %781 = vmatpush1.bf16.msra.mxu0 %v250
  %782 = vmatprep.subr.bf16.mxu0 0
  %783 = vmatpush2.bf16.msra.mxu0 0
  %784 = vmatprep.subr.bf16.mxu0 0
  %785 = vmatpush2.bf16.msra.mxu0 0
  %786 = vmatprep.subr.bf16.mxu0 0
  %787 = vmatpush2.bf16.msra.mxu0 0
  %788 = vmatprep.subr.bf16.mxu0 0
  %789 = vmatpush2.bf16.msra.mxu0 0
  %790 = vmatprep.subr.bf16.mxu0 0
  %791 = vmatpush2.bf16.msra.mxu0 0
  %792 = vmatprep.subr.bf16.mxu0 0
  %793 = vmatpush2.bf16.msra.mxu0 0
  %794 = vmatprep.subr.bf16.mxu0 0
  %795 = vmatpush2.bf16.msra.mxu0 0
  %796 = vmatprep.subr.bf16.mxu0 0
  %797 = vmatpush2.bf16.msra.mxu0 0
  %798 = vmatprep.mubr.bf16.mxu0 0
  %799 = vmatmul.mubr.bf16.gmra.mxu0 %v765
  %v800 = vpop.f32.mrf.mxu0
  %v801 = vadd.f32 %v59, %v800
  %v802 = vpop.f32.mrf.mxu0
  %v803 = vadd.f32 %v63, %v802
  %v804 = vpop.f32.mrf.mxu0
  %v805 = vpop.f32.mrf.mxu0
  %806 = vdwg.mxu0
  %v807 = vxor.u32 %v801, 2147483648
  %v808 = vxor.u32 %v803, 2147483648
  %v809 = vmul.f32 %v807, 1.442695
  %v810 = vpow.pop %v809
  %v811 = vmul.f32 %v808, 1.442695
  %v812 = vpow.pop %v811
  %v813 = vadd.f32 %v810, 1.0
  %v814 = vadd.f32 %v812, 1.0
  %v815 = vrcp.pop %v813
  %v816 = vmul.f32 1.0, %v815
  %v817 = vrcp.pop %v814
  %v818 = vmul.f32 1.0, %v817
  %v819 = vtanh.pop %v803
  %v820 = vmul.f32 %v816, %v670
  %822 = vrot.lane.b32.xlu0 %v819, 64
  %v823 = vpop.permute.xlu0 %822
  %v825 = vmul.f32 %v816, %v823
  %827 = vrot.lane.b32.xlu0 %v825, 64
  %v828 = vpop.permute.xlu0 %827
  %v830 = vadd.f32 %v820, %v828
  %v831 = vtanh.pop %v830
  %833 = vrot.lane.b32.xlu0 %v831, 64
  %v834 = vpop.permute.xlu0 %833
  %v836 = vmul.f32 %v818, %v834
  %v837 = vpack.c.bf16 %v836, %v836
  %s838 = scalar_lea.vmem [#allocation2], 12
  %839 = vst.msk [vmem:[%s838] sm:$0xf] %vm358, %v837
  %s840 = scalar_lea.vmem %s0, 64
  %v841 = vld [vmem:[%s840] sm:$0xff]
  %v842 = vld [vmem:[%s840 + $0x8] sm:$0xff]
  %v843 = vpack.c.bf16 %v759, %v759
  %v845 = vsel %vm115, %v843, 0
  %847 = vmatprep.subr.bf16.mxu0 0
  %848 = vmatpush1.bf16.msra.mxu0 0
  %849 = vmatprep.subr.bf16.mxu0 0
  %850 = vmatpush1.bf16.msra.mxu0 0
  %851 = vmatprep.subr.bf16.mxu0 0
  %852 = vmatpush1.bf16.msra.mxu0 0
  %853 = vmatprep.subr.bf16.mxu0 0
  %854 = vmatpush1.bf16.msra.mxu0 0
  %855 = vmatprep.subr.bf16.mxu0 %v106
  %856 = vmatpush1.bf16.msra.mxu0 %v105
  %857 = vmatprep.subr.bf16.mxu0 %v104
  %858 = vmatpush1.bf16.msra.mxu0 %v103
  %859 = vmatprep.subr.bf16.mxu0 %v102
  %860 = vmatpush1.bf16.msra.mxu0 %v101
  %861 = vmatprep.subr.bf16.mxu0 %v100
  %862 = vmatpush1.bf16.msra.mxu0 %v99
  %863 = vmatprep.subr.bf16.mxu0 0
  %864 = vmatpush2.bf16.msra.mxu0 0
  %865 = vmatprep.subr.bf16.mxu0 0
  %866 = vmatpush2.bf16.msra.mxu0 0
  %867 = vmatprep.subr.bf16.mxu0 0
  %868 = vmatpush2.bf16.msra.mxu0 0
  %869 = vmatprep.subr.bf16.mxu0 0
  %870 = vmatpush2.bf16.msra.mxu0 0
  %871 = vmatprep.subr.bf16.mxu0 0
  %872 = vmatpush2.bf16.msra.mxu0 0
  %873 = vmatprep.subr.bf16.mxu0 0
  %874 = vmatpush2.bf16.msra.mxu0 0
  %875 = vmatprep.subr.bf16.mxu0 0
  %876 = vmatpush2.bf16.msra.mxu0 0
  %877 = vmatprep.subr.bf16.mxu0 0
  %878 = vmatpush2.bf16.msra.mxu0 0
  %879 = vmatprep.mubr.bf16.mxu0 0
  %880 = vmatmul.mubr.bf16.gmra.mxu0 %v845
  %v881 = vpop.f32.mrf.mxu0
  %v882 = vadd.f32 0.0, %v881
  %v883 = vpop.f32.mrf.mxu0
  %v884 = vadd.f32 0.0, %v883
  %v885 = vpop.f32.mrf.mxu0
  %v886 = vpop.f32.mrf.mxu0
  %887 = vdwg.mxu0
  %v888 = vadd.f32 %v841, %v882
  %v889 = vadd.f32 %v842, %v884
  %v890 = vxor.u32 %v888, 2147483648
  %v891 = vxor.u32 %v889, 2147483648
  %v892 = vmul.f32 %v890, 1.442695
  %v893 = vpow.pop %v892
  %v894 = vmul.f32 %v891, 1.442695
  %v895 = vpow.pop %v894
  %v896 = vadd.f32 %v893, 1.0
  %v897 = vadd.f32 %v895, 1.0
  %v898 = vrcp.pop %v896
  %v899 = vmul.f32 1.0, %v898
  %v900 = vrcp.pop %v897
  %v901 = vmul.f32 1.0, %v900
  %v902 = vtanh.pop %v889
  %v903 = vmul.f32 %v899, %v753
  %905 = vrot.lane.b32.xlu0 %v902, 64
  %v906 = vpop.permute.xlu0 %905
  %v908 = vmul.f32 %v899, %v906
  %910 = vrot.lane.b32.xlu0 %v908, 64
  %v911 = vpop.permute.xlu0 %910
  %v913 = vadd.f32 %v903, %v911
  %v914 = vtanh.pop %v913
  %916 = vrot.lane.b32.xlu0 %v914, 64
  %v917 = vpop.permute.xlu0 %916
  %v919 = vmul.f32 %v901, %v917
  %921 = vrot.lane.b32.xlu0 %v836, 64
  %v922 = vpop.permute.xlu0 %921
  %v924 = vsel %vm115, %v919, %v922
  %v925 = vpack.c.bf16 %v924, %v924
  %926 = vmatprep.subr.bf16.mxu0 %v265
  %927 = vmatpush1.bf16.msra.mxu0 %v264
  %928 = vmatprep.subr.bf16.mxu0 %v263
  %929 = vmatpush1.bf16.msra.mxu0 %v262
  %930 = vmatprep.subr.bf16.mxu0 %v261
  %931 = vmatpush1.bf16.msra.mxu0 %v260
  %932 = vmatprep.subr.bf16.mxu0 %v259
  %933 = vmatpush1.bf16.msra.mxu0 %v258
  %934 = vmatprep.subr.bf16.mxu0 %v257
  %935 = vmatpush1.bf16.msra.mxu0 %v256
  %936 = vmatprep.subr.bf16.mxu0 %v255
  %937 = vmatpush1.bf16.msra.mxu0 %v254
  %938 = vmatprep.subr.bf16.mxu0 %v253
  %939 = vmatpush1.bf16.msra.mxu0 %v252
  %940 = vmatprep.subr.bf16.mxu0 %v251
  %941 = vmatpush1.bf16.msra.mxu0 %v250
  %942 = vmatprep.subr.bf16.mxu0 0
  %943 = vmatpush2.bf16.msra.mxu0 0
  %944 = vmatprep.subr.bf16.mxu0 0
  %945 = vmatpush2.bf16.msra.mxu0 0
  %946 = vmatprep.subr.bf16.mxu0 0
  %947 = vmatpush2.bf16.msra.mxu0 0
  %948 = vmatprep.subr.bf16.mxu0 0
  %949 = vmatpush2.bf16.msra.mxu0 0
  %950 = vmatprep.subr.bf16.mxu0 0
  %951 = vmatpush2.bf16.msra.mxu0 0
  %952 = vmatprep.subr.bf16.mxu0 0
  %953 = vmatpush2.bf16.msra.mxu0 0
  %954 = vmatprep.subr.bf16.mxu0 0
  %955 = vmatpush2.bf16.msra.mxu0 0
  %956 = vmatprep.subr.bf16.mxu0 0
  %957 = vmatpush2.bf16.msra.mxu0 0
  %958 = vmatprep.mubr.bf16.mxu0 0
  %959 = vmatmul.mubr.bf16.gmra.mxu0 %v925
  %v960 = vpop.f32.mrf.mxu0
  %v961 = vadd.f32 %v59, %v960
  %v962 = vpop.f32.mrf.mxu0
  %v963 = vadd.f32 %v63, %v962
  %v964 = vpop.f32.mrf.mxu0
  %v965 = vpop.f32.mrf.mxu0
  %966 = vdwg.mxu0
  %v967 = vxor.u32 %v961, 2147483648
  %v968 = vxor.u32 %v963, 2147483648
  %v969 = vmul.f32 %v967, 1.442695
  %v970 = vpow.pop %v969
  %v971 = vmul.f32 %v968, 1.442695
  %v972 = vpow.pop %v971
  %v973 = vadd.f32 %v970, 1.0
  %v974 = vadd.f32 %v972, 1.0
  %v975 = vrcp.pop %v973
  %v976 = vmul.f32 1.0, %v975
  %v977 = vrcp.pop %v974
  %v978 = vmul.f32 1.0, %v977
  %v979 = vtanh.pop %v963
  %v980 = vmul.f32 %v976, %v830
  %982 = vrot.lane.b32.xlu0 %v979, 64
  %v983 = vpop.permute.xlu0 %982
  %v985 = vmul.f32 %v976, %v983
  %987 = vrot.lane.b32.xlu0 %v985, 64
  %v988 = vpop.permute.xlu0 %987
  %v990 = vadd.f32 %v980, %v988
  %v991 = vtanh.pop %v990
  %993 = vrot.lane.b32.xlu0 %v991, 64
  %v994 = vpop.permute.xlu0 %993
  %v996 = vmul.f32 %v978, %v994
  %v997 = vpack.c.bf16 %v996, %v996
  %s998 = scalar_lea.vmem [#allocation2], 16
  %999 = vst.msk [vmem:[%s998] sm:$0xf] %vm358, %v997
  %s1000 = scalar_lea.vmem %s0, 80
  %v1001 = vld [vmem:[%s1000] sm:$0xff]
  %v1002 = vld [vmem:[%s1000 + $0x8] sm:$0xff]
  %v1003 = vpack.c.bf16 %v919, %v919
  %v1005 = vsel %vm115, %v1003, 0
  %1007 = vmatprep.subr.bf16.mxu0 0
  %1008 = vmatpush1.bf16.msra.mxu0 0
  %1009 = vmatprep.subr.bf16.mxu0 0
  %1010 = vmatpush1.bf16.msra.mxu0 0
  %1011 = vmatprep.subr.bf16.mxu0 0
  %1012 = vmatpush1.bf16.msra.mxu0 0
  %1013 = vmatprep.subr.bf16.mxu0 0
  %1014 = vmatpush1.bf16.msra.mxu0 0
  %1015 = vmatprep.subr.bf16.mxu0 %v106
  %1016 = vmatpush1.bf16.msra.mxu0 %v105
  %1017 = vmatprep.subr.bf16.mxu0 %v104
  %1018 = vmatpush1.bf16.msra.mxu0 %v103
  %1019 = vmatprep.subr.bf16.mxu0 %v102
  %1020 = vmatpush1.bf16.msra.mxu0 %v101
  %1021 = vmatprep.subr.bf16.mxu0 %v100
  %1022 = vmatpush1.bf16.msra.mxu0 %v99
  %1023 = vmatprep.subr.bf16.mxu0 0
  %1024 = vmatpush2.bf16.msra.mxu0 0
  %1025 = vmatprep.subr.bf16.mxu0 0
  %1026 = vmatpush2.bf16.msra.mxu0 0
  %1027 = vmatprep.subr.bf16.mxu0 0
  %1028 = vmatpush2.bf16.msra.mxu0 0
  %1029 = vmatprep.subr.bf16.mxu0 0
  %1030 = vmatpush2.bf16.msra.mxu0 0
  %1031 = vmatprep.subr.bf16.mxu0 0
  %1032 = vmatpush2.bf16.msra.mxu0 0
  %1033 = vmatprep.subr.bf16.mxu0 0
  %1034 = vmatpush2.bf16.msra.mxu0 0
  %1035 = vmatprep.subr.bf16.mxu0 0
  %1036 = vmatpush2.bf16.msra.mxu0 0
  %1037 = vmatprep.subr.bf16.mxu0 0
  %1038 = vmatpush2.bf16.msra.mxu0 0
  %1039 = vmatprep.mubr.bf16.mxu0 0
  %1040 = vmatmul.mubr.bf16.gmra.mxu0 %v1005
  %v1041 = vpop.f32.mrf.mxu0
  %v1042 = vadd.f32 0.0, %v1041
  %v1043 = vpop.f32.mrf.mxu0
  %v1044 = vadd.f32 0.0, %v1043
  %v1045 = vpop.f32.mrf.mxu0
  %v1046 = vpop.f32.mrf.mxu0
  %1047 = vdwg.mxu0
  %v1048 = vadd.f32 %v1001, %v1042
  %v1049 = vadd.f32 %v1002, %v1044
  %v1050 = vxor.u32 %v1048, 2147483648
  %v1051 = vxor.u32 %v1049, 2147483648
  %v1052 = vmul.f32 %v1050, 1.442695
  %v1053 = vpow.pop %v1052
  %v1054 = vmul.f32 %v1051, 1.442695
  %v1055 = vpow.pop %v1054
  %v1056 = vadd.f32 %v1053, 1.0
  %v1057 = vadd.f32 %v1055, 1.0
  %v1058 = vrcp.pop %v1056
  %v1059 = vmul.f32 1.0, %v1058
  %v1060 = vrcp.pop %v1057
  %v1061 = vmul.f32 1.0, %v1060
  %v1062 = vtanh.pop %v1049
  %v1063 = vmul.f32 %v1059, %v913
  %1065 = vrot.lane.b32.xlu0 %v1062, 64
  %v1066 = vpop.permute.xlu0 %1065
  %v1068 = vmul.f32 %v1059, %v1066
  %1070 = vrot.lane.b32.xlu0 %v1068, 64
  %v1071 = vpop.permute.xlu0 %1070
  %v1073 = vadd.f32 %v1063, %v1071
  %v1074 = vtanh.pop %v1073
  %1076 = vrot.lane.b32.xlu0 %v1074, 64
  %v1077 = vpop.permute.xlu0 %1076
  %v1079 = vmul.f32 %v1061, %v1077
  %1081 = vrot.lane.b32.xlu0 %v996, 64
  %v1082 = vpop.permute.xlu0 %1081
  %v1084 = vsel %vm115, %v1079, %v1082
  %v1085 = vpack.c.bf16 %v1084, %v1084
  %1086 = vmatprep.subr.bf16.mxu0 %v265
  %1087 = vmatpush1.bf16.msra.mxu0 %v264
  %1088 = vmatprep.subr.bf16.mxu0 %v263
  %1089 = vmatpush1.bf16.msra.mxu0 %v262
  %1090 = vmatprep.subr.bf16.mxu0 %v261
  %1091 = vmatpush1.bf16.msra.mxu0 %v260
  %1092 = vmatprep.subr.bf16.mxu0 %v259
  %1093 = vmatpush1.bf16.msra.mxu0 %v258
  %1094 = vmatprep.subr.bf16.mxu0 %v257
  %1095 = vmatpush1.bf16.msra.mxu0 %v256
  %1096 = vmatprep.subr.bf16.mxu0 %v255
  %1097 = vmatpush1.bf16.msra.mxu0 %v254
  %1098 = vmatprep.subr.bf16.mxu0 %v253
  %1099 = vmatpush1.bf16.msra.mxu0 %v252
  %1100 = vmatprep.subr.bf16.mxu0 %v251
  %1101 = vmatpush1.bf16.msra.mxu0 %v250
  %1102 = vmatprep.subr.bf16.mxu0 0
  %1103 = vmatpush2.bf16.msra.mxu0 0
  %1104 = vmatprep.subr.bf16.mxu0 0
  %1105 = vmatpush2.bf16.msra.mxu0 0
  %1106 = vmatprep.subr.bf16.mxu0 0
  %1107 = vmatpush2.bf16.msra.mxu0 0
  %1108 = vmatprep.subr.bf16.mxu0 0
  %1109 = vmatpush2.bf16.msra.mxu0 0
  %1110 = vmatprep.subr.bf16.mxu0 0
  %1111 = vmatpush2.bf16.msra.mxu0 0
  %1112 = vmatprep.subr.bf16.mxu0 0
  %1113 = vmatpush2.bf16.msra.mxu0 0
  %1114 = vmatprep.subr.bf16.mxu0 0
  %1115 = vmatpush2.bf16.msra.mxu0 0
  %1116 = vmatprep.subr.bf16.mxu0 0
  %1117 = vmatpush2.bf16.msra.mxu0 0
  %1118 = vmatprep.mubr.bf16.mxu0 0
  %1119 = vmatmul.mubr.bf16.gmra.mxu0 %v1085
  %v1120 = vpop.f32.mrf.mxu0
  %v1121 = vadd.f32 %v59, %v1120
  %v1122 = vpop.f32.mrf.mxu0
  %v1123 = vadd.f32 %v63, %v1122
  %v1124 = vpop.f32.mrf.mxu0
  %v1125 = vpop.f32.mrf.mxu0
  %1126 = vdwg.mxu0
  %v1127 = vxor.u32 %v1121, 2147483648
  %v1128 = vxor.u32 %v1123, 2147483648
  %v1129 = vmul.f32 %v1127, 1.442695
  %v1130 = vpow.pop %v1129
  %v1131 = vmul.f32 %v1128, 1.442695
  %v1132 = vpow.pop %v1131
  %v1133 = vadd.f32 %v1130, 1.0
  %v1134 = vadd.f32 %v1132, 1.0
  %v1135 = vrcp.pop %v1133
  %v1136 = vmul.f32 1.0, %v1135
  %v1137 = vrcp.pop %v1134
  %v1138 = vmul.f32 1.0, %v1137
  %v1139 = vtanh.pop %v1123
  %v1140 = vmul.f32 %v1136, %v990
  %1142 = vrot.lane.b32.xlu0 %v1139, 64
  %v1143 = vpop.permute.xlu0 %1142
  %v1145 = vmul.f32 %v1136, %v1143
  %1147 = vrot.lane.b32.xlu0 %v1145, 64
  %v1148 = vpop.permute.xlu0 %1147
  %v1150 = vadd.f32 %v1140, %v1148
  %v1151 = vtanh.pop %v1150
  %1153 = vrot.lane.b32.xlu0 %v1151, 64
  %v1154 = vpop.permute.xlu0 %1153
  %v1156 = vmul.f32 %v1138, %v1154
  %v1157 = vpack.c.bf16 %v1156, %v1156
  %s1158 = scalar_lea.vmem [#allocation2], 20
  %1159 = vst.msk [vmem:[%s1158] sm:$0xf] %vm358, %v1157
  %s1160 = scalar_lea.vmem %s0, 96
  %v1161 = vld [vmem:[%s1160] sm:$0xff]
  %v1162 = vld [vmem:[%s1160 + $0x8] sm:$0xff]
  %v1163 = vpack.c.bf16 %v1079, %v1079
  %v1165 = vsel %vm115, %v1163, 0
  %1167 = vmatprep.subr.bf16.mxu0 0
  %1168 = vmatpush1.bf16.msra.mxu0 0
  %1169 = vmatprep.subr.bf16.mxu0 0
  %1170 = vmatpush1.bf16.msra.mxu0 0
  %1171 = vmatprep.subr.bf16.mxu0 0
  %1172 = vmatpush1.bf16.msra.mxu0 0
  %1173 = vmatprep.subr.bf16.mxu0 0
  %1174 = vmatpush1.bf16.msra.mxu0 0
  %1175 = vmatprep.subr.bf16.mxu0 %v106
  %1176 = vmatpush1.bf16.msra.mxu0 %v105
  %1177 = vmatprep.subr.bf16.mxu0 %v104
  %1178 = vmatpush1.bf16.msra.mxu0 %v103
  %1179 = vmatprep.subr.bf16.mxu0 %v102
  %1180 = vmatpush1.bf16.msra.mxu0 %v101
  %1181 = vmatprep.subr.bf16.mxu0 %v100
  %1182 = vmatpush1.bf16.msra.mxu0 %v99
  %1183 = vmatprep.subr.bf16.mxu0 0
  %1184 = vmatpush2.bf16.msra.mxu0 0
  %1185 = vmatprep.subr.bf16.mxu0 0
  %1186 = vmatpush2.bf16.msra.mxu0 0
  %1187 = vmatprep.subr.bf16.mxu0 0
  %1188 = vmatpush2.bf16.msra.mxu0 0
  %1189 = vmatprep.subr.bf16.mxu0 0
  %1190 = vmatpush2.bf16.msra.mxu0 0
  %1191 = vmatprep.subr.bf16.mxu0 0
  %1192 = vmatpush2.bf16.msra.mxu0 0
  %1193 = vmatprep.subr.bf16.mxu0 0
  %1194 = vmatpush2.bf16.msra.mxu0 0
  %1195 = vmatprep.subr.bf16.mxu0 0
  %1196 = vmatpush2.bf16.msra.mxu0 0
  %1197 = vmatprep.subr.bf16.mxu0 0
  %1198 = vmatpush2.bf16.msra.mxu0 0
  %1199 = vmatprep.mubr.bf16.mxu0 0
  %1200 = vmatmul.mubr.bf16.gmra.mxu0 %v1165
  %v1201 = vpop.f32.mrf.mxu0
  %v1202 = vadd.f32 0.0, %v1201
  %v1203 = vpop.f32.mrf.mxu0
  %v1204 = vadd.f32 0.0, %v1203
  %v1205 = vpop.f32.mrf.mxu0
  %v1206 = vpop.f32.mrf.mxu0
  %1207 = vdwg.mxu0
  %v1208 = vadd.f32 %v1161, %v1202
  %v1209 = vadd.f32 %v1162, %v1204
  %v1210 = vxor.u32 %v1208, 2147483648
  %v1211 = vxor.u32 %v1209, 2147483648
  %v1212 = vmul.f32 %v1210, 1.442695
  %v1213 = vpow.pop %v1212
  %v1214 = vmul.f32 %v1211, 1.442695
  %v1215 = vpow.pop %v1214
  %v1216 = vadd.f32 %v1213, 1.0
  %v1217 = vadd.f32 %v1215, 1.0
  %v1218 = vrcp.pop %v1216
  %v1219 = vmul.f32 1.0, %v1218
  %v1220 = vrcp.pop %v1217
  %v1221 = vmul.f32 1.0, %v1220
  %v1222 = vtanh.pop %v1209
  %v1223 = vmul.f32 %v1219, %v1073
  %1225 = vrot.lane.b32.xlu0 %v1222, 64
  %v1226 = vpop.permute.xlu0 %1225
  %v1228 = vmul.f32 %v1219, %v1226
  %1230 = vrot.lane.b32.xlu0 %v1228, 64
  %v1231 = vpop.permute.xlu0 %1230
  %v1233 = vadd.f32 %v1223, %v1231
  %v1234 = vtanh.pop %v1233
  %1236 = vrot.lane.b32.xlu0 %v1234, 64
  %v1237 = vpop.permute.xlu0 %1236
  %v1239 = vmul.f32 %v1221, %v1237
  %1241 = vrot.lane.b32.xlu0 %v1156, 64
  %v1242 = vpop.permute.xlu0 %1241
  %v1244 = vsel %vm115, %v1239, %v1242
  %v1245 = vpack.c.bf16 %v1244, %v1244
  %1246 = vmatprep.subr.bf16.mxu0 %v265
  %1247 = vmatpush1.bf16.msra.mxu0 %v264
  %1248 = vmatprep.subr.bf16.mxu0 %v263
  %1249 = vmatpush1.bf16.msra.mxu0 %v262
  %1250 = vmatprep.subr.bf16.mxu0 %v261
  %1251 = vmatpush1.bf16.msra.mxu0 %v260
  %1252 = vmatprep.subr.bf16.mxu0 %v259
  %1253 = vmatpush1.bf16.msra.mxu0 %v258
  %1254 = vmatprep.subr.bf16.mxu0 %v257
  %1255 = vmatpush1.bf16.msra.mxu0 %v256
  %1256 = vmatprep.subr.bf16.mxu0 %v255
  %1257 = vmatpush1.bf16.msra.mxu0 %v254
  %1258 = vmatprep.subr.bf16.mxu0 %v253
  %1259 = vmatpush1.bf16.msra.mxu0 %v252
  %1260 = vmatprep.subr.bf16.mxu0 %v251
  %1261 = vmatpush1.bf16.msra.mxu0 %v250
  %1262 = vmatprep.subr.bf16.mxu0 0
  %1263 = vmatpush2.bf16.msra.mxu0 0
  %1264 = vmatprep.subr.bf16.mxu0 0
  %1265 = vmatpush2.bf16.msra.mxu0 0
  %1266 = vmatprep.subr.bf16.mxu0 0
  %1267 = vmatpush2.bf16.msra.mxu0 0
  %1268 = vmatprep.subr.bf16.mxu0 0
  %1269 = vmatpush2.bf16.msra.mxu0 0
  %1270 = vmatprep.subr.bf16.mxu0 0
  %1271 = vmatpush2.bf16.msra.mxu0 0
  %1272 = vmatprep.subr.bf16.mxu0 0
  %1273 = vmatpush2.bf16.msra.mxu0 0
  %1274 = vmatprep.subr.bf16.mxu0 0
  %1275 = vmatpush2.bf16.msra.mxu0 0
  %1276 = vmatprep.subr.bf16.mxu0 0
  %1277 = vmatpush2.bf16.msra.mxu0 0
  %1278 = vmatprep.mubr.bf16.mxu0 0
  %1279 = vmatmul.mubr.bf16.gmra.mxu0 %v1245
  %v1280 = vpop.f32.mrf.mxu0
  %v1281 = vadd.f32 %v59, %v1280
  %v1282 = vpop.f32.mrf.mxu0
  %v1283 = vadd.f32 %v63, %v1282
  %v1284 = vpop.f32.mrf.mxu0
  %v1285 = vpop.f32.mrf.mxu0
  %1286 = vdwg.mxu0
  %v1287 = vxor.u32 %v1281, 2147483648
  %v1288 = vxor.u32 %v1283, 2147483648
  %v1289 = vmul.f32 %v1287, 1.442695
  %v1290 = vpow.pop %v1289
  %v1291 = vmul.f32 %v1288, 1.442695
  %v1292 = vpow.pop %v1291
  %v1293 = vadd.f32 %v1290, 1.0
  %v1294 = vadd.f32 %v1292, 1.0
  %v1295 = vrcp.pop %v1293
  %v1296 = vmul.f32 1.0, %v1295
  %v1297 = vrcp.pop %v1294
  %v1298 = vmul.f32 1.0, %v1297
  %v1299 = vtanh.pop %v1283
  %v1300 = vmul.f32 %v1296, %v1150
  %1302 = vrot.lane.b32.xlu0 %v1299, 64
  %v1303 = vpop.permute.xlu0 %1302
  %v1305 = vmul.f32 %v1296, %v1303
  %1307 = vrot.lane.b32.xlu0 %v1305, 64
  %v1308 = vpop.permute.xlu0 %1307
  %v1310 = vadd.f32 %v1300, %v1308
  %v1311 = vtanh.pop %v1310
  %1313 = vrot.lane.b32.xlu0 %v1311, 64
  %v1314 = vpop.permute.xlu0 %1313
  %v1316 = vmul.f32 %v1298, %v1314
  %v1317 = vpack.c.bf16 %v1316, %v1316
  %s1318 = scalar_lea.vmem [#allocation2], 24
  %1319 = vst.msk [vmem:[%s1318] sm:$0xf] %vm358, %v1317
  %v1320 = vld [vmem:[%s6] sm:$0xf]
  %v1321 = vld [vmem:[%s6 + $0x4] sm:$0xf]
  %v1322 = vld [vmem:[%s6 + $0x8] sm:$0xf]
  %v1323 = vld [vmem:[%s6 + $0xc] sm:$0xf]
  %v1324 = vld [vmem:[%s6 + $0x10] sm:$0xf]
  %v1325 = vld [vmem:[%s6 + $0x14] sm:$0xf]
  %v1326 = vld [vmem:[%s6 + $0x18] sm:$0xf]
  %v1327 = vld [vmem:[%s6 + $0x1c] sm:$0xf]
  %v1328 = vld [vmem:[#allocation2] sm:$0xf]
  %v1329 = vld [vmem:[#allocation2 + $0x4] sm:$0xf]
  %v1330 = vld [vmem:[#allocation2 + $0x8] sm:$0xf]
  %v1331 = vld [vmem:[#allocation2 + $0xc] sm:$0xf]
  %v1332 = vld [vmem:[#allocation2 + $0x10] sm:$0xf]
  %v1333 = vld [vmem:[#allocation2 + $0x14] sm:$0xf]
  %v1334 = vld [vmem:[#allocation2 + $0x18] sm:$0xf]
  %v1335 = vld [vmem:[%s7] sm:$0x1]
  %v1337 = vlaneseq
  %v1338 = vshrl.u32 %v1337, 7
  %v1339 = vsub.s32 0, %v1338
  %v1340 = vrot.slane %v1335, %v1339
  %v1349 = vunpack.c.l.b16 %v1328
  %v1350 = vunpack.c.l.b16 %v1329
  %v1351 = vunpack.c.l.b16 %v1330
  %v1352 = vunpack.c.l.b16 %v1331
  %v1353 = vunpack.c.l.b16 %v1332
  %v1354 = vunpack.c.l.b16 %v1333
  %v1355 = vunpack.c.l.b16 %v1334
  %v1356 = vpack.c.b16 %v1350, %v1349
  %v1357 = vpack.c.b16 %v1352, %v1351
  %v1358 = vpack.c.b16 %v1354, %v1353
  %v1359 = vpack.c.b16 %v1355, %v1355
  %v1368 = vunpack.c.l.b16 %v1320
  %v1369 = vunpack.c.l.b16 %v1321
  %v1370 = vunpack.c.l.b16 %v1322
  %v1371 = vunpack.c.l.b16 %v1323
  %v1372 = vunpack.c.l.b16 %v1324
  %v1373 = vunpack.c.l.b16 %v1325
  %v1374 = vunpack.c.l.b16 %v1326
  %v1375 = vunpack.c.l.b16 %v1327
  %v1376 = vpack.c.b16 %v1369, %v1368
  %v1377 = vpack.c.b16 %v1371, %v1370
  %v1378 = vpack.c.b16 %v1373, %v1372
  %v1379 = vpack.c.b16 %v1375, %v1374
  %v1385 = vsel %vm115, %v1356, 0
  %v1388 = vsel %vm115, %v1357, 0
  %v1391 = vsel %vm115, %v1358, 0
  %v1394 = vsel %vm115, %v1359, 0
  %1396 = vmatprep.subr.bf16.mxu0 0
  %1397 = vmatpush1.bf16.msra.mxu0 0
  %1398 = vmatprep.subr.bf16.mxu0 0
  %1399 = vmatpush1.bf16.msra.mxu0 0
  %1400 = vmatprep.subr.bf16.mxu0 0
  %1401 = vmatpush1.bf16.msra.mxu0 0
  %1402 = vmatprep.subr.bf16.mxu0 0
  %1403 = vmatpush1.bf16.msra.mxu0 0
  %1404 = vmatprep.subr.bf16.mxu0 0
  %1405 = vmatpush1.bf16.msra.mxu0 %v1379
  %1406 = vmatprep.subr.bf16.mxu0 0
  %1407 = vmatpush1.bf16.msra.mxu0 %v1378
  %1408 = vmatprep.subr.bf16.mxu0 0
  %1409 = vmatpush1.bf16.msra.mxu0 %v1377
  %1410 = vmatprep.subr.bf16.mxu0 0
  %1411 = vmatpush1.bf16.msra.mxu0 %v1376
  %1412 = vmatprep.subr.bf16.mxu0 0
  %1413 = vmatpush2.bf16.msra.mxu0 0
  %1414 = vmatprep.subr.bf16.mxu0 0
  %1415 = vmatpush2.bf16.msra.mxu0 0
  %1416 = vmatprep.subr.bf16.mxu0 0
  %1417 = vmatpush2.bf16.msra.mxu0 0
  %1418 = vmatprep.subr.bf16.mxu0 0
  %1419 = vmatpush2.bf16.msra.mxu0 0
  %1420 = vmatprep.subr.bf16.mxu0 0
  %1421 = vmatpush2.bf16.msra.mxu0 0
  %1422 = vmatprep.subr.bf16.mxu0 0
  %1423 = vmatpush2.bf16.msra.mxu0 0
  %1424 = vmatprep.subr.bf16.mxu0 0
  %1425 = vmatpush2.bf16.msra.mxu0 0
  %1426 = vmatprep.subr.bf16.mxu0 0
  %1427 = vmatpush2.bf16.msra.mxu0 0
  %1428 = vmatprep.mubr.bf16.mxu0 0
  %1429 = vmatmul.mubr.bf16.gmra.mxu0 %v1385
  %v1430 = vpop.f32.mrf.mxu0
  %v1431 = vadd.f32 %v1340, %v1430
  %v1432 = vpop.f32.mrf.mxu0
  %v1433 = vpop.f32.mrf.mxu0
  %v1434 = vadd.f32 %v1340, %v1433
  %v1435 = vpop.f32.mrf.mxu0
  %1436 = vmatprep.mubr.bf16.mxu0 0
  %1437 = vmatmul.mubr.bf16.gmra.mxu0 %v1388
  %v1438 = vpop.f32.mrf.mxu0
  %v1439 = vadd.f32 %v1340, %v1438
  %v1440 = vpop.f32.mrf.mxu0
  %v1441 = vpop.f32.mrf.mxu0
  %v1442 = vadd.f32 %v1340, %v1441
  %v1443 = vpop.f32.mrf.mxu0
  %1444 = vmatprep.mubr.bf16.mxu0 0
  %1445 = vmatmul.mubr.bf16.gmra.mxu0 %v1391
  %v1446 = vpop.f32.mrf.mxu0
  %v1447 = vadd.f32 %v1340, %v1446
  %v1448 = vpop.f32.mrf.mxu0
  %v1449 = vpop.f32.mrf.mxu0
  %v1450 = vadd.f32 %v1340, %v1449
  %v1451 = vpop.f32.mrf.mxu0
  %1452 = vmatprep.mubr.bf16.mxu0 0
  %1453 = vmatmul.mubr.bf16.gmra.mxu0 %v1394
  %v1454 = vpop.f32.mrf.mxu0
  %v1455 = vadd.f32 %v1340, %v1454
  %v1456 = vpop.f32.mrf.mxu0
  %v1457 = vpop.f32.mrf.mxu0
  %v1458 = vpop.f32.mrf.mxu0
  %1459 = vdwg.mxu0
  %1460 = vst [vmem:[%s8] sm:$0xff] %v1431
  %1461 = vst [vmem:[%s8 + $0x8] sm:$0xff] %v1434
  %1462 = vst [vmem:[%s8 + $0x10] sm:$0xff] %v1439
  %1463 = vst [vmem:[%s8 + $0x18] sm:$0xff] %v1442
  %1464 = vst [vmem:[%s8 + $0x20] sm:$0xff] %v1447
  %1465 = vst [vmem:[%s8 + $0x28] sm:$0xff] %v1450
  %1466 = vst [vmem:[%s8 + $0x30] sm:$0xff] %v1455
  // Predicated region
  $region34: #{medical_qa_forward.5} parent=0 // pred_check
    _
  $region35: #{medical_qa_forward.5} parent=0 // pred_check_branch
    %1468 = sbr.rel (0) target = $region37
  $region36: #{medical_qa_forward.5} parent=0 // pred_region
    _
  $region37: #{medical_qa_forward.5} parent=0 // pred_fallthru
    _
  // Predicated region
  $region38: #{medical_qa_forward.5} parent=0 // pred_check
    _
  $region39: #{medical_qa_forward.5} parent=0 // pred_check_branch
    %1470 = sbr.rel (0) target = $region41
  $region40: #{medical_qa_forward.5} parent=0 // pred_region
    _
  $region41: #{medical_qa_forward.5} parent=0 // pred_fallthru
    _

</llo_original>
